<compile_context>
chip_gen: v6e
topology: v6e:2x2x1
jax: 0.10.0
libtpu: 0.0.40
codegen_flags: <defaults>
</compile_context>

<pallas_src>
import functools
import math

import jax
import jax.numpy as jnp
from jax.experimental import pallas as pl
from jax.experimental.pallas import tpu as pltpu

LANE = 128


def _ru(x, m):
    return ((x + m - 1) // m) * m


def _vmem_limit_bytes():
    cap = 128 * 1024 * 1024
    try:
        cap = int(pltpu.get_tpu_info().vmem_capacity_bytes)
    except Exception:
        pass
    if cap >= 96 * 1024 * 1024:
        return 96 * 1024 * 1024          # v5e / v6e: 128 MiB physical -> generous limit
    return int(cap * 5 // 8)             # v7x: 64 MiB physical -> ~40 MiB, leave headroom


_VMEM_LIMIT = _vmem_limit_bytes()


# ---------------------------- tiled matmul (x @ w + b) ----------------------------

def _matmul_kernel(x_ref, w_ref, b_ref, o_ref, acc_ref):
    k = pl.program_id(2)

    @pl.when(k == 0)
    def _():
        acc_ref[...] = jnp.zeros_like(acc_ref)

    acc_ref[...] += jnp.dot(x_ref[...], w_ref[...], preferred_element_type=jnp.float32)

    @pl.when(k == pl.num_programs(2) - 1)
    def _():
        o_ref[...] = (acc_ref[...] + b_ref[...]).astype(o_ref.dtype)


def pallas_matmul(x, w, b, out_dtype=jnp.float32):
    """y = x @ w + b, bf16 operands / f32 MXU accumulation, tiled grid.

    x: (M, Kx); w: (Kw, N) pre-transposed (K, N) weight with Kw <= lane-rounded Kx
    (extra x columns are lane padding with zero weight rows); b: (N,).
    Returns (M, Np) with Np = round_up(N, 128); padded output columns are 0.
    """
    M, Kx = x.shape
    Kw, N = w.shape
    Kp = _ru(Kx, LANE)
    Np = _ru(N, LANE)
    assert Kw <= Kp
    # K tile chosen so it divides Kp exactly -> no extra K padding pass over activations.
    if Kp <= 1024:
        tk = Kp
    else:
        tk = max(d for d in range(LANE, 1024 + 1, LANE) if Kp % d == 0)
    tm = min(512, _ru(M, 8))
    tn = min(512, Np)
    grid = (pl.cdiv(M, tm), pl.cdiv(Np, tn), Kp // tk)

    xb = x.astype(jnp.bfloat16)
    if Kp != Kx:                                   # only the lane round-up, if any
        xb = jnp.pad(xb, ((0, 0), (0, Kp - Kx)))
    wb = jnp.pad(w.astype(jnp.bfloat16), ((0, Kp - Kw), (0, Np - N)))
    bb = jnp.pad(b.astype(jnp.float32), (0, Np - N)).reshape(1, Np)

    return pl.pallas_call(
        _matmul_kernel,
        out_shape=jax.ShapeDtypeStruct((M, Np), out_dtype),
        grid_spec=pltpu.PrefetchScalarGridSpec(
            num_scalar_prefetch=0,
            grid=grid,
            in_specs=[pl.BlockSpec((tm, tk), lambda i, j, k: (i, k)),
                      pl.BlockSpec((tk, tn), lambda i, j, k: (k, j)),
                      pl.BlockSpec((1, tn), lambda i, j, k: (0, j))],
            out_specs=pl.BlockSpec((tm, tn), lambda i, j, k: (i, j)),
            scratch_shapes=[pltpu.VMEM((tm, tn), jnp.float32)]),
        compiler_params=pltpu.CompilerParams(
            dimension_semantics=("parallel", "parallel", "arbitrary"),
            vmem_limit_bytes=_VMEM_LIMIT),
    )(xb, wb, bb)


# ------------- fused encoder layer: BN+ReLU prologue -> Conv1d -> BN partial stats -------------

def _conv_layer_kernel(x_cur, x_prev, x_next, w_ref, b_ref, sc_ref, sh_ref,
                       y_ref, stat_ref, *, n_taps, tile_t, t_valid, apply_prologue):
    pad = (n_taps - 1) // 2
    halo = 8
    t0 = pl.program_id(1) * tile_t
    cout_p = y_ref.shape[-1]

    # assemble halo'd window (prev 8 rows | current tile | next 8 rows), f32 math (v5e-safe)
    win = jnp.concatenate(
        [x_prev[0].astype(jnp.float32),
         x_cur[0].astype(jnp.float32),
         x_next[0].astype(jnp.float32)], axis=0)             # (tile_t + 16, Cin_p)
    if apply_prologue:                                        # previous layer's BN + ReLU, fused
        win = jnp.maximum(win * sc_ref[...] + sh_ref[...], 0.0)

    wlen = tile_t + 2 * halo
    # zero-out rows corresponding to the conv's 'same' zero padding / rounding padding,
    # once for all taps (post-activation, matching PyTorch's zero-padded conv input)
    wsrc = t0 - halo + jax.lax.broadcasted_iota(jnp.int32, (wlen, 1), 0)
    win = jnp.where((wsrc >= 0) & (wsrc < t_valid), win, 0.0)

    acc = jnp.zeros((tile_t, cout_p), jnp.float32)
    for k in range(n_taps):                                   # static unroll of the taps
        s_k = halo + k - pad
        if s_k % 8 == 0:
            v = win[s_k:s_k + tile_t]                         # sublane-aligned slice
        else:
            # shift through the XLU instead of a misaligned-slice relayout
            v = pltpu.roll(win, shift=(wlen - s_k) % wlen, axis=0)[:tile_t]
        acc = acc + jnp.dot(v.astype(jnp.bfloat16), w_ref[k],
                            preferred_element_type=jnp.float32)

    out = acc + b_ref[...]
    y_ref[0] = out.astype(y_ref.dtype)                        # bf16 writeback

    # BN partial statistics (sum / sum of squares) over valid frames, finished in JAX
    t_loc = jax.lax.broadcasted_iota(jnp.int32, (tile_t, 1), 0)
    rvalid = ((t0 + t_loc) < t_valid).astype(jnp.float32)
    s1 = jnp.sum(out * rvalid, axis=0, keepdims=True)
    s2 = jnp.sum(out * out * rvalid, axis=0, keepdims=True)
    stat_ref[0, 0, 0:1, :] = s1
    stat_ref[0, 0, 1:2, :] = s2


def pallas_conv_bn_layer(x, w_kcc, bias, scale, shift, *, t_valid, tile_t, apply_prologue):
    """One encoder layer: (optional fused BN+ReLU prologue) -> 'same' Conv1d -> bf16 y + BN partials.

    x: (B, Tpad, Cin_p) bf16 channels-last, Tpad a multiple of tile_t.
    w_kcc: (n_taps, Cin, Cout) f32.  Returns (y bf16 (B,Tpad,Cout_p), stats f32 (B,n_t,2,Cout_p)).
    """
    B, Tpad, Cin_p = x.shape
    n_taps, Cin, Cout = w_kcc.shape
    Cout_p = _ru(Cout, LANE)
    n_t = Tpad // tile_t
    nblk8 = Tpad // 8
    hs = tile_t // 8

    wb = jnp.pad(w_kcc.astype(jnp.bfloat16),
                 ((0, 0), (0, Cin_p - Cin), (0, Cout_p - Cout)))
    bb = jnp.pad(bias.astype(jnp.float32), (0, Cout_p - Cout)).reshape(1, Cout_p)
    sc = scale.astype(jnp.float32).reshape(1, Cin_p)
    sh = shift.astype(jnp.float32).reshape(1, Cin_p)

    kern = functools.partial(_conv_layer_kernel, n_taps=n_taps, tile_t=tile_t,
                             t_valid=t_valid, apply_prologue=apply_prologue)
    y, stats = pl.pallas_call(
        kern,
        out_shape=(jax.ShapeDtypeStruct((B, Tpad, Cout_p), jnp.bfloat16),
                   jax.ShapeDtypeStruct((B, n_t, 2, Cout_p), jnp.float32)),
        grid_spec=pltpu.PrefetchScalarGridSpec(
            num_scalar_prefetch=0, grid=(B, n_t),
            in_specs=[
                pl.BlockSpec((1, tile_t, Cin_p), lambda b, t: (b, t, 0)),
                pl.BlockSpec((1, 8, Cin_p),
                             lambda b, t: (b, jnp.maximum(t * hs - 1, 0), 0)),
                pl.BlockSpec((1, 8, Cin_p),
                             lambda b, t: (b, jnp.minimum((t + 1) * hs, nblk8 - 1), 0)),
                pl.BlockSpec((n_taps, Cin_p, Cout_p), lambda b, t: (0, 0, 0)),
                pl.BlockSpec((1, Cout_p), lambda b, t: (0, 0)),
                pl.BlockSpec((1, Cin_p), lambda b, t: (0, 0)),
                pl.BlockSpec((1, Cin_p), lambda b, t: (0, 0)),
            ],
            out_specs=(pl.BlockSpec((1, tile_t, Cout_p), lambda b, t: (b, t, 0)),
                       pl.BlockSpec((1, 1, 2, Cout_p), lambda b, t: (b, t, 0, 0)))),
        compiler_params=pltpu.CompilerParams(
            dimension_semantics=("parallel", "parallel"),
            vmem_limit_bytes=_VMEM_LIMIT),
    )(x, x, x, wb, bb, sc, sh)
    return y, stats


# ---------------------------- fused BatchNorm(affine) + ReLU ----------------------------

def _bn_relu_kernel(y_ref, sc_ref, sh_ref, o_ref):
    a = jnp.maximum(y_ref[0].astype(jnp.float32) * sc_ref[...] + sh_ref[...], 0.0)
    o_ref[0] = a.astype(o_ref.dtype)


def pallas_bn_relu(y, scale, shift, *, tile_t):
    """Pre-folded BatchNorm (scale/shift) + ReLU on bf16 activations; emits bf16."""
    B, Tpad, Cp = y.shape
    n_t = Tpad // tile_t
    return pl.pallas_call(
        _bn_relu_kernel,
        out_shape=jax.ShapeDtypeStruct((B, Tpad, Cp), jnp.bfloat16),
        grid_spec=pltpu.PrefetchScalarGridSpec(
            num_scalar_prefetch=0, grid=(B, n_t),
            in_specs=[pl.BlockSpec((1, tile_t, Cp), lambda b, t: (b, t, 0)),
                      pl.BlockSpec((1, Cp), lambda b, t: (0, 0)),
                      pl.BlockSpec((1, Cp), lambda b, t: (0, 0))],
            out_specs=pl.BlockSpec((1, tile_t, Cp), lambda b, t: (b, t, 0))),
        compiler_params=pltpu.CompilerParams(
            dimension_semantics=("parallel", "parallel"),
            vmem_limit_bytes=_VMEM_LIMIT),
    )(y, scale.reshape(1, Cp).astype(jnp.float32),
      shift.reshape(1, Cp).astype(jnp.float32))


# ---------------- ActNorm flow fused with HMM Gaussian log-lik (online LSE) ----------------

def _hmm_kernel(feat_len_ref, mel_ref, mu_ref, mm_ref, explogs_ref, bias_ref,
                out_ref, z_sc, zz_sc, m_sc, l_sc, *, n_mel, tile_ts):
    b = pl.program_id(0)
    sj = pl.program_id(2)

    @pl.when(sj == 0)
    def _():
        # ActNorm flow applied on the fly (z never hits HBM), hoisted out of the sj loop
        z = (mel_ref[0] + bias_ref[...]) * explogs_ref[...]      # (Cp, tile_tm) f32
        zz_sc[...] = jnp.sum(z * z, axis=0, keepdims=True)       # (1, tile_tm)
        z_sc[...] = z.astype(jnp.bfloat16)
        m_sc[...] = jnp.full_like(m_sc, -1e30)
        l_sc[...] = jnp.zeros_like(l_sc)

    # identity-covariance Gaussian log-lik via quadratic expansion; bf16 MXU cross term
    cross = jax.lax.dot_general(mu_ref[0], z_sc[...], (((1,), (0,)), ((), ())),
                                preferred_element_type=jnp.float32)   # (tile_ts, tile_tm)
    ll = (-0.5 * (zz_sc[...] + mm_ref[0] - 2.0 * cross)
          - 0.5 * n_mel * math.log(2.0 * math.pi))
    row = sj * tile_ts + jax.lax.broadcasted_iota(jnp.int32, ll.shape, 0)
    ll = jnp.where(row < feat_len_ref[b], ll, -1e30)              # mask invalid text states

    # flash-style online logsumexp over the text-state (sublane) axis
    m_prev = m_sc[...]
    m_new = jnp.maximum(m_prev, jnp.max(ll, axis=0, keepdims=True))
    l_sc[...] = (l_sc[...] * jnp.exp(m_prev - m_new)
                 + jnp.sum(jnp.exp(ll - m_new), axis=0, keepdims=True))
    m_sc[...] = m_new

    @pl.when(sj == pl.num_programs(2) - 1)
    def _():
        out_ref[0, 0] = m_sc[...] + jnp.log(l_sc[...])            # lane-dense per-frame LSE


def pallas_hmm_loglik(mels, mu, mm, logs, bias, mel_lengths, feat_lengths, n_mel):
    """sum_{b, valid t_mel} logsumexp_{valid t_text} log N(flow(mel); mu, I)."""
    B, n_mel_raw, Tm = mels.shape
    _, Ts, Cp = mu.shape

    tile_tm = _ru(Tm, 8) if Tm <= 256 else 256
    Tmp = _ru(Tm, tile_tm)
    tile_ts = _ru(Ts, 8) if Ts <= 256 else 256
    Tsp = _ru(Ts, tile_ts)
    n_tm, n_ts = Tmp // tile_tm, Tsp // tile_ts

    # mels stay channels-first (no host transpose): (B, Cp, Tmp)
    mel_cf = jnp.pad(mels.astype(jnp.float32),
                     ((0, 0), (0, Cp - n_mel_raw), (0, Tmp - Tm)))
    mu_b = jnp.pad(mu, ((0, 0), (0, Tsp - Ts), (0, 0))).astype(jnp.bfloat16)
    mm_p = jnp.pad(mm, ((0, 0), (0, Tsp - Ts), (0, 0)))            # (B, Tsp, 1)
    explogs = jnp.pad(jnp.exp(logs.astype(jnp.float32)), (0, Cp - n_mel)).reshape(Cp, 1)
    bias_c = jnp.pad(bias.astype(jnp.float32), (0, Cp - n_mel)).reshape(Cp, 1)

    kern = functools.partial(_hmm_kernel, n_mel=n_mel, tile_ts=tile_ts)
    lse = pl.pallas_call(
        kern,
        out_shape=jax.ShapeDtypeStruct((B, n_tm, 1, tile_tm), jnp.float32),
        grid_spec=pltpu.PrefetchScalarGridSpec(
            num_scalar_prefetch=1,                     # feat_lengths -> SMEM
            grid=(B, n_tm, n_ts),
            in_specs=[pl.BlockSpec((1, Cp, tile_tm), lambda b, i, j, fl: (b, 0, i)),
                      pl.BlockSpec((1, tile_ts, Cp), lambda b, i, j, fl: (b, j, 0)),
                      pl.BlockSpec((1, tile_ts, 1), lambda b, i, j, fl: (b, j, 0)),
                      pl.BlockSpec((Cp, 1), lambda b, i, j, fl: (0, 0)),
                      pl.BlockSpec((Cp, 1), lambda b, i, j, fl: (0, 0))],
            out_specs=pl.BlockSpec((1, 1, 1, tile_tm), lambda b, i, j, fl: (b, i, 0, 0)),
            scratch_shapes=[pltpu.VMEM((Cp, tile_tm), jnp.bfloat16),
                            pltpu.VMEM((1, tile_tm), jnp.float32),
                            pltpu.VMEM((1, tile_tm), jnp.float32),
                            pltpu.VMEM((1, tile_tm), jnp.float32)]),
        compiler_params=pltpu.CompilerParams(
            dimension_semantics=("parallel", "parallel", "arbitrary"),
            vmem_limit_bytes=_VMEM_LIMIT),
    )(feat_lengths, mel_cf, mu_b, mm_p, explogs, bias_c)

    lse = lse.reshape(B, n_tm * tile_tm)                           # (B, Tmp)
    frame = jnp.arange(n_tm * tile_tm)
    valid = frame[None, :] < mel_lengths[:, None]
    return jnp.sum(jnp.where(valid, lse, 0.0))


# ---------------------------- plain-JAX glue ----------------------------

def init_params(key, n_features, emb, n_mel):
    ks = jax.random.split(key, 16)
    p = {}
    # Linear / LSTM weights stored pre-transposed as (K, N): no per-call w.T.
    p['feat_w'] = jax.random.normal(ks[0], (n_features, emb), jnp.float32) * 0.1
    p['feat_b'] = jnp.zeros((emb,), jnp.float32)
    for i in range(3):
        # Conv1d weights stored as (n_taps, C_in, C_out) (PyTorch layout transposed once).
        p[f'conv{i}_w'] = jax.random.normal(ks[1 + i], (5, emb, emb), jnp.float32) * 0.05
        p[f'conv{i}_b'] = jnp.zeros((emb,), jnp.float32)
        p[f'bn{i}_g'] = jnp.ones((emb,), jnp.float32)
        p[f'bn{i}_b'] = jnp.zeros((emb,), jnp.float32)
    H = emb // 2
    for d, name in enumerate(['fwd', 'bwd']):
        p[f'lstm_{name}_wih'] = jax.random.normal(ks[4 + 2 * d], (emb, 4 * H), jnp.float32) * 0.1
        p[f'lstm_{name}_whh'] = jax.random.normal(ks[5 + 2 * d], (H, 4 * H), jnp.float32) * 0.1
        p[f'lstm_{name}_bih'] = jnp.zeros((4 * H,), jnp.float32)
        p[f'lstm_{name}_bhh'] = jnp.zeros((4 * H,), jnp.float32)
    p['hmm_proj_w'] = jax.random.normal(ks[8], (emb, n_mel), jnp.float32) * 0.1
    p['hmm_proj_b'] = jnp.zeros((n_mel,), jnp.float32)
    p['flow_logs'] = jax.random.normal(ks[9], (n_mel,), jnp.float32) * 0.01
    p['flow_bias'] = jnp.zeros((n_mel,), jnp.float32)
    return p


def overflow_forward(params, feat_inputs, feat_lengths, mels, mel_lengths):
    B, n_feat, T_text = feat_inputs.shape
    _, n_mel, T_mel = mels.shape
    emb = params['feat_w'].shape[1]
    emb_p = _ru(emb, LANE)
    n_mel_p = _ru(n_mel, LANE)

    # ---- feat_embedding (nn.Linear): channels-last, bf16 epilogue straight to encoder ----
    x_rows = feat_inputs.astype(jnp.float32).transpose(0, 2, 1).reshape(B * T_text, n_feat)
    h_rows = pallas_matmul(x_rows, params['feat_w'], params['feat_b'],
                           out_dtype=jnp.bfloat16)                 # (B*T, emb_p) bf16
    h = h_rows.reshape(B, T_text, emb_p)

    # ---- Encoder: 3 x (fused-BN-ReLU prologue + Conv1d + BN partial stats) ----
    tile_t = min(256, _ru(T_text, 8))
    Tpad = _ru(T_text, tile_t)
    if Tpad != T_text:
        h = jnp.pad(h, ((0, 0), (0, Tpad - T_text), (0, 0)))       # single pad for all layers

    scale = jnp.ones((emb_p,), jnp.float32)
    shift = jnp.zeros((emb_p,), jnp.float32)
    x_enc = h
    cnt = float(B * T_text)
    for i in range(3):
        y, stats = pallas_conv_bn_layer(
            x_enc, params[f'conv{i}_w'], params[f'conv{i}_b'], scale, shift,
            t_valid=T_text, tile_t=tile_t, apply_prologue=(i > 0))
        s = jnp.sum(stats, axis=(0, 1))                            # (2, Cout_p)
        mean = s[0] / cnt
        var = jnp.maximum(s[1] / cnt - mean * mean, 0.0)
        rstd = jax.lax.rsqrt(var + 1e-5)
        gamma = jnp.pad(params[f'bn{i}_g'], (0, emb_p - emb))
        beta = jnp.pad(params[f'bn{i}_b'], (0, emb_p - emb))
        scale = gamma * rstd
        shift = beta - mean * scale
        x_enc = y
        # TODO(synk): dropout(0.5, training=True) after each conv block omitted (stochastic).
    h_enc = pallas_bn_relu(x_enc, scale, shift, tile_t=tile_t)     # (B, Tpad, emb_p) bf16

    # ---- BiLSTM: input projection hoisted into one MXU matmul; fwd/bwd merged into one scan ----
    H4 = params['lstm_fwd_wih'].shape[1]
    H = H4 // 4
    w_in = jnp.concatenate([params['lstm_fwd_wih'], params['lstm_bwd_wih']], axis=1)  # (emb, 8H)
    b_in = jnp.concatenate([params['lstm_fwd_bih'] + params['lstm_fwd_bhh'],
                            params['lstm_bwd_bih'] + params['lstm_bwd_bhh']])
    xproj = pallas_matmul(h_enc.reshape(B * Tpad, emb_p), w_in, b_in)[:, :2 * H4]
    xproj = xproj.reshape(B, Tpad, 2 * H4)[:, :T_text].transpose(1, 0, 2)             # (T, B, 8H)
    xp_f = xproj[..., :H4]
    xp_b = xproj[..., H4:][::-1]                                   # reverse time for bwd direction

    t_idx = jnp.arange(T_text)
    valid = (t_idx[:, None] < feat_lengths[None, :]).astype(jnp.float32)[..., None]   # (T, B, 1)
    valid_rev = valid[::-1]

    whh_blk = jnp.zeros((2 * H, 2 * H4), jnp.float32)
    whh_blk = whh_blk.at[:H, :H4].set(params['lstm_fwd_whh'])
    whh_blk = whh_blk.at[H:, H4:].set(params['lstm_bwd_whh'])
    whh_blk = whh_blk.astype(jnp.bfloat16)
    # TODO(synk): the recurrence itself stays in lax.scan; a VMEM-resident Pallas LSTM kernel
    # would further cut W_hh re-reads for very long sequences.

    def lstm_cell(g, hprev, cprev, v):
        ig, fg, gg, og = jnp.split(g, 4, axis=-1)                  # PyTorch gate order i,f,g,o
        ig = jax.nn.sigmoid(ig)
        fg = jax.nn.sigmoid(fg)
        gg = jnp.tanh(gg)
        og = jax.nn.sigmoid(og)
        c_new = fg * cprev + ig * gg
        h_new = og * jnp.tanh(c_new)
        hm = v * h_new + (1.0 - v) * hprev                         # pack_padded: freeze carry
        cm = v * c_new + (1.0 - v) * cprev
        return hm, cm

    def step(carry, inp):
        hf, cf, hb, cb = carry
        xf_t, xb_t, vf, vb = inp
        hcat = jnp.concatenate([hf, hb], axis=-1).astype(jnp.bfloat16)
        gates = jnp.dot(hcat, whh_blk, preferred_element_type=jnp.float32)  # one bf16 MXU matmul
        hf2, cf2 = lstm_cell(gates[:, :H4] + xf_t, hf, cf, vf)
        hb2, cb2 = lstm_cell(gates[:, H4:] + xb_t, hb, cb, vb)
        return (hf2, cf2, hb2, cb2), (hf2, hb2)

    z0 = jnp.zeros((B, H), jnp.float32)
    _, (hs_f, hs_brev) = jax.lax.scan(step, (z0, z0, z0, z0), (xp_f, xp_b, valid, valid_rev))
    hs_b = hs_brev[::-1]
    encoder_outputs = jnp.concatenate([hs_f, hs_b], axis=-1).transpose(1, 0, 2)        # (B, T, emb)

    # ---- HMM per-state emission means (Pallas tiled linear) + precomputed ||mu||^2 ----
    # TODO(synk): full neural-HMM forward recursion (transition/duration model, AR prenet)
    # simplified to per-frame marginalisation over encoder states.
    mu = pallas_matmul(encoder_outputs.reshape(B * T_text, 2 * H),
                       params['hmm_proj_w'], params['hmm_proj_b'])    # (B*T, n_mel_p) f32
    mu = mu.reshape(B, T_text, n_mel_p)
    mm = jnp.sum(mu * mu, axis=-1, keepdims=True)                     # (B, T, 1)

    # ---- FlowSpecDecoder (masked ActNorm affine flow) fused into the HMM kernel ----
    # TODO(synk): Glow-style invertible 1x1 convs / WaveNet coupling blocks not implemented.
    log_probs = pallas_hmm_loglik(mels, mu, mm, params['flow_logs'], params['flow_bias'],
                                  mel_lengths.astype(jnp.int32),
                                  feat_lengths.astype(jnp.int32), n_mel)
    logdet = jnp.sum(params['flow_logs']) * jnp.sum(mel_lengths).astype(jnp.float32)

    denom = (jnp.sum(feat_lengths) + jnp.sum(mel_lengths)).astype(jnp.float32)
    return (log_probs + logdet) / denom


if __name__ == "__main__":
    key = jax.random.PRNGKey(0)
    B = 2
    n_features = 8
    T_text = 8
    n_mel = 16
    T_mel = 16
    emb = 32

    k_param, k_feat, k_mel = jax.random.split(key, 3)
    params = init_params(k_param, n_features, emb, n_mel)

    feat_inputs = jax.random.normal(k_feat, (B, n_features, T_text), jnp.float32)
    mels = jax.random.normal(k_mel, (B, n_mel, T_mel), jnp.float32)
    feat_lengths = jnp.array([8, 6], jnp.int32)
    mel_lengths = jnp.array([16, 12], jnp.int32)

    fwd = jax.jit(overflow_forward)
    loss = jax.block_until_ready(fwd(params, feat_inputs, feat_lengths, mels, mel_lengths))
    assert loss.shape == () and bool(jnp.isfinite(loss)), f"bad loss: {loss}"
    print("KERNEL_OK")
</pallas_src>

<mosaic_0001>
module attributes {stable_mosaic.version = 11 : i64} {
  func.func @_matmul_kernel(%arg0: i32, %arg1: i32, %arg2: i32, %arg3: memref<16x128xbf16, #tpu.memory_space<vmem>>, %arg4: memref<128x128xbf16, #tpu.memory_space<vmem>>, %arg5: memref<1x128xf32, #tpu.memory_space<vmem>>, %arg6: memref<16x128xbf16, #tpu.memory_space<vmem>>, %arg7: memref<16x128xf32, #tpu.memory_space<vmem>>) attributes {dimension_semantics = [#tpu.dimension_semantics<parallel>, #tpu.dimension_semantics<parallel>, #tpu.dimension_semantics<arbitrary>], iteration_bounds = array<i64: 1, 1, 1>, scalar_prefetch = 0 : i64, scratch_operands = 1 : i64, tpu.core_type = #tpu.core_type<tc>, window_params = [{transform_indices = @transform_0, window_bounds = array<i64: 16, 128>}, {transform_indices = @transform_1, window_bounds = array<i64: 128, 128>}, {transform_indices = @transform_2, window_bounds = array<i64: 1, 128>}, {transform_indices = @transform_3, window_bounds = array<i64: 16, 128>}]} {
    %c0_i32 = arith.constant 0 : i32
    %0 = arith.cmpi eq, %arg2, %c0_i32 : i32
    %1 = arith.extui %0 : i1 to i32
    %c0_i32_0 = arith.constant 0 : i32
    %2 = arith.cmpi ne, %1, %c0_i32_0 : i32
    scf.if %2 {
      %cst_10 = arith.constant 0.000000e+00 : f32
      %12 = vector.broadcast %cst_10 : f32 to vector<16x128xf32>
      %c0_11 = arith.constant 0 : index
      %c0_12 = arith.constant 0 : index
      %13 = vector.load %arg7[%c0_11, %c0_12] : memref<16x128xf32, #tpu.memory_space<vmem>>, vector<16x128xf32>
      tpu.vector_store %arg7[%c0_11, %c0_12], %12 {strides = array<i32>} : memref<16x128xf32, #tpu.memory_space<vmem>>, vector<16x128xf32>,
    } else {
    }
    %c0 = arith.constant 0 : index
    %c0_1 = arith.constant 0 : index
    %3 = vector.load %arg7[%c0, %c0_1] : memref<16x128xf32, #tpu.memory_space<vmem>>, vector<16x128xf32>
    %c0_2 = arith.constant 0 : index
    %c0_3 = arith.constant 0 : index
    %4 = vector.load %arg3[%c0_2, %c0_3] : memref<16x128xbf16, #tpu.memory_space<vmem>>, vector<16x128xbf16>
    %c0_4 = arith.constant 0 : index
    %c0_5 = arith.constant 0 : index
    %5 = vector.load %arg4[%c0_4, %c0_5] : memref<128x128xbf16, #tpu.memory_space<vmem>>, vector<128x128xbf16>
    %cst = arith.constant dense<0.000000e+00> : vector<16x128xf32>
    %6 = tpu.matmul %4, %5, %cst {dimension_numbers = #tpu.dot_dimension_numbers<[1], [0], [0], [1], [0, 0, 1, 1], [], []>} : vector<16x128xbf16>, vector<128x128xbf16>, vector<16x128xf32> -> vector<16x128xf32>
    %7 = arith.addf %3, %6 : vector<16x128xf32>
    %c0_6 = arith.constant 0 : index
    %c0_7 = arith.constant 0 : index
    %8 = vector.load %arg7[%c0_6, %c0_7] : memref<16x128xf32, #tpu.memory_space<vmem>>, vector<16x128xf32>
    tpu.vector_store %arg7[%c0_6, %c0_7], %7 {strides = array<i32>} : memref<16x128xf32, #tpu.memory_space<vmem>>, vector<16x128xf32>,
    %c0_i32_8 = arith.constant 0 : i32
    %9 = arith.cmpi eq, %arg2, %c0_i32_8 : i32
    %10 = arith.extui %9 : i1 to i32
    %c0_i32_9 = arith.constant 0 : i32
    %11 = arith.cmpi ne, %10, %c0_i32_9 : i32
    scf.if %11 {
      %c0_10 = arith.constant 0 : index
      %c0_11 = arith.constant 0 : index
      %12 = vector.load %arg7[%c0_10, %c0_11] : memref<16x128xf32, #tpu.memory_space<vmem>>, vector<16x128xf32>
      %c0_12 = arith.constant 0 : index
      %c0_13 = arith.constant 0 : index
      %13 = vector.load %arg5[%c0_12, %c0_13] : memref<1x128xf32, #tpu.memory_space<vmem>>, vector<1x128xf32>
      %14 = vector.broadcast %13 : vector<1x128xf32> to vector<16x128xf32>
      %15 = arith.addf %12, %14 : vector<16x128xf32>
      %16 = arith.truncf %15 : vector<16x128xf32> to vector<16x128xbf16>
      %c0_14 = arith.constant 0 : index
      %c0_15 = arith.constant 0 : index
      %17 = vector.load %arg6[%c0_14, %c0_15] : memref<16x128xbf16, #tpu.memory_space<vmem>>, vector<16x128xbf16>
      tpu.vector_store %arg6[%c0_14, %c0_15], %16 {strides = array<i32>} : memref<16x128xbf16, #tpu.memory_space<vmem>>, vector<16x128xbf16>,
    } else {
    }
    return
  }
  func.func @transform_0(%arg0: i32, %arg1: i32, %arg2: i32) -> (i32, i32) {
    %c0_i32 = arith.constant 0 : i32
    return %arg0, %arg2 : i32, i32
  }
  func.func @transform_1(%arg0: i32, %arg1: i32, %arg2: i32) -> (i32, i32) {
    %c0_i32 = arith.constant 0 : i32
    return %arg2, %arg1 : i32, i32
  }
  func.func @transform_2(%arg0: i32, %arg1: i32, %arg2: i32) -> (i32, i32) {
    %c0_i32 = arith.constant 0 : i32
    %c0_i32_0 = arith.constant 0 : i32
    return %c0_i32, %arg1 : i32, i32
  }
  func.func @transform_3(%arg0: i32, %arg1: i32, %arg2: i32) -> (i32, i32) {
    %c0_i32 = arith.constant 0 : i32
    return %arg0, %arg1 : i32, i32
  }
}

module attributes {stable_mosaic.version = 11 : i64} {
  func.func @_conv_layer_kernel(%arg0: i32, %arg1: i32, %arg2: memref<1x8x128xbf16, #tpu.memory_space<vmem>>, %arg3: memref<1x8x128xbf16, #tpu.memory_space<vmem>>, %arg4: memref<1x8x128xbf16, #tpu.memory_space<vmem>>, %arg5: memref<5x128x128xbf16, #tpu.memory_space<vmem>>, %arg6: memref<1x128xf32, #tpu.memory_space<vmem>>, %arg7: memref<1x128xf32, #tpu.memory_space<vmem>>, %arg8: memref<1x128xf32, #tpu.memory_space<vmem>>, %arg9: memref<1x8x128xbf16, #tpu.memory_space<vmem>>, %arg10: memref<1x1x2x128xf32, #tpu.memory_space<vmem>>) attributes {dimension_semantics = [#tpu.dimension_semantics<parallel>, #tpu.dimension_semantics<parallel>], iteration_bounds = array<i64: 2, 1>, scalar_prefetch = 0 : i64, scratch_operands = 0 : i64, tpu.core_type = #tpu.core_type<tc>, window_params = [{transform_indices = @transform_0, window_bounds = array<i64: 1, 8, 128>}, {transform_indices = @transform_1, window_bounds = array<i64: 1, 8, 128>}, {transform_indices = @transform_2, window_bounds = array<i64: 1, 8, 128>}, {pipeline_mode = #tpu.pipeline_mode<synchronous>, transform_indices = @transform_3, window_bounds = array<i64: 5, 128, 128>}, {pipeline_mode = #tpu.pipeline_mode<synchronous>, transform_indices = @transform_4, window_bounds = array<i64: 1, 128>}, {pipeline_mode = #tpu.pipeline_mode<synchronous>, transform_indices = @transform_5, window_bounds = array<i64: 1, 128>}, {pipeline_mode = #tpu.pipeline_mode<synchronous>, transform_indices = @transform_6, window_bounds = array<i64: 1, 128>}, {transform_indices = @transform_7, window_bounds = array<i64: 1, 8, 128>}, {transform_indices = @transform_8, window_bounds = array<i64: 1, 1, 2, 128>}]} {
    %c8_i32 = arith.constant 8 : i32
    %0 = arith.muli %arg1, %c8_i32 : i32
    %c0 = arith.constant 0 : index
    %c0_0 = arith.constant 0 : index
    %c0_1 = arith.constant 0 : index
    %1 = vector.load %arg3[%c0, %c0_0, %c0_1] : memref<1x8x128xbf16, #tpu.memory_space<vmem>>, vector<1x8x128xbf16>
    %2 = vector.shape_cast %1 : vector<1x8x128xbf16> to vector<8x128xbf16>
    %3 = arith.extf %2 : vector<8x128xbf16> to vector<8x128xf32>
    %c0_2 = arith.constant 0 : index
    %c0_3 = arith.constant 0 : index
    %c0_4 = arith.constant 0 : index
    %4 = vector.load %arg2[%c0_2, %c0_3, %c0_4] : memref<1x8x128xbf16, #tpu.memory_space<vmem>>, vector<1x8x128xbf16>
    %5 = vector.shape_cast %4 : vector<1x8x128xbf16> to vector<8x128xbf16>
    %6 = arith.extf %5 : vector<8x128xbf16> to vector<8x128xf32>
    %c0_5 = arith.constant 0 : index
    %c0_6 = arith.constant 0 : index
    %c0_7 = arith.constant 0 : index
    %7 = vector.load %arg4[%c0_5, %c0_6, %c0_7] : memref<1x8x128xbf16, #tpu.memory_space<vmem>>, vector<1x8x128xbf16>
    %8 = vector.shape_cast %7 : vector<1x8x128xbf16> to vector<8x128xbf16>
    %9 = arith.extf %8 : vector<8x128xbf16> to vector<8x128xf32>
    %10 = tpu.concatenate %3, %6, %9 in 0 : vector<8x128xf32>, vector<8x128xf32>, vector<8x128xf32> -> vector<24x128xf32>
    %c0_8 = arith.constant 0 : index
    %c0_9 = arith.constant 0 : index
    %11 = vector.load %arg7[%c0_8, %c0_9] : memref<1x128xf32, #tpu.memory_space<vmem>>, vector<1x128xf32>
    %12 = vector.broadcast %11 : vector<1x128xf32> to vector<24x128xf32>
    %13 = arith.mulf %10, %12 : vector<24x128xf32>
    %c0_10 = arith.constant 0 : index
    %c0_11 = arith.constant 0 : index
    %14 = vector.load %arg8[%c0_10, %c0_11] : memref<1x128xf32, #tpu.memory_space<vmem>>, vector<1x128xf32>
    %15 = vector.broadcast %14 : vector<1x128xf32> to vector<24x128xf32>
    %16 = arith.addf %13, %15 : vector<24x128xf32>
    %cst = arith.constant 0.000000e+00 : f32
    %17 = vector.broadcast %cst : f32 to vector<24x128xf32>
    %18 = arith.maximumf %16, %17 : vector<24x128xf32>
    %c8_i32_12 = arith.constant 8 : i32
    %19 = arith.subi %0, %c8_i32_12 : i32
    %20 = tpu.iota {dimensions = array<i32: 0>} : vector<24x1xi32>
    %21 = vector.broadcast %19 : i32 to vector<24x1xi32>
    %22 = arith.addi %21, %20 : vector<24x1xi32>
    %c0_i32 = arith.constant 0 : i32
    %23 = vector.broadcast %c0_i32 : i32 to vector<24x1xi32>
    %24 = arith.cmpi sge, %22, %23 : vector<24x1xi32>
    %c8_i32_13 = arith.constant 8 : i32
    %25 = vector.broadcast %c8_i32_13 : i32 to vector<24x1xi32>
    %26 = arith.cmpi slt, %22, %25 : vector<24x1xi32>
    %27 = arith.andi %24, %26 : vector<24x1xi1>
    %cst_14 = arith.constant 0.000000e+00 : f32
    %28 = vector.shape_cast %27 : vector<24x1xi1> to vector<24x1xi1>
    %29 = vector.broadcast %28 : vector<24x1xi1> to vector<24x128xi1>
    %30 = vector.broadcast %cst_14 : f32 to vector<24x128xf32>
    %31 = arith.select %29, %18, %30 : vector<24x128xi1>, vector<24x128xf32>
    %cst_15 = arith.constant 0.000000e+00 : f32
    %32 = vector.broadcast %cst_15 : f32 to vector<8x128xf32>
    %c18_i32 = arith.constant 18 : i32
    %33 = tpu.dynamic_rotate %31 by %c18_i32 dim 0 : vector<24x128xf32>, i32 -> vector<24x128xf32>
    %34 = vector.extract_strided_slice %33 {offsets = [0, 0], sizes = [8, 128], strides = [1, 1]} : vector<24x128xf32> to vector<8x128xf32>
    %35 = arith.truncf %34 : vector<8x128xf32> to vector<8x128xbf16>
    %c0_16 = arith.constant 0 : index
    %c0_17 = arith.constant 0 : index
    %c0_18 = arith.constant 0 : index
    %36 = vector.load %arg5[%c0_16, %c0_17, %c0_18] : memref<5x128x128xbf16, #tpu.memory_space<vmem>>, vector<1x128x128xbf16>
    %37 = vector.shape_cast %36 : vector<1x128x128xbf16> to vector<128x128xbf16>
    %cst_19 = arith.constant dense<0.000000e+00> : vector<8x128xf32>
    %38 = tpu.matmul %35, %37, %cst_19 {dimension_numbers = #tpu.dot_dimension_numbers<[1], [0], [0], [1], [0, 0, 1, 1], [], []>} : vector<8x128xbf16>, vector<128x128xbf16>, vector<8x128xf32> -> vector<8x128xf32>
    %39 = arith.addf %32, %38 : vector<8x128xf32>
    %c17_i32 = arith.constant 17 : i32
    %40 = tpu.dynamic_rotate %31 by %c17_i32 dim 0 : vector<24x128xf32>, i32 -> vector<24x128xf32>
    %41 = vector.extract_strided_slice %40 {offsets = [0, 0], sizes = [8, 128], strides = [1, 1]} : vector<24x128xf32> to vector<8x128xf32>
    %42 = arith.truncf %41 : vector<8x128xf32> to vector<8x128xbf16>
    %c1 = arith.constant 1 : index
    %c0_20 = arith.constant 0 : index
    %c0_21 = arith.constant 0 : index
    %43 = vector.load %arg5[%c1, %c0_20, %c0_21] : memref<5x128x128xbf16, #tpu.memory_space<vmem>>, vector<1x128x128xbf16>
    %44 = vector.shape_cast %43 : vector<1x128x128xbf16> to vector<128x128xbf16>
    %cst_22 = arith.constant dense<0.000000e+00> : vector<8x128xf32>
    %45 = tpu.matmul %42, %44, %cst_22 {dimension_numbers = #tpu.dot_dimension_numbers<[1], [0], [0], [1], [0, 0, 1, 1], [], []>} : vector<8x128xbf16>, vector<128x128xbf16>, vector<8x128xf32> -> vector<8x128xf32>
    %46 = arith.addf %39, %45 : vector<8x128xf32>
    %47 = vector.extract_strided_slice %31 {offsets = [8, 0], sizes = [8, 128], strides = [1, 1]} : vector<24x128xf32> to vector<8x128xf32>
    %48 = arith.truncf %47 : vector<8x128xf32> to vector<8x128xbf16>
    %c2 = arith.constant 2 : index
    %c0_23 = arith.constant 0 : index
    %c0_24 = arith.constant 0 : index
    %49 = vector.load %arg5[%c2, %c0_23, %c0_24] : memref<5x128x128xbf16, #tpu.memory_space<vmem>>, vector<1x128x128xbf16>
    %50 = vector.shape_cast %49 : vector<1x128x128xbf16> to vector<128x128xbf16>
    %cst_25 = arith.constant dense<0.000000e+00> : vector<8x128xf32>
    %51 = tpu.matmul %48, %50, %cst_25 {dimension_numbers = #tpu.dot_dimension_numbers<[1], [0], [0], [1], [0, 0, 1, 1], [], []>} : vector<8x128xbf16>, vector<128x128xbf16>, vector<8x128xf32> -> vector<8x128xf32>
    %52 = arith.addf %46, %51 : vector<8x128xf32>
    %c15_i32 = arith.constant 15 : i32
    %53 = tpu.dynamic_rotate %31 by %c15_i32 dim 0 : vector<24x128xf32>, i32 -> vector<24x128xf32>
    %54 = vector.extract_strided_slice %53 {offsets = [0, 0], sizes = [8, 128], strides = [1, 1]} : vector<24x128xf32> to vector<8x128xf32>
    %55 = arith.truncf %54 : vector<8x128xf32> to vector<8x128xbf16>
    %c3 = arith.constant 3 : index
    %c0_26 = arith.constant 0 : index
    %c0_27 = arith.constant 0 : index
    %56 = vector.load %arg5[%c3, %c0_26, %c0_27] : memref<5x128x128xbf16, #tpu.memory_space<vmem>>, vector<1x128x128xbf16>
    %57 = vector.shape_cast %56 : vector<1x128x128xbf16> to vector<128x128xbf16>
    %cst_28 = arith.constant dense<0.000000e+00> : vector<8x128xf32>
    %58 = tpu.matmul %55, %57, %cst_28 {dimension_numbers = #tpu.dot_dimension_numbers<[1], [0], [0], [1], [0, 0, 1, 1], [], []>} : vector<8x128xbf16>, vector<128x128xbf16>, vector<8x128xf32> -> vector<8x128xf32>
    %59 = arith.addf %52, %58 : vector<8x128xf32>
    %c14_i32 = arith.constant 14 : i32
    %60 = tpu.dynamic_rotate %31 by %c14_i32 dim 0 : vector<24x128xf32>, i32 -> vector<24x128xf32>
    %61 = vector.extract_strided_slice %60 {offsets = [0, 0], sizes = [8, 128], strides = [1, 1]} : vector<24x128xf32> to vector<8x128xf32>
    %62 = arith.truncf %61 : vector<8x128xf32> to vector<8x128xbf16>
    %c4 = arith.constant 4 : index
    %c0_29 = arith.constant 0 : index
    %c0_30 = arith.constant 0 : index
    %63 = vector.load %arg5[%c4, %c0_29, %c0_30] : memref<5x128x128xbf16, #tpu.memory_space<vmem>>, vector<1x128x128xbf16>
    %64 = vector.shape_cast %63 : vector<1x128x128xbf16> to vector<128x128xbf16>
    %cst_31 = arith.constant dense<0.000000e+00> : vector<8x128xf32>
    %65 = tpu.matmul %62, %64, %cst_31 {dimension_numbers = #tpu.dot_dimension_numbers<[1], [0], [0], [1], [0, 0, 1, 1], [], []>} : vector<8x128xbf16>, vector<128x128xbf16>, vector<8x128xf32> -> vector<8x128xf32>
    %66 = arith.addf %59, %65 : vector<8x128xf32>
    %c0_32 = arith.constant 0 : index
    %c0_33 = arith.constant 0 : index
    %67 = vector.load %arg6[%c0_32, %c0_33] : memref<1x128xf32, #tpu.memory_space<vmem>>, vector<1x128xf32>
    %68 = vector.broadcast %67 : vector<1x128xf32> to vector<8x128xf32>
    %69 = arith.addf %66, %68 : vector<8x128xf32>
    %70 = arith.truncf %69 : vector<8x128xf32> to vector<8x128xbf16>
    %c0_34 = arith.constant 0 : index
    %c0_35 = arith.constant 0 : index
    %c0_36 = arith.constant 0 : index
    %71 = vector.load %arg9[%c0_34, %c0_35, %c0_36] : memref<1x8x128xbf16, #tpu.memory_space<vmem>>, vector<1x8x128xbf16>
    %72 = vector.shape_cast %71 : vector<1x8x128xbf16> to vector<8x128xbf16>
    %73 = vector.shape_cast %70 : vector<8x128xbf16> to vector<1x8x128xbf16>
    tpu.vector_store %arg9[%c0_34, %c0_35, %c0_36], %73 {strides = array<i32>} : memref<1x8x128xbf16, #tpu.memory_space<vmem>>, vector<1x8x128xbf16>,
    %74 = tpu.iota {dimensions = array<i32: 0>} : vector<8x1xi32>
    %75 = vector.broadcast %0 : i32 to vector<8x1xi32>
    %76 = arith.addi %75, %74 : vector<8x1xi32>
    %c8_i32_37 = arith.constant 8 : i32
    %77 = vector.broadcast %c8_i32_37 : i32 to vector<8x1xi32>
    %78 = arith.cmpi slt, %76, %77 : vector<8x1xi32>
    %79 = arith.extui %78 : vector<8x1xi1> to vector<8x1xi32>
    %80 = arith.sitofp %79 : vector<8x1xi32> to vector<8x1xf32>
    %81 = vector.broadcast %80 : vector<8x1xf32> to vector<8x128xf32>
    %82 = arith.mulf %69, %81 : vector<8x128xf32>
    %cst_38 = arith.constant dense<0.000000e+00> : vector<128xf32>
    %83 = vector.multi_reduction <add>, %82, %cst_38 [0] : vector<8x128xf32> to vector<128xf32>
    %84 = vector.shape_cast %83 : vector<128xf32> to vector<1x128xf32>
    %85 = arith.mulf %69, %69 : vector<8x128xf32>
    %86 = vector.broadcast %80 : vector<8x1xf32> to vector<8x128xf32>
    %87 = arith.mulf %85, %86 : vector<8x128xf32>
    %cst_39 = arith.constant dense<0.000000e+00> : vector<128xf32>
    %88 = vector.multi_reduction <add>, %87, %cst_39 [0] : vector<8x128xf32> to vector<128xf32>
    %89 = vector.shape_cast %88 : vector<128xf32> to vector<1x128xf32>
    %c0_40 = arith.constant 0 : index
    %c0_41 = arith.constant 0 : index
    %c0_42 = arith.constant 0 : index
    %c0_43 = arith.constant 0 : index
    %90 = vector.load %arg10[%c0_40, %c0_41, %c0_42, %c0_43] : memref<1x1x2x128xf32, #tpu.memory_space<vmem>>, vector<1x1x1x128xf32>
    %91 = vector.shape_cast %90 : vector<1x1x1x128xf32> to vector<1x128xf32>
    %92 = vector.shape_cast %84 : vector<1x128xf32> to vector<1x1x1x128xf32>
    tpu.vector_store %arg10[%c0_40, %c0_41, %c0_42, %c0_43], %92 {strides = array<i32>} : memref<1x1x2x128xf32, #tpu.memory_space<vmem>>, vector<1x1x1x128xf32>,
    %c0_44 = arith.constant 0 : index
    %c0_45 = arith.constant 0 : index
    %c1_46 = arith.constant 1 : index
    %c0_47 = arith.constant 0 : index
    %93 = vector.load %arg10[%c0_44, %c0_45, %c1_46, %c0_47] : memref<1x1x2x128xf32, #tpu.memory_space<vmem>>, vector<1x1x1x128xf32>
    %94 = vector.shape_cast %93 : vector<1x1x1x128xf32> to vector<1x128xf32>
    %95 = vector.shape_cast %89 : vector<1x128xf32> to vector<1x1x1x128xf32>
    tpu.vector_store %arg10[%c0_44, %c0_45, %c1_46, %c0_47], %95 {strides = array<i32>} : memref<1x1x2x128xf32, #tpu.memory_space<vmem>>, vector<1x1x1x128xf32>,
    return
  }
  func.func @transform_0(%arg0: i32, %arg1: i32) -> (i32, i32, i32) {
    %c0_i32 = arith.constant 0 : i32
    %c0_i32_0 = arith.constant 0 : i32
    return %arg0, %arg1, %c0_i32 : i32, i32, i32
  }
  func.func @transform_1(%arg0: i32, %arg1: i32) -> (i32, i32, i32) {
    %c1_i32 = arith.constant 1 : i32
    %0 = arith.muli %arg1, %c1_i32 : i32
    %c1_i32_0 = arith.constant 1 : i32
    %1 = arith.subi %0, %c1_i32_0 : i32
    %c0_i32 = arith.constant 0 : i32
    %2 = arith.maxsi %1, %c0_i32 : i32
    %c0_i32_1 = arith.constant 0 : i32
    %c0_i32_2 = arith.constant 0 : i32
    return %arg0, %2, %c0_i32_1 : i32, i32, i32
  }
  func.func @transform_2(%arg0: i32, %arg1: i32) -> (i32, i32, i32) {
    %c1_i32 = arith.constant 1 : i32
    %0 = arith.addi %arg1, %c1_i32 : i32
    %c1_i32_0 = arith.constant 1 : i32
    %1 = arith.muli %0, %c1_i32_0 : i32
    %c0_i32 = arith.constant 0 : i32
    %2 = arith.minsi %1, %c0_i32 : i32
    %c0_i32_1 = arith.constant 0 : i32
    %c0_i32_2 = arith.constant 0 : i32
    return %arg0, %2, %c0_i32_1 : i32, i32, i32
  }
  func.func @transform_3(%arg0: i32, %arg1: i32) -> (i32, i32, i32) {
    %c0_i32 = arith.constant 0 : i32
    %c0_i32_0 = arith.constant 0 : i32
    %c0_i32_1 = arith.constant 0 : i32
    %c0_i32_2 = arith.constant 0 : i32
    return %c0_i32, %c0_i32_0, %c0_i32_1 : i32, i32, i32
  }
  func.func @transform_4(%arg0: i32, %arg1: i32) -> (i32, i32) {
    %c0_i32 = arith.constant 0 : i32
    %c0_i32_0 = arith.constant 0 : i32
    %c0_i32_1 = arith.constant 0 : i32
    return %c0_i32, %c0_i32_0 : i32, i32
  }
  func.func @transform_5(%arg0: i32, %arg1: i32) -> (i32, i32) {
    %c0_i32 = arith.constant 0 : i32
    %c0_i32_0 = arith.constant 0 : i32
    %c0_i32_1 = arith.constant 0 : i32
    return %c0_i32, %c0_i32_0 : i32, i32
  }
  func.func @transform_6(%arg0: i32, %arg1: i32) -> (i32, i32) {
    %c0_i32 = arith.constant 0 : i32
    %c0_i32_0 = arith.constant 0 : i32
    %c0_i32_1 = arith.constant 0 : i32
    return %c0_i32, %c0_i32_0 : i32, i32
  }
  func.func @transform_7(%arg0: i32, %arg1: i32) -> (i32, i32, i32) {
    %c0_i32 = arith.constant 0 : i32
    %c0_i32_0 = arith.constant 0 : i32
    return %arg0, %arg1, %c0_i32 : i32, i32, i32
  }
  func.func @transform_8(%arg0: i32, %arg1: i32) -> (i32, i32, i32, i32) {
    %c0_i32 = arith.constant 0 : i32
    %c0_i32_0 = arith.constant 0 : i32
    %c0_i32_1 = arith.constant 0 : i32
    return %arg0, %arg1, %c0_i32, %c0_i32_0 : i32, i32, i32, i32
  }
}

module attributes {stable_mosaic.version = 11 : i64} {
  func.func @_conv_layer_kernel(%arg0: i32, %arg1: i32, %arg2: memref<1x8x128xbf16, #tpu.memory_space<vmem>>, %arg3: memref<1x8x128xbf16, #tpu.memory_space<vmem>>, %arg4: memref<1x8x128xbf16, #tpu.memory_space<vmem>>, %arg5: memref<5x128x128xbf16, #tpu.memory_space<vmem>>, %arg6: memref<1x128xf32, #tpu.memory_space<vmem>>, %arg7: memref<1x128xf32, #tpu.memory_space<vmem>>, %arg8: memref<1x128xf32, #tpu.memory_space<vmem>>, %arg9: memref<1x8x128xbf16, #tpu.memory_space<vmem>>, %arg10: memref<1x1x2x128xf32, #tpu.memory_space<vmem>>) attributes {dimension_semantics = [#tpu.dimension_semantics<parallel>, #tpu.dimension_semantics<parallel>], iteration_bounds = array<i64: 2, 1>, scalar_prefetch = 0 : i64, scratch_operands = 0 : i64, tpu.core_type = #tpu.core_type<tc>, window_params = [{transform_indices = @transform_0, window_bounds = array<i64: 1, 8, 128>}, {transform_indices = @transform_1, window_bounds = array<i64: 1, 8, 128>}, {transform_indices = @transform_2, window_bounds = array<i64: 1, 8, 128>}, {pipeline_mode = #tpu.pipeline_mode<synchronous>, transform_indices = @transform_3, window_bounds = array<i64: 5, 128, 128>}, {pipeline_mode = #tpu.pipeline_mode<synchronous>, transform_indices = @transform_4, window_bounds = array<i64: 1, 128>}, {pipeline_mode = #tpu.pipeline_mode<synchronous>, transform_indices = @transform_5, window_bounds = array<i64: 1, 128>}, {pipeline_mode = #tpu.pipeline_mode<synchronous>, transform_indices = @transform_6, window_bounds = array<i64: 1, 128>}, {transform_indices = @transform_7, window_bounds = array<i64: 1, 8, 128>}, {transform_indices = @transform_8, window_bounds = array<i64: 1, 1, 2, 128>}]} {
    %c8_i32 = arith.constant 8 : i32
    %0 = arith.muli %arg1, %c8_i32 : i32
    %c0 = arith.constant 0 : index
    %c0_0 = arith.constant 0 : index
    %c0_1 = arith.constant 0 : index
    %1 = vector.load %arg3[%c0, %c0_0, %c0_1] : memref<1x8x128xbf16, #tpu.memory_space<vmem>>, vector<1x8x128xbf16>
    %2 = vector.shape_cast %1 : vector<1x8x128xbf16> to vector<8x128xbf16>
    %3 = arith.extf %2 : vector<8x128xbf16> to vector<8x128xf32>
    %c0_2 = arith.constant 0 : index
    %c0_3 = arith.constant 0 : index
    %c0_4 = arith.constant 0 : index
    %4 = vector.load %arg2[%c0_2, %c0_3, %c0_4] : memref<1x8x128xbf16, #tpu.memory_space<vmem>>, vector<1x8x128xbf16>
    %5 = vector.shape_cast %4 : vector<1x8x128xbf16> to vector<8x128xbf16>
    %6 = arith.extf %5 : vector<8x128xbf16> to vector<8x128xf32>
    %c0_5 = arith.constant 0 : index
    %c0_6 = arith.constant 0 : index
    %c0_7 = arith.constant 0 : index
    %7 = vector.load %arg4[%c0_5, %c0_6, %c0_7] : memref<1x8x128xbf16, #tpu.memory_space<vmem>>, vector<1x8x128xbf16>
    %8 = vector.shape_cast %7 : vector<1x8x128xbf16> to vector<8x128xbf16>
    %9 = arith.extf %8 : vector<8x128xbf16> to vector<8x128xf32>
    %10 = tpu.concatenate %3, %6, %9 in 0 : vector<8x128xf32>, vector<8x128xf32>, vector<8x128xf32> -> vector<24x128xf32>
    %c8_i32_8 = arith.constant 8 : i32
    %11 = arith.subi %0, %c8_i32_8 : i32
    %12 = tpu.iota {dimensions = array<i32: 0>} : vector<24x1xi32>
    %13 = vector.broadcast %11 : i32 to vector<24x1xi32>
    %14 = arith.addi %13, %12 : vector<24x1xi32>
    %c0_i32 = arith.constant 0 : i32
    %15 = vector.broadcast %c0_i32 : i32 to vector<24x1xi32>
    %16 = arith.cmpi sge, %14, %15 : vector<24x1xi32>
    %c8_i32_9 = arith.constant 8 : i32
    %17 = vector.broadcast %c8_i32_9 : i32 to vector<24x1xi32>
    %18 = arith.cmpi slt, %14, %17 : vector<24x1xi32>
    %19 = arith.andi %16, %18 : vector<24x1xi1>
    %cst = arith.constant 0.000000e+00 : f32
    %20 = vector.shape_cast %19 : vector<24x1xi1> to vector<24x1xi1>
    %21 = vector.broadcast %20 : vector<24x1xi1> to vector<24x128xi1>
    %22 = vector.broadcast %cst : f32 to vector<24x128xf32>
    %23 = arith.select %21, %10, %22 : vector<24x128xi1>, vector<24x128xf32>
    %cst_10 = arith.constant 0.000000e+00 : f32
    %24 = vector.broadcast %cst_10 : f32 to vector<8x128xf32>
    %c18_i32 = arith.constant 18 : i32
    %25 = tpu.dynamic_rotate %23 by %c18_i32 dim 0 : vector<24x128xf32>, i32 -> vector<24x128xf32>
    %26 = vector.extract_strided_slice %25 {offsets = [0, 0], sizes = [8, 128], strides = [1, 1]} : vector<24x128xf32> to vector<8x128xf32>
    %27 = arith.truncf %26 : vector<8x128xf32> to vector<8x128xbf16>
    %c0_11 = arith.constant 0 : index
    %c0_12 = arith.constant 0 : index
    %c0_13 = arith.constant 0 : index
    %28 = vector.load %arg5[%c0_11, %c0_12, %c0_13] : memref<5x128x128xbf16, #tpu.memory_space<vmem>>, vector<1x128x128xbf16>
    %29 = vector.shape_cast %28 : vector<1x128x128xbf16> to vector<128x128xbf16>
    %cst_14 = arith.constant dense<0.000000e+00> : vector<8x128xf32>
    %30 = tpu.matmul %27, %29, %cst_14 {dimension_numbers = #tpu.dot_dimension_numbers<[1], [0], [0], [1], [0, 0, 1, 1], [], []>} : vector<8x128xbf16>, vector<128x128xbf16>, vector<8x128xf32> -> vector<8x128xf32>
    %31 = arith.addf %24, %30 : vector<8x128xf32>
    %c17_i32 = arith.constant 17 : i32
    %32 = tpu.dynamic_rotate %23 by %c17_i32 dim 0 : vector<24x128xf32>, i32 -> vector<24x128xf32>
    %33 = vector.extract_strided_slice %32 {offsets = [0, 0], sizes = [8, 128], strides = [1, 1]} : vector<24x128xf32> to vector<8x128xf32>
    %34 = arith.truncf %33 : vector<8x128xf32> to vector<8x128xbf16>
    %c1 = arith.constant 1 : index
    %c0_15 = arith.constant 0 : index
    %c0_16 = arith.constant 0 : index
    %35 = vector.load %arg5[%c1, %c0_15, %c0_16] : memref<5x128x128xbf16, #tpu.memory_space<vmem>>, vector<1x128x128xbf16>
    %36 = vector.shape_cast %35 : vector<1x128x128xbf16> to vector<128x128xbf16>
    %cst_17 = arith.constant dense<0.000000e+00> : vector<8x128xf32>
    %37 = tpu.matmul %34, %36, %cst_17 {dimension_numbers = #tpu.dot_dimension_numbers<[1], [0], [0], [1], [0, 0, 1, 1], [], []>} : vector<8x128xbf16>, vector<128x128xbf16>, vector<8x128xf32> -> vector<8x128xf32>
    %38 = arith.addf %31, %37 : vector<8x128xf32>
    %39 = vector.extract_strided_slice %23 {offsets = [8, 0], sizes = [8, 128], strides = [1, 1]} : vector<24x128xf32> to vector<8x128xf32>
    %40 = arith.truncf %39 : vector<8x128xf32> to vector<8x128xbf16>
    %c2 = arith.constant 2 : index
    %c0_18 = arith.constant 0 : index
    %c0_19 = arith.constant 0 : index
    %41 = vector.load %arg5[%c2, %c0_18, %c0_19] : memref<5x128x128xbf16, #tpu.memory_space<vmem>>, vector<1x128x128xbf16>
    %42 = vector.shape_cast %41 : vector<1x128x128xbf16> to vector<128x128xbf16>
    %cst_20 = arith.constant dense<0.000000e+00> : vector<8x128xf32>
    %43 = tpu.matmul %40, %42, %cst_20 {dimension_numbers = #tpu.dot_dimension_numbers<[1], [0], [0], [1], [0, 0, 1, 1], [], []>} : vector<8x128xbf16>, vector<128x128xbf16>, vector<8x128xf32> -> vector<8x128xf32>
    %44 = arith.addf %38, %43 : vector<8x128xf32>
    %c15_i32 = arith.constant 15 : i32
    %45 = tpu.dynamic_rotate %23 by %c15_i32 dim 0 : vector<24x128xf32>, i32 -> vector<24x128xf32>
    %46 = vector.extract_strided_slice %45 {offsets = [0, 0], sizes = [8, 128], strides = [1, 1]} : vector<24x128xf32> to vector<8x128xf32>
    %47 = arith.truncf %46 : vector<8x128xf32> to vector<8x128xbf16>
    %c3 = arith.constant 3 : index
    %c0_21 = arith.constant 0 : index
    %c0_22 = arith.constant 0 : index
    %48 = vector.load %arg5[%c3, %c0_21, %c0_22] : memref<5x128x128xbf16, #tpu.memory_space<vmem>>, vector<1x128x128xbf16>
    %49 = vector.shape_cast %48 : vector<1x128x128xbf16> to vector<128x128xbf16>
    %cst_23 = arith.constant dense<0.000000e+00> : vector<8x128xf32>
    %50 = tpu.matmul %47, %49, %cst_23 {dimension_numbers = #tpu.dot_dimension_numbers<[1], [0], [0], [1], [0, 0, 1, 1], [], []>} : vector<8x128xbf16>, vector<128x128xbf16>, vector<8x128xf32> -> vector<8x128xf32>
    %51 = arith.addf %44, %50 : vector<8x128xf32>
    %c14_i32 = arith.constant 14 : i32
    %52 = tpu.dynamic_rotate %23 by %c14_i32 dim 0 : vector<24x128xf32>, i32 -> vector<24x128xf32>
    %53 = vector.extract_strided_slice %52 {offsets = [0, 0], sizes = [8, 128], strides = [1, 1]} : vector<24x128xf32> to vector<8x128xf32>
    %54 = arith.truncf %53 : vector<8x128xf32> to vector<8x128xbf16>
    %c4 = arith.constant 4 : index
    %c0_24 = arith.constant 0 : index
    %c0_25 = arith.constant 0 : index
    %55 = vector.load %arg5[%c4, %c0_24, %c0_25] : memref<5x128x128xbf16, #tpu.memory_space<vmem>>, vector<1x128x128xbf16>
    %56 = vector.shape_cast %55 : vector<1x128x128xbf16> to vector<128x128xbf16>
    %cst_26 = arith.constant dense<0.000000e+00> : vector<8x128xf32>
    %57 = tpu.matmul %54, %56, %cst_26 {dimension_numbers = #tpu.dot_dimension_numbers<[1], [0], [0], [1], [0, 0, 1, 1], [], []>} : vector<8x128xbf16>, vector<128x128xbf16>, vector<8x128xf32> -> vector<8x128xf32>
    %58 = arith.addf %51, %57 : vector<8x128xf32>
    %c0_27 = arith.constant 0 : index
    %c0_28 = arith.constant 0 : index
    %59 = vector.load %arg6[%c0_27, %c0_28] : memref<1x128xf32, #tpu.memory_space<vmem>>, vector<1x128xf32>
    %60 = vector.broadcast %59 : vector<1x128xf32> to vector<8x128xf32>
    %61 = arith.addf %58, %60 : vector<8x128xf32>
    %62 = arith.truncf %61 : vector<8x128xf32> to vector<8x128xbf16>
    %c0_29 = arith.constant 0 : index
    %c0_30 = arith.constant 0 : index
    %c0_31 = arith.constant 0 : index
    %63 = vector.load %arg9[%c0_29, %c0_30, %c0_31] : memref<1x8x128xbf16, #tpu.memory_space<vmem>>, vector<1x8x128xbf16>
    %64 = vector.shape_cast %63 : vector<1x8x128xbf16> to vector<8x128xbf16>
    %65 = vector.shape_cast %62 : vector<8x128xbf16> to vector<1x8x128xbf16>
    tpu.vector_store %arg9[%c0_29, %c0_30, %c0_31], %65 {strides = array<i32>} : memref<1x8x128xbf16, #tpu.memory_space<vmem>>, vector<1x8x128xbf16>,
    %66 = tpu.iota {dimensions = array<i32: 0>} : vector<8x1xi32>
    %67 = vector.broadcast %0 : i32 to vector<8x1xi32>
    %68 = arith.addi %67, %66 : vector<8x1xi32>
    %c8_i32_32 = arith.constant 8 : i32
    %69 = vector.broadcast %c8_i32_32 : i32 to vector<8x1xi32>
    %70 = arith.cmpi slt, %68, %69 : vector<8x1xi32>
    %71 = arith.extui %70 : vector<8x1xi1> to vector<8x1xi32>
    %72 = arith.sitofp %71 : vector<8x1xi32> to vector<8x1xf32>
    %73 = vector.broadcast %72 : vector<8x1xf32> to vector<8x128xf32>
    %74 = arith.mulf %61, %73 : vector<8x128xf32>
    %cst_33 = arith.constant dense<0.000000e+00> : vector<128xf32>
    %75 = vector.multi_reduction <add>, %74, %cst_33 [0] : vector<8x128xf32> to vector<128xf32>
    %76 = vector.shape_cast %75 : vector<128xf32> to vector<1x128xf32>
    %77 = arith.mulf %61, %61 : vector<8x128xf32>
    %78 = vector.broadcast %72 : vector<8x1xf32> to vector<8x128xf32>
    %79 = arith.mulf %77, %78 : vector<8x128xf32>
    %cst_34 = arith.constant dense<0.000000e+00> : vector<128xf32>
    %80 = vector.multi_reduction <add>, %79, %cst_34 [0] : vector<8x128xf32> to vector<128xf32>
    %81 = vector.shape_cast %80 : vector<128xf32> to vector<1x128xf32>
    %c0_35 = arith.constant 0 : index
    %c0_36 = arith.constant 0 : index
    %c0_37 = arith.constant 0 : index
    %c0_38 = arith.constant 0 : index
    %82 = vector.load %arg10[%c0_35, %c0_36, %c0_37, %c0_38] : memref<1x1x2x128xf32, #tpu.memory_space<vmem>>, vector<1x1x1x128xf32>
    %83 = vector.shape_cast %82 : vector<1x1x1x128xf32> to vector<1x128xf32>
    %84 = vector.shape_cast %76 : vector<1x128xf32> to vector<1x1x1x128xf32>
    tpu.vector_store %arg10[%c0_35, %c0_36, %c0_37, %c0_38], %84 {strides = array<i32>} : memref<1x1x2x128xf32, #tpu.memory_space<vmem>>, vector<1x1x1x128xf32>,
    %c0_39 = arith.constant 0 : index
    %c0_40 = arith.constant 0 : index
    %c1_41 = arith.constant 1 : index
    %c0_42 = arith.constant 0 : index
    %85 = vector.load %arg10[%c0_39, %c0_40, %c1_41, %c0_42] : memref<1x1x2x128xf32, #tpu.memory_space<vmem>>, vector<1x1x1x128xf32>
    %86 = vector.shape_cast %85 : vector<1x1x1x128xf32> to vector<1x128xf32>
    %87 = vector.shape_cast %81 : vector<1x128xf32> to vector<1x1x1x128xf32>
    tpu.vector_store %arg10[%c0_39, %c0_40, %c1_41, %c0_42], %87 {strides = array<i32>} : memref<1x1x2x128xf32, #tpu.memory_space<vmem>>, vector<1x1x1x128xf32>,
    return
  }
  func.func @transform_0(%arg0: i32, %arg1: i32) -> (i32, i32, i32) {
    %c0_i32 = arith.constant 0 : i32
    %c0_i32_0 = arith.constant 0 : i32
    return %arg0, %arg1, %c0_i32 : i32, i32, i32
  }
  func.func @transform_1(%arg0: i32, %arg1: i32) -> (i32, i32, i32) {
    %c1_i32 = arith.constant 1 : i32
    %0 = arith.muli %arg1, %c1_i32 : i32
    %c1_i32_0 = arith.constant 1 : i32
    %1 = arith.subi %0, %c1_i32_0 : i32
    %c0_i32 = arith.constant 0 : i32
    %2 = arith.maxsi %1, %c0_i32 : i32
    %c0_i32_1 = arith.constant 0 : i32
    %c0_i32_2 = arith.constant 0 : i32
    return %arg0, %2, %c0_i32_1 : i32, i32, i32
  }
  func.func @transform_2(%arg0: i32, %arg1: i32) -> (i32, i32, i32) {
    %c1_i32 = arith.constant 1 : i32
    %0 = arith.addi %arg1, %c1_i32 : i32
    %c1_i32_0 = arith.constant 1 : i32
    %1 = arith.muli %0, %c1_i32_0 : i32
    %c0_i32 = arith.constant 0 : i32
    %2 = arith.minsi %1, %c0_i32 : i32
    %c0_i32_1 = arith.constant 0 : i32
    %c0_i32_2 = arith.constant 0 : i32
    return %arg0, %2, %c0_i32_1 : i32, i32, i32
  }
  func.func @transform_3(%arg0: i32, %arg1: i32) -> (i32, i32, i32) {
    %c0_i32 = arith.constant 0 : i32
    %c0_i32_0 = arith.constant 0 : i32
    %c0_i32_1 = arith.constant 0 : i32
    %c0_i32_2 = arith.constant 0 : i32
    return %c0_i32, %c0_i32_0, %c0_i32_1 : i32, i32, i32
  }
  func.func @transform_4(%arg0: i32, %arg1: i32) -> (i32, i32) {
    %c0_i32 = arith.constant 0 : i32
    %c0_i32_0 = arith.constant 0 : i32
    %c0_i32_1 = arith.constant 0 : i32
    return %c0_i32, %c0_i32_0 : i32, i32
  }
  func.func @transform_5(%arg0: i32, %arg1: i32) -> (i32, i32) {
    %c0_i32 = arith.constant 0 : i32
    %c0_i32_0 = arith.constant 0 : i32
    %c0_i32_1 = arith.constant 0 : i32
    return %c0_i32, %c0_i32_0 : i32, i32
  }
  func.func @transform_6(%arg0: i32, %arg1: i32) -> (i32, i32) {
    %c0_i32 = arith.constant 0 : i32
    %c0_i32_0 = arith.constant 0 : i32
    %c0_i32_1 = arith.constant 0 : i32
    return %c0_i32, %c0_i32_0 : i32, i32
  }
  func.func @transform_7(%arg0: i32, %arg1: i32) -> (i32, i32, i32) {
    %c0_i32 = arith.constant 0 : i32
    %c0_i32_0 = arith.constant 0 : i32
    return %arg0, %arg1, %c0_i32 : i32, i32, i32
  }
  func.func @transform_8(%arg0: i32, %arg1: i32) -> (i32, i32, i32, i32) {
    %c0_i32 = arith.constant 0 : i32
    %c0_i32_0 = arith.constant 0 : i32
    %c0_i32_1 = arith.constant 0 : i32
    return %arg0, %arg1, %c0_i32, %c0_i32_0 : i32, i32, i32, i32
  }
}

module attributes {stable_mosaic.version = 11 : i64} {
  func.func @_bn_relu_kernel(%arg0: i32, %arg1: i32, %arg2: memref<1x8x128xbf16, #tpu.memory_space<vmem>>, %arg3: memref<1x128xf32, #tpu.memory_space<vmem>>, %arg4: memref<1x128xf32, #tpu.memory_space<vmem>>, %arg5: memref<1x8x128xbf16, #tpu.memory_space<vmem>>) attributes {dimension_semantics = [#tpu.dimension_semantics<parallel>, #tpu.dimension_semantics<parallel>], iteration_bounds = array<i64: 2, 1>, scalar_prefetch = 0 : i64, scratch_operands = 0 : i64, tpu.core_type = #tpu.core_type<tc>, window_params = [{transform_indices = @transform_0, window_bounds = array<i64: 1, 8, 128>}, {pipeline_mode = #tpu.pipeline_mode<synchronous>, transform_indices = @transform_1, window_bounds = array<i64: 1, 128>}, {pipeline_mode = #tpu.pipeline_mode<synchronous>, transform_indices = @transform_2, window_bounds = array<i64: 1, 128>}, {transform_indices = @transform_3, window_bounds = array<i64: 1, 8, 128>}]} {
    %c0 = arith.constant 0 : index
    %c0_0 = arith.constant 0 : index
    %c0_1 = arith.constant 0 : index
    %0 = vector.load %arg2[%c0, %c0_0, %c0_1] : memref<1x8x128xbf16, #tpu.memory_space<vmem>>, vector<1x8x128xbf16>
    %1 = vector.shape_cast %0 : vector<1x8x128xbf16> to vector<8x128xbf16>
    %2 = arith.extf %1 : vector<8x128xbf16> to vector<8x128xf32>
    %c0_2 = arith.constant 0 : index
    %c0_3 = arith.constant 0 : index
    %3 = vector.load %arg3[%c0_2, %c0_3] : memref<1x128xf32, #tpu.memory_space<vmem>>, vector<1x128xf32>
    %4 = vector.broadcast %3 : vector<1x128xf32> to vector<8x128xf32>
    %5 = arith.mulf %2, %4 : vector<8x128xf32>
    %c0_4 = arith.constant 0 : index
    %c0_5 = arith.constant 0 : index
    %6 = vector.load %arg4[%c0_4, %c0_5] : memref<1x128xf32, #tpu.memory_space<vmem>>, vector<1x128xf32>
    %7 = vector.broadcast %6 : vector<1x128xf32> to vector<8x128xf32>
    %8 = arith.addf %5, %7 : vector<8x128xf32>
    %cst = arith.constant 0.000000e+00 : f32
    %9 = vector.broadcast %cst : f32 to vector<8x128xf32>
    %10 = arith.maximumf %8, %9 : vector<8x128xf32>
    %11 = arith.truncf %10 : vector<8x128xf32> to vector<8x128xbf16>
    %c0_6 = arith.constant 0 : index
    %c0_7 = arith.constant 0 : index
    %c0_8 = arith.constant 0 : index
    %12 = vector.load %arg5[%c0_6, %c0_7, %c0_8] : memref<1x8x128xbf16, #tpu.memory_space<vmem>>, vector<1x8x128xbf16>
    %13 = vector.shape_cast %12 : vector<1x8x128xbf16> to vector<8x128xbf16>
    %14 = vector.shape_cast %11 : vector<8x128xbf16> to vector<1x8x128xbf16>
    tpu.vector_store %arg5[%c0_6, %c0_7, %c0_8], %14 {strides = array<i32>} : memref<1x8x128xbf16, #tpu.memory_space<vmem>>, vector<1x8x128xbf16>,
    return
  }
  func.func @transform_0(%arg0: i32, %arg1: i32) -> (i32, i32, i32) {
    %c0_i32 = arith.constant 0 : i32
    %c0_i32_0 = arith.constant 0 : i32
    return %arg0, %arg1, %c0_i32 : i32, i32, i32
  }
  func.func @transform_1(%arg0: i32, %arg1: i32) -> (i32, i32) {
    %c0_i32 = arith.constant 0 : i32
    %c0_i32_0 = arith.constant 0 : i32
    %c0_i32_1 = arith.constant 0 : i32
    return %c0_i32, %c0_i32_0 : i32, i32
  }
  func.func @transform_2(%arg0: i32, %arg1: i32) -> (i32, i32) {
    %c0_i32 = arith.constant 0 : i32
    %c0_i32_0 = arith.constant 0 : i32
    %c0_i32_1 = arith.constant 0 : i32
    return %c0_i32, %c0_i32_0 : i32, i32
  }
  func.func @transform_3(%arg0: i32, %arg1: i32) -> (i32, i32, i32) {
    %c0_i32 = arith.constant 0 : i32
    %c0_i32_0 = arith.constant 0 : i32
    return %arg0, %arg1, %c0_i32 : i32, i32, i32
  }
}

module attributes {stable_mosaic.version = 11 : i64} {
  func.func @_matmul_kernel(%arg0: i32, %arg1: i32, %arg2: i32, %arg3: memref<16x128xbf16, #tpu.memory_space<vmem>>, %arg4: memref<128x128xbf16, #tpu.memory_space<vmem>>, %arg5: memref<1x128xf32, #tpu.memory_space<vmem>>, %arg6: memref<16x128xf32, #tpu.memory_space<vmem>>, %arg7: memref<16x128xf32, #tpu.memory_space<vmem>>) attributes {dimension_semantics = [#tpu.dimension_semantics<parallel>, #tpu.dimension_semantics<parallel>, #tpu.dimension_semantics<arbitrary>], iteration_bounds = array<i64: 1, 1, 1>, scalar_prefetch = 0 : i64, scratch_operands = 1 : i64, tpu.core_type = #tpu.core_type<tc>, window_params = [{transform_indices = @transform_0, window_bounds = array<i64: 16, 128>}, {transform_indices = @transform_1, window_bounds = array<i64: 128, 128>}, {transform_indices = @transform_2, window_bounds = array<i64: 1, 128>}, {transform_indices = @transform_3, window_bounds = array<i64: 16, 128>}]} {
    %c0_i32 = arith.constant 0 : i32
    %0 = arith.cmpi eq, %arg2, %c0_i32 : i32
    %1 = arith.extui %0 : i1 to i32
    %c0_i32_0 = arith.constant 0 : i32
    %2 = arith.cmpi ne, %1, %c0_i32_0 : i32
    scf.if %2 {
      %cst_10 = arith.constant 0.000000e+00 : f32
      %12 = vector.broadcast %cst_10 : f32 to vector<16x128xf32>
      %c0_11 = arith.constant 0 : index
      %c0_12 = arith.constant 0 : index
      %13 = vector.load %arg7[%c0_11, %c0_12] : memref<16x128xf32, #tpu.memory_space<vmem>>, vector<16x128xf32>
      tpu.vector_store %arg7[%c0_11, %c0_12], %12 {strides = array<i32>} : memref<16x128xf32, #tpu.memory_space<vmem>>, vector<16x128xf32>,
    } else {
    }
    %c0 = arith.constant 0 : index
    %c0_1 = arith.constant 0 : index
    %3 = vector.load %arg7[%c0, %c0_1] : memref<16x128xf32, #tpu.memory_space<vmem>>, vector<16x128xf32>
    %c0_2 = arith.constant 0 : index
    %c0_3 = arith.constant 0 : index
    %4 = vector.load %arg3[%c0_2, %c0_3] : memref<16x128xbf16, #tpu.memory_space<vmem>>, vector<16x128xbf16>
    %c0_4 = arith.constant 0 : index
    %c0_5 = arith.constant 0 : index
    %5 = vector.load %arg4[%c0_4, %c0_5] : memref<128x128xbf16, #tpu.memory_space<vmem>>, vector<128x128xbf16>
    %cst = arith.constant dense<0.000000e+00> : vector<16x128xf32>
    %6 = tpu.matmul %4, %5, %cst {dimension_numbers = #tpu.dot_dimension_numbers<[1], [0], [0], [1], [0, 0, 1, 1], [], []>} : vector<16x128xbf16>, vector<128x128xbf16>, vector<16x128xf32> -> vector<16x128xf32>
    %7 = arith.addf %3, %6 : vector<16x128xf32>
    %c0_6 = arith.constant 0 : index
    %c0_7 = arith.constant 0 : index
    %8 = vector.load %arg7[%c0_6, %c0_7] : memref<16x128xf32, #tpu.memory_space<vmem>>, vector<16x128xf32>
    tpu.vector_store %arg7[%c0_6, %c0_7], %7 {strides = array<i32>} : memref<16x128xf32, #tpu.memory_space<vmem>>, vector<16x128xf32>,
    %c0_i32_8 = arith.constant 0 : i32
    %9 = arith.cmpi eq, %arg2, %c0_i32_8 : i32
    %10 = arith.extui %9 : i1 to i32
    %c0_i32_9 = arith.constant 0 : i32
    %11 = arith.cmpi ne, %10, %c0_i32_9 : i32
    scf.if %11 {
      %c0_10 = arith.constant 0 : index
      %c0_11 = arith.constant 0 : index
      %12 = vector.load %arg7[%c0_10, %c0_11] : memref<16x128xf32, #tpu.memory_space<vmem>>, vector<16x128xf32>
      %c0_12 = arith.constant 0 : index
      %c0_13 = arith.constant 0 : index
      %13 = vector.load %arg5[%c0_12, %c0_13] : memref<1x128xf32, #tpu.memory_space<vmem>>, vector<1x128xf32>
      %14 = vector.broadcast %13 : vector<1x128xf32> to vector<16x128xf32>
      %15 = arith.addf %12, %14 : vector<16x128xf32>
      %c0_14 = arith.constant 0 : index
      %c0_15 = arith.constant 0 : index
      %16 = vector.load %arg6[%c0_14, %c0_15] : memref<16x128xf32, #tpu.memory_space<vmem>>, vector<16x128xf32>
      tpu.vector_store %arg6[%c0_14, %c0_15], %15 {strides = array<i32>} : memref<16x128xf32, #tpu.memory_space<vmem>>, vector<16x128xf32>,
    } else {
    }
    return
  }
  func.func @transform_0(%arg0: i32, %arg1: i32, %arg2: i32) -> (i32, i32) {
    %c0_i32 = arith.constant 0 : i32
    return %arg0, %arg2 : i32, i32
  }
  func.func @transform_1(%arg0: i32, %arg1: i32, %arg2: i32) -> (i32, i32) {
    %c0_i32 = arith.constant 0 : i32
    return %arg2, %arg1 : i32, i32
  }
  func.func @transform_2(%arg0: i32, %arg1: i32, %arg2: i32) -> (i32, i32) {
    %c0_i32 = arith.constant 0 : i32
    %c0_i32_0 = arith.constant 0 : i32
    return %c0_i32, %arg1 : i32, i32
  }
  func.func @transform_3(%arg0: i32, %arg1: i32, %arg2: i32) -> (i32, i32) {
    %c0_i32 = arith.constant 0 : i32
    return %arg0, %arg1 : i32, i32
  }
}

module attributes {stable_mosaic.version = 11 : i64} {
  func.func @_hmm_kernel(%arg0: i32, %arg1: i32, %arg2: i32, %arg3: memref<2xi32, #tpu.memory_space<smem>>, %arg4: memref<1x128x16xf32, #tpu.memory_space<vmem>>, %arg5: memref<1x8x128xbf16, #tpu.memory_space<vmem>>, %arg6: memref<1x8x1xf32, #tpu.memory_space<vmem>>, %arg7: memref<128x1xf32, #tpu.memory_space<vmem>>, %arg8: memref<128x1xf32, #tpu.memory_space<vmem>>, %arg9: memref<1x1x1x16xf32, #tpu.memory_space<vmem>>, %arg10: memref<128x16xbf16, #tpu.memory_space<vmem>>, %arg11: memref<1x16xf32, #tpu.memory_space<vmem>>, %arg12: memref<1x16xf32, #tpu.memory_space<vmem>>, %arg13: memref<1x16xf32, #tpu.memory_space<vmem>>) attributes {dimension_semantics = [#tpu.dimension_semantics<parallel>, #tpu.dimension_semantics<parallel>, #tpu.dimension_semantics<arbitrary>], iteration_bounds = array<i64: 2, 1, 1>, scalar_prefetch = 1 : i64, scratch_operands = 4 : i64, tpu.core_type = #tpu.core_type<tc>, window_params = [{transform_indices = @transform_0, window_bounds = array<i64: 1, 128, 16>}, {transform_indices = @transform_1, window_bounds = array<i64: 1, 8, 128>}, {transform_indices = @transform_2, window_bounds = array<i64: 1, 8, 1>}, {pipeline_mode = #tpu.pipeline_mode<synchronous>, transform_indices = @transform_3, window_bounds = array<i64: 128, 1>}, {pipeline_mode = #tpu.pipeline_mode<synchronous>, transform_indices = @transform_4, window_bounds = array<i64: 128, 1>}, {transform_indices = @transform_5, window_bounds = array<i64: 1, 1, 1, 16>}]} {
    %c0_i32 = arith.constant 0 : i32
    %0 = arith.cmpi eq, %arg2, %c0_i32 : i32
    %1 = arith.extui %0 : i1 to i32
    %c0_i32_0 = arith.constant 0 : i32
    %2 = arith.cmpi ne, %1, %c0_i32_0 : i32
    scf.if %2 {
      %c0_26 = arith.constant 0 : index
      %c0_27 = arith.constant 0 : index
      %c0_28 = arith.constant 0 : index
      %49 = vector.load %arg4[%c0_26, %c0_27, %c0_28] : memref<1x128x16xf32, #tpu.memory_space<vmem>>, vector<1x128x16xf32>
      %50 = vector.shape_cast %49 : vector<1x128x16xf32> to vector<128x16xf32>
      %c0_29 = arith.constant 0 : index
      %c0_30 = arith.constant 0 : index
      %51 = vector.load %arg8[%c0_29, %c0_30] : memref<128x1xf32, #tpu.memory_space<vmem>>, vector<128x1xf32>
      %52 = vector.broadcast %51 : vector<128x1xf32> to vector<128x16xf32>
      %53 = arith.addf %50, %52 : vector<128x16xf32>
      %c0_31 = arith.constant 0 : index
      %c0_32 = arith.constant 0 : index
      %54 = vector.load %arg7[%c0_31, %c0_32] : memref<128x1xf32, #tpu.memory_space<vmem>>, vector<128x1xf32>
      %55 = vector.broadcast %54 : vector<128x1xf32> to vector<128x16xf32>
      %56 = arith.mulf %53, %55 : vector<128x16xf32>
      %57 = arith.mulf %56, %56 : vector<128x16xf32>
      %cst_33 = arith.constant dense<0.000000e+00> : vector<16xf32>
      %58 = vector.multi_reduction <add>, %57, %cst_33 [0] : vector<128x16xf32> to vector<16xf32>
      %59 = vector.shape_cast %58 : vector<16xf32> to vector<1x16xf32>
      %c0_34 = arith.constant 0 : index
      %c0_35 = arith.constant 0 : index
      %60 = vector.load %arg11[%c0_34, %c0_35] : memref<1x16xf32, #tpu.memory_space<vmem>>, vector<1x16xf32>
      tpu.vector_store %arg11[%c0_34, %c0_35], %59 {strides = array<i32>} : memref<1x16xf32, #tpu.memory_space<vmem>>, vector<1x16xf32>,
      %61 = arith.truncf %56 : vector<128x16xf32> to vector<128x16xbf16>
      %c0_36 = arith.constant 0 : index
      %c0_37 = arith.constant 0 : index
      %62 = vector.load %arg10[%c0_36, %c0_37] : memref<128x16xbf16, #tpu.memory_space<vmem>>, vector<128x16xbf16>
      tpu.vector_store %arg10[%c0_36, %c0_37], %61 {strides = array<i32>} : memref<128x16xbf16, #tpu.memory_space<vmem>>, vector<128x16xbf16>,
      %cst_38 = arith.constant -1.000000e+30 : f32
      %63 = vector.broadcast %cst_38 : f32 to vector<1x16xf32>
      %c0_39 = arith.constant 0 : index
      %c0_40 = arith.constant 0 : index
      %64 = vector.load %arg12[%c0_39, %c0_40] : memref<1x16xf32, #tpu.memory_space<vmem>>, vector<1x16xf32>
      tpu.vector_store %arg12[%c0_39, %c0_40], %63 {strides = array<i32>} : memref<1x16xf32, #tpu.memory_space<vmem>>, vector<1x16xf32>,
      %cst_41 = arith.constant 0.000000e+00 : f32
      %65 = vector.broadcast %cst_41 : f32 to vector<1x16xf32>
      %c0_42 = arith.constant 0 : index
      %c0_43 = arith.constant 0 : index
      %66 = vector.load %arg13[%c0_42, %c0_43] : memref<1x16xf32, #tpu.memory_space<vmem>>, vector<1x16xf32>
      tpu.vector_store %arg13[%c0_42, %c0_43], %65 {strides = array<i32>} : memref<1x16xf32, #tpu.memory_space<vmem>>, vector<1x16xf32>,
    } else {
    }
    %c0 = arith.constant 0 : index
    %c0_1 = arith.constant 0 : index
    %c0_2 = arith.constant 0 : index
    %3 = vector.load %arg5[%c0, %c0_1, %c0_2] : memref<1x8x128xbf16, #tpu.memory_space<vmem>>, vector<1x8x128xbf16>
    %4 = vector.shape_cast %3 : vector<1x8x128xbf16> to vector<8x128xbf16>
    %c0_3 = arith.constant 0 : index
    %c0_4 = arith.constant 0 : index
    %5 = vector.load %arg10[%c0_3, %c0_4] : memref<128x16xbf16, #tpu.memory_space<vmem>>, vector<128x16xbf16>
    %cst = arith.constant dense<0.000000e+00> : vector<8x16xf32>
    %6 = tpu.matmul %4, %5, %cst {dimension_numbers = #tpu.dot_dimension_numbers<[1], [0], [0], [1], [0, 0, 1, 1], [], []>} : vector<8x128xbf16>, vector<128x16xbf16>, vector<8x16xf32> -> vector<8x16xf32>
    %c0_5 = arith.constant 0 : index
    %c0_6 = arith.constant 0 : index
    %7 = vector.load %arg11[%c0_5, %c0_6] : memref<1x16xf32, #tpu.memory_space<vmem>>, vector<1x16xf32>
    %c0_7 = arith.constant 0 : index
    %c0_8 = arith.constant 0 : index
    %c0_9 = arith.constant 0 : index
    %8 = vector.load %arg6[%c0_7, %c0_8, %c0_9] : memref<1x8x1xf32, #tpu.memory_space<vmem>>, vector<1x8x1xf32>
    %9 = vector.shape_cast %8 : vector<1x8x1xf32> to vector<8x1xf32>
    %10 = vector.broadcast %7 : vector<1x16xf32> to vector<8x16xf32>
    %11 = vector.broadcast %9 : vector<8x1xf32> to vector<8x16xf32>
    %12 = arith.addf %10, %11 : vector<8x16xf32>
    %cst_10 = arith.constant 2.000000e+00 : f32
    %13 = vector.broadcast %cst_10 : f32 to vector<8x16xf32>
    %14 = arith.mulf %13, %6 : vector<8x16xf32>
    %15 = arith.subf %12, %14 : vector<8x16xf32>
    %cst_11 = arith.constant -5.000000e-01 : f32
    %16 = vector.broadcast %cst_11 : f32 to vector<8x16xf32>
    %17 = arith.mulf %16, %15 : vector<8x16xf32>
    %cst_12 = arith.constant 14.7030163 : f32
    %18 = vector.broadcast %cst_12 : f32 to vector<8x16xf32>
    %19 = arith.subf %17, %18 : vector<8x16xf32>
    %c8_i32 = arith.constant 8 : i32
    %20 = arith.muli %arg2, %c8_i32 : i32
    %21 = tpu.iota {dimensions = array<i32: 0>} : vector<8x16xi32>
    %22 = vector.broadcast %20 : i32 to vector<8x16xi32>
    %23 = arith.addi %22, %21 : vector<8x16xi32>
    %24 = arith.index_cast %arg0 : i32 to index
    %25 = memref.load %arg3[%24] : memref<2xi32, #tpu.memory_space<smem>>
    %26 = vector.broadcast %25 : i32 to vector<8x16xi32>
    %27 = arith.cmpi slt, %23, %26 : vector<8x16xi32>
    %cst_13 = arith.constant -1.000000e+30 : f32
    %28 = vector.broadcast %cst_13 : f32 to vector<8x16xf32>
    %29 = arith.select %27, %19, %28 : vector<8x16xi1>, vector<8x16xf32>
    %c0_14 = arith.constant 0 : index
    %c0_15 = arith.constant 0 : index
    %30 = vector.load %arg12[%c0_14, %c0_15] : memref<1x16xf32, #tpu.memory_space<vmem>>, vector<1x16xf32>
    %cst_16 = arith.constant dense<0xFF800000> : vector<16xf32>
    %31 = vector.multi_reduction <maximumf>, %29, %cst_16 [0] : vector<8x16xf32> to vector<16xf32>
    %32 = vector.shape_cast %31 : vector<16xf32> to vector<1x16xf32>
    %33 = arith.maximumf %30, %32 : vector<1x16xf32>
    %c0_17 = arith.constant 0 : index
    %c0_18 = arith.constant 0 : index
    %34 = vector.load %arg13[%c0_17, %c0_18] : memref<1x16xf32, #tpu.memory_space<vmem>>, vector<1x16xf32>
    %35 = arith.subf %30, %33 : vector<1x16xf32>
    %36 = math.exp %35 : vector<1x16xf32>
    %37 = arith.mulf %34, %36 : vector<1x16xf32>
    %38 = vector.broadcast %33 : vector<1x16xf32> to vector<8x16xf32>
    %39 = arith.subf %29, %38 : vector<8x16xf32>
    %40 = math.exp %39 : vector<8x16xf32>
    %cst_19 = arith.constant dense<0.000000e+00> : vector<16xf32>
    %41 = vector.multi_reduction <add>, %40, %cst_19 [0] : vector<8x16xf32> to vector<16xf32>
    %42 = vector.shape_cast %41 : vector<16xf32> to vector<1x16xf32>
    %43 = arith.addf %37, %42 : vector<1x16xf32>
    %c0_20 = arith.constant 0 : index
    %c0_21 = arith.constant 0 : index
    %44 = vector.load %arg13[%c0_20, %c0_21] : memref<1x16xf32, #tpu.memory_space<vmem>>, vector<1x16xf32>
    tpu.vector_store %arg13[%c0_20, %c0_21], %43 {strides = array<i32>} : memref<1x16xf32, #tpu.memory_space<vmem>>, vector<1x16xf32>,
    %c0_22 = arith.constant 0 : index
    %c0_23 = arith.constant 0 : index
    %45 = vector.load %arg12[%c0_22, %c0_23] : memref<1x16xf32, #tpu.memory_space<vmem>>, vector<1x16xf32>
    tpu.vector_store %arg12[%c0_22, %c0_23], %33 {strides = array<i32>} : memref<1x16xf32, #tpu.memory_space<vmem>>, vector<1x16xf32>,
    %c0_i32_24 = arith.constant 0 : i32
    %46 = arith.cmpi eq, %arg2, %c0_i32_24 : i32
    %47 = arith.extui %46 : i1 to i32
    %c0_i32_25 = arith.constant 0 : i32
    %48 = arith.cmpi ne, %47, %c0_i32_25 : i32
    scf.if %48 {
      %c0_26 = arith.constant 0 : index
      %c0_27 = arith.constant 0 : index
      %49 = vector.load %arg12[%c0_26, %c0_27] : memref<1x16xf32, #tpu.memory_space<vmem>>, vector<1x16xf32>
      %c0_28 = arith.constant 0 : index
      %c0_29 = arith.constant 0 : index
      %50 = vector.load %arg13[%c0_28, %c0_29] : memref<1x16xf32, #tpu.memory_space<vmem>>, vector<1x16xf32>
      %51 = math.log %50 : vector<1x16xf32>
      %52 = arith.addf %49, %51 : vector<1x16xf32>
      %c0_30 = arith.constant 0 : index
      %c0_31 = arith.constant 0 : index
      %c0_32 = arith.constant 0 : index
      %c0_33 = arith.constant 0 : index
      %53 = vector.load %arg9[%c0_30, %c0_31, %c0_32, %c0_33] : memref<1x1x1x16xf32, #tpu.memory_space<vmem>>, vector<1x1x1x16xf32>
      %54 = vector.shape_cast %53 : vector<1x1x1x16xf32> to vector<1x16xf32>
      %55 = vector.shape_cast %52 : vector<1x16xf32> to vector<1x1x1x16xf32>
      tpu.vector_store %arg9[%c0_30, %c0_31, %c0_32, %c0_33], %55 {strides = array<i32>} : memref<1x1x1x16xf32, #tpu.memory_space<vmem>>, vector<1x1x1x16xf32>,
    } else {
    }
    return
  }
  func.func @transform_0(%arg0: i32, %arg1: i32, %arg2: i32, %arg3: memref<2xi32, #tpu.memory_space<smem>>) -> (i32, i32, i32) {
    %c0_i32 = arith.constant 0 : i32
    %c0_i32_0 = arith.constant 0 : i32
    return %arg0, %c0_i32, %arg1 : i32, i32, i32
  }
  func.func @transform_1(%arg0: i32, %arg1: i32, %arg2: i32, %arg3: memref<2xi32, #tpu.memory_space<smem>>) -> (i32, i32, i32) {
    %c0_i32 = arith.constant 0 : i32
    %c0_i32_0 = arith.constant 0 : i32
    return %arg0, %arg2, %c0_i32 : i32, i32, i32
  }
  func.func @transform_2(%arg0: i32, %arg1: i32, %arg2: i32, %arg3: memref<2xi32, #tpu.memory_space<smem>>) -> (i32, i32, i32) {
    %c0_i32 = arith.constant 0 : i32
    %c0_i32_0 = arith.constant 0 : i32
    return %arg0, %arg2, %c0_i32 : i32, i32, i32
  }
  func.func @transform_3(%arg0: i32, %arg1: i32, %arg2: i32, %arg3: memref<2xi32, #tpu.memory_space<smem>>) -> (i32, i32) {
    %c0_i32 = arith.constant 0 : i32
    %c0_i32_0 = arith.constant 0 : i32
    %c0_i32_1 = arith.constant 0 : i32
    return %c0_i32, %c0_i32_0 : i32, i32
  }
  func.func @transform_4(%arg0: i32, %arg1: i32, %arg2: i32, %arg3: memref<2xi32, #tpu.memory_space<smem>>) -> (i32, i32) {
    %c0_i32 = arith.constant 0 : i32
    %c0_i32_0 = arith.constant 0 : i32
    %c0_i32_1 = arith.constant 0 : i32
    return %c0_i32, %c0_i32_0 : i32, i32
  }
  func.func @transform_5(%arg0: i32, %arg1: i32, %arg2: i32, %arg3: memref<2xi32, #tpu.memory_space<smem>>) -> (i32, i32, i32, i32) {
    %c0_i32 = arith.constant 0 : i32
    %c0_i32_0 = arith.constant 0 : i32
    %c0_i32_1 = arith.constant 0 : i32
    return %arg0, %arg1, %c0_i32, %c0_i32_0 : i32, i32, i32, i32
  }
}

</mosaic_0001>

<llo_original>
// kernel: overflow_forward.8
$region0: #{overflow_forward.8}
  #allocation0 [shape = 'u32[]', space=smem, size = 0x4, offset = 0x4, fixed_abs, tag = 'smem constant byte address 0x4 - core index']
  #allocation1 [shape = 'u32[144,128]{1,0:T(1,128)}', space=vmem, size = 0x12000, scoped, tag = 'internal scratch']
  #allocation2 [shape = 'f32[16,128]{1,0:T(8,128)}', space=vmem, size = 0x2000, scoped, tag = 'scratch operand']
  %s0 = inlined_call_operand.vmem [shape: bf16[16,128], index: 0, kind: input, shape index: {}]
  %s1 = inlined_call_operand.vmem [shape: bf16[128,128], index: 1, kind: input, shape index: {}]
  %s2 = inlined_call_operand.vmem [shape: f32[1,128], index: 2, kind: input, shape index: {}]
  %s3 = inlined_call_operand.vmem [shape: bf16[16,128], index: 3, kind: output, shape index: {}]
  %s4 = sld [smem:[#allocation0]]
  $region30: #{overflow_forward.8} parent=0
    _
  %s6 = ssub.s32 1, %s4
  %s7 = scalar_select 0, %s6, %s4
  // Predicated region
  $region2: #{overflow_forward.8} parent=0 // pred_check
    _
  $region3: #{overflow_forward.8} parent=0 // pred_check_branch
    %9 = sbr.rel (0) target = $region5
  $region4: #{overflow_forward.8} parent=0 // pred_region
    _
  $region5: #{overflow_forward.8} parent=0 // pred_fallthru
    _
  // Predicated region
  $region6: #{overflow_forward.8} parent=0 // pred_check
    _
  $region7: #{overflow_forward.8} parent=0 // pred_check_branch
    %11 = sbr.rel (0) target = $region9
  $region8: #{overflow_forward.8} parent=0 // pred_region
    _
  $region9: #{overflow_forward.8} parent=0 // pred_fallthru
    _
  // Predicated region
  $region10: #{overflow_forward.8} parent=0 // pred_check
    _
  $region11: #{overflow_forward.8} parent=0 // pred_check_branch
    %13 = sbr.rel (0) target = $region13
  $region12: #{overflow_forward.8} parent=0 // pred_region
    _
  $region13: #{overflow_forward.8} parent=0 // pred_fallthru
    _
  %p15 = scmp.eq.s32.totalorder 0, 0
  // Predicated region
  $region14: #{overflow_forward.8} parent=0 // pred_check
    %p16 = pneg %p15
  $region15: #{overflow_forward.8} parent=0 // pred_check_branch
    %18 = sbr.rel (%p16) target = $region17
  $region16: #{overflow_forward.8} parent=0 // pred_region
    %19 = vst [vmem:[#allocation2] sm:$0xff] 0.0
    %20 = vst [vmem:[#allocation2 + $0x8] sm:$0xff] 0.0
  $region17: #{overflow_forward.8} parent=0 // pred_fallthru
    _
  %v21 = vld [vmem:[#allocation2] sm:$0xff]
  %v22 = vld [vmem:[#allocation2 + $0x8] sm:$0xff]
  %v23 = vld [vmem:[%s0] sm:$0xf]
  %v24 = vld [vmem:[%s0 + $0x4] sm:$0xf]
  %v25 = vld [vmem:[%s1] sm:$0xf]
  %v26 = vld [vmem:[%s1 + $0x4] sm:$0xf]
  %v27 = vld [vmem:[%s1 + $0x8] sm:$0xf]
  %v28 = vld [vmem:[%s1 + $0xc] sm:$0xf]
  %v29 = vld [vmem:[%s1 + $0x10] sm:$0xf]
  %v30 = vld [vmem:[%s1 + $0x14] sm:$0xf]
  %v31 = vld [vmem:[%s1 + $0x18] sm:$0xf]
  %v32 = vld [vmem:[%s1 + $0x1c] sm:$0xf]
  %v33 = vld [vmem:[%s1 + $0x20] sm:$0xf]
  %v34 = vld [vmem:[%s1 + $0x24] sm:$0xf]
  %v35 = vld [vmem:[%s1 + $0x28] sm:$0xf]
  %v36 = vld [vmem:[%s1 + $0x2c] sm:$0xf]
  %v37 = vld [vmem:[%s1 + $0x30] sm:$0xf]
  %v38 = vld [vmem:[%s1 + $0x34] sm:$0xf]
  %v39 = vld [vmem:[%s1 + $0x38] sm:$0xf]
  %v40 = vld [vmem:[%s1 + $0x3c] sm:$0xf]
  %v43 = vunpack.c.l.b16 %v23
  %v44 = vunpack.c.l.b16 %v24
  %v45 = vpack.c.b16 %v44, %v43
  %v63 = vunpack.c.l.b16 %v25
  %v64 = vunpack.c.l.b16 %v26
  %v65 = vunpack.c.l.b16 %v27
  %v66 = vunpack.c.l.b16 %v28
  %v67 = vunpack.c.l.b16 %v29
  %v68 = vunpack.c.l.b16 %v30
  %v69 = vunpack.c.l.b16 %v31
  %v70 = vunpack.c.l.b16 %v32
  %v71 = vunpack.c.l.b16 %v33
  %v72 = vunpack.c.l.b16 %v34
  %v73 = vunpack.c.l.b16 %v35
  %v74 = vunpack.c.l.b16 %v36
  %v75 = vunpack.c.l.b16 %v37
  %v76 = vunpack.c.l.b16 %v38
  %v77 = vunpack.c.l.b16 %v39
  %v78 = vunpack.c.l.b16 %v40
  %v79 = vpack.c.b16 %v64, %v63
  %v80 = vpack.c.b16 %v66, %v65
  %v81 = vpack.c.b16 %v68, %v67
  %v82 = vpack.c.b16 %v70, %v69
  %v83 = vpack.c.b16 %v72, %v71
  %v84 = vpack.c.b16 %v74, %v73
  %v85 = vpack.c.b16 %v76, %v75
  %v86 = vpack.c.b16 %v78, %v77
  %95 = vmatprep.subr.bf16.mxu0 0
  %96 = vmatpush1.bf16.msra.mxu0 %v86
  %97 = vmatprep.subr.bf16.mxu0 0
  %98 = vmatpush1.bf16.msra.mxu0 %v85
  %99 = vmatprep.subr.bf16.mxu0 0
  %100 = vmatpush1.bf16.msra.mxu0 %v84
  %101 = vmatprep.subr.bf16.mxu0 0
  %102 = vmatpush1.bf16.msra.mxu0 %v83
  %103 = vmatprep.subr.bf16.mxu0 0
  %104 = vmatpush1.bf16.msra.mxu0 %v82
  %105 = vmatprep.subr.bf16.mxu0 0
  %106 = vmatpush1.bf16.msra.mxu0 %v81
  %107 = vmatprep.subr.bf16.mxu0 0
  %108 = vmatpush1.bf16.msra.mxu0 %v80
  %109 = vmatprep.subr.bf16.mxu0 0
  %110 = vmatpush1.bf16.msra.mxu0 %v79
  %111 = vmatprep.subr.bf16.mxu0 0
  %112 = vmatpush2.bf16.msra.mxu0 0
  %113 = vmatprep.subr.bf16.mxu0 0
  %114 = vmatpush2.bf16.msra.mxu0 0
  %115 = vmatprep.subr.bf16.mxu0 0
  %116 = vmatpush2.bf16.msra.mxu0 0
  %117 = vmatprep.subr.bf16.mxu0 0
  %118 = vmatpush2.bf16.msra.mxu0 0
  %119 = vmatprep.subr.bf16.mxu0 0
  %120 = vmatpush2.bf16.msra.mxu0 0
  %121 = vmatprep.subr.bf16.mxu0 0
  %122 = vmatpush2.bf16.msra.mxu0 0
  %123 = vmatprep.subr.bf16.mxu0 0
  %124 = vmatpush2.bf16.msra.mxu0 0
  %125 = vmatprep.subr.bf16.mxu0 0
  %126 = vmatpush2.bf16.msra.mxu0 0
  %127 = vmatprep.mubr.bf16.mxu0 0
  %128 = vmatmul.mubr.bf16.gmra.mxu0 %v45
  %v129 = vpop.f32.mrf.mxu0
  %v130 = vadd.f32 0.0, %v129
  %v131 = vpop.f32.mrf.mxu0
  %v132 = vpop.f32.mrf.mxu0
  %v133 = vadd.f32 0.0, %v132
  %v134 = vpop.f32.mrf.mxu0
  %135 = vdwg.mxu0
  %v136 = vadd.f32 %v21, %v130
  %v137 = vadd.f32 %v22, %v133
  %138 = vst [vmem:[#allocation2] sm:$0xff] %v136
  %139 = vst [vmem:[#allocation2 + $0x8] sm:$0xff] %v137
  // Predicated region
  $region18: #{overflow_forward.8} parent=0 // pred_check
    %p140 = pneg %p15
  $region19: #{overflow_forward.8} parent=0 // pred_check_branch
    %142 = sbr.rel (%p140) target = $region21
  $region20: #{overflow_forward.8} parent=0 // pred_region
    %v143 = vld [vmem:[#allocation2] sm:$0xff]
    %v144 = vld [vmem:[#allocation2 + $0x8] sm:$0xff]
    %v145 = vld [vmem:[%s2] sm:$0x1]
    %v147 = vlaneseq
    %v148 = vshrl.u32 %v147, 7
    %v149 = vsub.s32 0, %v148
    %v150 = vrot.slane %v145, %v149
    %v152 = vadd.f32 %v143, %v150
    %v153 = vadd.f32 %v144, %v150
    %v154 = vpack.c.bf16 %v153, %v152
    %v156 = vunpack.c.l.b16 %v154
    %v157 = vunpack.c.h.b16 %v154
    %v158 = vpack.c.b16 %v156, %v156
    %v159 = vpack.c.b16 %v157, %v157
    %162 = vst [vmem:[%s3] sm:$0xf] %v158
    %163 = vst [vmem:[%s3 + $0x4] sm:$0xf] %v159
  $region21: #{overflow_forward.8} parent=0 // pred_fallthru
    _
  // Predicated region
  $region22: #{overflow_forward.8} parent=0 // pred_check
    _
  $region23: #{overflow_forward.8} parent=0 // pred_check_branch
    %165 = sbr.rel (0) target = $region25
  $region24: #{overflow_forward.8} parent=0 // pred_region
    _
  $region25: #{overflow_forward.8} parent=0 // pred_fallthru
    _
  // Predicated region
  $region26: #{overflow_forward.8} parent=0 // pred_check
    _
  $region27: #{overflow_forward.8} parent=0 // pred_check_branch
    %167 = sbr.rel (0) target = $region29
  $region28: #{overflow_forward.8} parent=0 // pred_region
    _
  $region29: #{overflow_forward.8} parent=0 // pred_fallthru
    _

// kernel: overflow_forward.12
$region0: #{overflow_forward.12}
  #allocation0 [shape = 'u32[]', space=smem, size = 0x4, offset = 0x4, fixed_abs, tag = 'smem constant byte address 0x4 - core index']
  #allocation1 [shape = 'u32[144,128]{1,0:T(1,128)}', space=vmem, size = 0x12000, scoped, tag = 'internal scratch']
  %s0 = inlined_call_operand.vmem [shape: bf16[2,8,128], index: 0, kind: input, shape index: {}]
  %s1 = inlined_call_operand.vmem [shape: f32[1,128], index: 1, kind: input, shape index: {}]
  %s2 = inlined_call_operand.vmem [shape: f32[1,128], index: 2, kind: input, shape index: {}]
  %s3 = inlined_call_operand.vmem [shape: bf16[2,8,128], index: 3, kind: output, shape index: {}]
  %s4 = sld [smem:[#allocation0]]
  $region45: #{overflow_forward.12} parent=0
    _
  %s6 = ssub.s32 1, %s4
  %s7 = scalar_select 0, %s6, %s4
  loop: start=0, step=1, limit=4
  $region2: #{overflow_forward.12} parent=0 // loop_pre_header
    _
  $region3: #{overflow_forward.12} parent=0 // loop_header
    %s9 = sphi 0, %s13
    %p10 = scmp.ge.s32.totalorder %s9, 4
    %s16 = sphi 0, %s28
    %s17 = sphi 0, %s24
    %s18 = sphi 0, %s16
    %s19 = sphi 0, %s17
    %s20 = sphi 0, %s18
    %s21 = sphi 0, %s19
    %s33 = sphi 0, %s35
    %s36 = sphi 0, %s33
    %s37 = sphi 0, %s36
    %s53 = sphi 0, %s37
    %s57 = sphi 0, %s57
    %s59 = sphi 0, %s57
    %s60 = sphi 0, %s59
    %s74 = sphi 0, %s60
    %s78 = sphi 0, %s78
    %s80 = sphi 0, %s78
    %s81 = sphi 0, %s80
    %s95 = sphi 0, %s81
    %s103 = sphi 0, %s105
    %s106 = sphi 0, %s103
    %s107 = sphi 0, %s106
    %s123 = sphi 0, %s107
  $region4: #{overflow_forward.12} parent=0 // loop_header_branch
    %12 = sbr.rel (%p10) target = $region8
  $region5: #{overflow_forward.12} parent=0 // loop_body
    %s14 = ssub.s32 %s9, 1
    %s15 = ssub.s32 %s9, 2
    %s22 = sadd.s32 1, %s17
    %p23 = scmp.ge.s32.totalorder %s22, 1
    %s24 = scalar_select %p23, 0, %s22
    %s25 = sadd.s32 1, %s16
    %s26 = scalar_select %p23, %s25, %s16
    %p27 = scmp.ge.s32.totalorder %s26, 2
    %s28 = scalar_select %p27, 0, %s26
    %s29 = ssub.s32 %s16, %s28
    %s30 = ssub.s32 %s17, %s24
    %s31 = sor.u32 %s29, %s30
    %p32 = scmp.eq.s32.totalorder %s31, 0
    %s34 = sadd.s32 %s33, 1
    %s35 = scalar_select %p32, %s33, %s34
    %p38 = pneg %p32
    %p39 = scmp.eq.s32.totalorder %s9, 1
    %p40 = por %p38, %p39
    %p41 = scmp.ne.s32.totalorder %s33, %s36
    %p42 = scmp.eq.s32.totalorder %s9, 0
    %p43 = por %p41, %p42
    %p44 = scmp.ne.s32.totalorder %s33, %s36
    %p45 = scmp.eq.s32.totalorder %s14, 1
    %p46 = por %p44, %p45
    %p47 = scmp.ne.s32.totalorder %s36, %s37
    %p48 = scmp.eq.s32.totalorder %s14, 0
    %p49 = por %p47, %p48
    %p50 = scmp.ne.s32.totalorder %s36, %s37
    %p51 = scmp.eq.s32.totalorder %s15, 1
    %p52 = por %p50, %p51
    %p54 = scmp.ne.s32.totalorder %s37, %s53
    %p55 = scmp.eq.s32.totalorder %s15, 0
    %p56 = por %p54, %p55
    %s58 = sadd.s32 %s57, 1
    %p61 = scmp.eq.s32.totalorder %s9, 1
    %p62 = scmp.ne.s32.totalorder %s57, %s59
    %p63 = scmp.eq.s32.totalorder %s9, 0
    %p64 = por %p62, %p63
    %p65 = scmp.ne.s32.totalorder %s57, %s59
    %p66 = scmp.eq.s32.totalorder %s14, 1
    %p67 = por %p65, %p66
    %p68 = scmp.ne.s32.totalorder %s59, %s60
    %p69 = scmp.eq.s32.totalorder %s14, 0
    %p70 = por %p68, %p69
    %p71 = scmp.ne.s32.totalorder %s59, %s60
    %p72 = scmp.eq.s32.totalorder %s15, 1
    %p73 = por %p71, %p72
    %p75 = scmp.ne.s32.totalorder %s60, %s74
    %p76 = scmp.eq.s32.totalorder %s15, 0
    %p77 = por %p75, %p76
    %s79 = sadd.s32 %s78, 1
    %p82 = scmp.eq.s32.totalorder %s9, 1
    %p83 = scmp.ne.s32.totalorder %s78, %s80
    %p84 = scmp.eq.s32.totalorder %s9, 0
    %p85 = por %p83, %p84
    %p86 = scmp.ne.s32.totalorder %s78, %s80
    %p87 = scmp.eq.s32.totalorder %s14, 1
    %p88 = por %p86, %p87
    %p89 = scmp.ne.s32.totalorder %s80, %s81
    %p90 = scmp.eq.s32.totalorder %s14, 0
    %p91 = por %p89, %p90
    %p92 = scmp.ne.s32.totalorder %s80, %s81
    %p93 = scmp.eq.s32.totalorder %s15, 1
    %p94 = por %p92, %p93
    %p96 = scmp.ne.s32.totalorder %s81, %s95
    %p97 = scmp.eq.s32.totalorder %s15, 0
    %p98 = por %p96, %p97
    %s99 = ssub.s32 %s16, %s28
    %s100 = ssub.s32 %s17, %s24
    %s101 = sor.u32 %s99, %s100
    %p102 = scmp.eq.s32.totalorder %s101, 0
    %s104 = sadd.s32 %s103, 1
    %s105 = scalar_select %p102, %s103, %s104
    %p108 = pneg %p102
    %p109 = scmp.eq.s32.totalorder %s9, 1
    %p110 = por %p108, %p109
    %p111 = scmp.ne.s32.totalorder %s103, %s106
    %p112 = scmp.eq.s32.totalorder %s9, 0
    %p113 = por %p111, %p112
    %p114 = scmp.ne.s32.totalorder %s103, %s106
    %p115 = scmp.eq.s32.totalorder %s14, 1
    %p116 = por %p114, %p115
    %p117 = scmp.ne.s32.totalorder %s106, %s107
    %p118 = scmp.eq.s32.totalorder %s14, 0
    %p119 = por %p117, %p118
    %p120 = scmp.ne.s32.totalorder %s106, %s107
    %p121 = scmp.eq.s32.totalorder %s15, 1
    %p122 = por %p120, %p121
    %p124 = scmp.ne.s32.totalorder %s107, %s123
    %p125 = scmp.eq.s32.totalorder %s15, 0
    %p126 = por %p124, %p125
    %p127 = scmp.le.s32.totalorder 1, %s9
    %p128 = scmp.lt.s32.totalorder %s9, 3
    %p129 = pnand %p127, %p128
    %p130 = pneg %p129
    // Predicated region
    $region9: #{overflow_forward.12} parent=5 // pred_check
      _
    $region10: #{overflow_forward.12} parent=5 // pred_check_branch
      %132 = sbr.rel (%p129) target = $region12
    $region11: #{overflow_forward.12} parent=5 // pred_region
      %s133 = ssub.s32 %s9, 1
      // Predicated region
      $region13: #{overflow_forward.12} parent=11 // pred_check
        %p134 = pneg %p70
      $region14: #{overflow_forward.12} parent=11 // pred_check_branch
        %136 = sbr.rel (%p134) target = $region16
      $region15: #{overflow_forward.12} parent=11 // pred_region
        _
      $region16: #{overflow_forward.12} parent=11 // pred_fallthru
        _
      // Predicated region
      $region17: #{overflow_forward.12} parent=11 // pred_check
        %p137 = pneg %p91
      $region18: #{overflow_forward.12} parent=11 // pred_check_branch
        %139 = sbr.rel (%p137) target = $region20
      $region19: #{overflow_forward.12} parent=11 // pred_region
        _
      $region20: #{overflow_forward.12} parent=11 // pred_fallthru
        _
    $region12: #{overflow_forward.12} parent=5 // pred_fallthru
      _
    %p140 = scmp.lt.s32.totalorder %s9, 2
    // Predicated region
    $region21: #{overflow_forward.12} parent=5 // pred_check
      %p141 = pneg %p140
    $region22: #{overflow_forward.12} parent=5 // pred_check_branch
      %143 = sbr.rel (%p141) target = $region24
    $region23: #{overflow_forward.12} parent=5 // pred_region
      // Predicated region
      $region25: #{overflow_forward.12} parent=23 // pred_check
        %p144 = pneg %p43
      $region26: #{overflow_forward.12} parent=23 // pred_check_branch
        %146 = sbr.rel (%p144) target = $region28
      $region27: #{overflow_forward.12} parent=23 // pred_region
        %p147 = scmp.lt.s32.totalorder %s16, 1
        %s148 = scalar_select %p147, %s16, 1
        %p149 = scmp.lt.s32.totalorder %s17, 0
        %s150 = scalar_select %p149, %s17, 0
        %s151 = sadd.s32 %s150, %s148
        %s152 = smul.addr %s151, 4
        %s153 = scalar_lea.vmem %s0, %s152
      $region28: #{overflow_forward.12} parent=23 // pred_fallthru
        _
    $region24: #{overflow_forward.12} parent=5 // pred_fallthru
      _
    %p154 = scmp.le.s32.totalorder 1, %s9
    %p155 = scmp.lt.s32.totalorder %s9, 3
    %p156 = pnand %p154, %p155
    %p157 = pneg %p156
    // Predicated region
    $region29: #{overflow_forward.12} parent=5 // pred_check
      _
    $region30: #{overflow_forward.12} parent=5 // pred_check_branch
      %159 = sbr.rel (%p156) target = $region32
    $region31: #{overflow_forward.12} parent=5 // pred_region
      %s160 = ssub.s32 %s9, 1
      %p161 = scmp.lt.s32.totalorder %s18, 1
      %s162 = scalar_select %p161, %s18, 1
      %p163 = scmp.lt.s32.totalorder %s19, 0
      %s164 = scalar_select %p163, %s19, 0
      %s165 = sadd.s32 %s164, %s162
      %s166 = smul.addr %s165, 4
      %s167 = scalar_lea.vmem %s0, %s166
      %p168 = pneg %p49
      %p169 = pneg %p46
      %p170 = pneg %p70
      %p171 = pneg %p67
      %p172 = pneg %p91
      %p173 = pneg %p88
      %p174 = pneg %p119
      %p175 = pneg %p116
      %p176 = scmp.lt.s32.totalorder %s18, 1
      %s177 = scalar_select %p176, %s18, 1
      %p178 = scmp.lt.s32.totalorder %s19, 0
      %s179 = scalar_select %p178, %s19, 0
      %s180 = sadd.s32 %s179, %s177
      %s181 = smul.addr %s180, 4
      %s182 = scalar_lea.vmem %s3, %s181
      %p183 = scmp.lt.s32.totalorder %s18, 1
      %s184 = scalar_select %p183, %s18, 1
      %p185 = scmp.lt.s32.totalorder %s19, 0
      %s186 = scalar_select %p185, %s19, 0
      %s187 = sadd.s32 %s186, %s184
      %s188 = smul.addr %s187, 4
      %s189 = scalar_lea.vmem %s0, %s188
      %p190 = scmp.lt.s32.totalorder %s18, 1
      %s191 = scalar_select %p190, %s18, 1
      %p192 = scmp.lt.s32.totalorder %s19, 0
      %s193 = scalar_select %p192, %s19, 0
      %s194 = sadd.s32 %s193, %s191
      %s195 = smul.addr %s194, 4
      %s196 = scalar_lea.vmem %s3, %s195
      %v197 = vld [vmem:[%s189] sm:$0xf]
      %v198 = vunpack.c.l.bf16 %v197
      %v199 = vld [vmem:[%s1] sm:$0x1]
      %v201 = vlaneseq
      %v202 = vshrl.u32 %v201, 7
      %v203 = vsub.s32 0, %v202
      %v204 = vrot.slane %v199, %v203
      %v206 = vmul.f32 %v198, %v204
      %v207 = vld [vmem:[%s2] sm:$0x1]
      %v209 = vlaneseq
      %v210 = vshrl.u32 %v209, 7
      %v211 = vsub.s32 0, %v210
      %v212 = vrot.slane %v207, %v211
      %v214 = vadd.f32 %v206, %v212
      %v215 = vmax.f32 %v214, 0.0
      %v216 = vpack.c.bf16 %v215, %v215
      %217 = vst [vmem:[%s196] sm:$0xf] %v216
      %p218 = scmp.lt.s32.totalorder %s18, 1
      %s219 = scalar_select %p218, %s18, 1
      %p220 = scmp.lt.s32.totalorder %s19, 0
      %s221 = scalar_select %p220, %s19, 0
      %s222 = sadd.s32 %s221, %s219
      %s223 = smul.addr %s222, 4
      %s224 = scalar_lea.vmem %s3, %s223
      // Predicated region
      $region33: #{overflow_forward.12} parent=31 // pred_check
        %p225 = pneg %p116
      $region34: #{overflow_forward.12} parent=31 // pred_check_branch
        %227 = sbr.rel (%p225) target = $region36
      $region35: #{overflow_forward.12} parent=31 // pred_region
        _
      $region36: #{overflow_forward.12} parent=31 // pred_fallthru
        _
    $region32: #{overflow_forward.12} parent=5 // pred_fallthru
      _
    %p228 = scmp.le.s32.totalorder 2, %s9
    // Predicated region
    $region37: #{overflow_forward.12} parent=5 // pred_check
      %p229 = pneg %p228
    $region38: #{overflow_forward.12} parent=5 // pred_check_branch
      %231 = sbr.rel (%p229) target = $region40
    $region39: #{overflow_forward.12} parent=5 // pred_region
      %s232 = ssub.s32 %s9, 2
      // Predicated region
      $region41: #{overflow_forward.12} parent=39 // pred_check
        %p233 = pneg %p122
      $region42: #{overflow_forward.12} parent=39 // pred_check_branch
        %235 = sbr.rel (%p233) target = $region44
      $region43: #{overflow_forward.12} parent=39 // pred_region
        %p236 = scmp.lt.s32.totalorder %s20, 1
        %s237 = scalar_select %p236, %s20, 1
        %p238 = scmp.lt.s32.totalorder %s21, 0
        %s239 = scalar_select %p238, %s21, 0
        %s240 = sadd.s32 %s239, %s237
        %s241 = smul.addr %s240, 4
        %s242 = scalar_lea.vmem %s3, %s241
      $region44: #{overflow_forward.12} parent=39 // pred_fallthru
        _
    $region40: #{overflow_forward.12} parent=5 // pred_fallthru
      _
  $region6: #{overflow_forward.12} parent=0 // loop_footer
    %s13 = sadd.s32 1, %s9
  $region7: #{overflow_forward.12} parent=0 // loop_footer_branch
    %8 = sbr.rel target = $region3
  $region8: #{overflow_forward.12} parent=0 // loop_exit
    _

// kernel: overflow_forward.9
$region0: #{overflow_forward.9}
  #allocation0 [shape = 'u32[]', space=smem, size = 0x4, offset = 0x4, fixed_abs, tag = 'smem constant byte address 0x4 - core index']
  #allocation1 [shape = 'u32[144,128]{1,0:T(1,128)}', space=vmem, size = 0x12000, scoped, tag = 'internal scratch']
  %s0 = inlined_call_operand.vmem [shape: bf16[2,8,128], index: 0, kind: input, shape index: {}, may-alias: {0,1,2}]
  %s1 = inlined_call_operand.vmem [shape: bf16[2,8,128], index: 1, kind: input, shape index: {}, may-alias: {0,1,2}]
  %s2 = inlined_call_operand.vmem [shape: bf16[2,8,128], index: 2, kind: input, shape index: {}, may-alias: {0,1,2}]
  %s3 = inlined_call_operand.vmem [shape: bf16[5,128,128], index: 3, kind: input, shape index: {}]
  %s4 = inlined_call_operand.vmem [shape: f32[1,128], index: 4, kind: input, shape index: {}]
  %s5 = inlined_call_operand.vmem [shape: f32[1,128], index: 5, kind: input, shape index: {}]
  %s6 = inlined_call_operand.vmem [shape: f32[1,128], index: 6, kind: input, shape index: {}]
  %s7 = inlined_call_operand.vmem [shape: bf16[2,8,128], index: 7, kind: output, shape index: {0}]
  %s8 = inlined_call_operand.vmem [shape: f32[2,1,2,128], index: 8, kind: output, shape index: {1}]
  %9 = xla_tuple %s7, %s8
  %s10 = sld [smem:[#allocation0]]
  $region69: #{overflow_forward.9} parent=0
    _
  %s12 = ssub.s32 1, %s10
  %s13 = scalar_select 0, %s12, %s10
  loop: start=0, step=1, limit=4
  $region2: #{overflow_forward.9} parent=0 // loop_pre_header
    _
  $region3: #{overflow_forward.9} parent=0 // loop_header
    %s15 = sphi 0, %s19
    %p16 = scmp.ge.s32.totalorder %s15, 4
    %s22 = sphi 0, %s34
    %s23 = sphi 0, %s30
    %s24 = sphi 0, %s22
    %s25 = sphi 0, %s23
    %s26 = sphi 0, %s24
    %s27 = sphi 0, %s25
    %s39 = sphi 0, %s41
    %s42 = sphi 0, %s39
    %s43 = sphi 0, %s42
    %s59 = sphi 0, %s43
    %s73 = sphi 0, %s75
    %s76 = sphi 0, %s73
    %s77 = sphi 0, %s76
    %s93 = sphi 0, %s77
    %s107 = sphi 0, %s109
    %s110 = sphi 0, %s107
    %s111 = sphi 0, %s110
    %s127 = sphi 0, %s111
    %s131 = sphi 0, %s131
    %s133 = sphi 0, %s131
    %s134 = sphi 0, %s133
    %s148 = sphi 0, %s134
    %s152 = sphi 0, %s152
    %s154 = sphi 0, %s152
    %s155 = sphi 0, %s154
    %s169 = sphi 0, %s155
    %s173 = sphi 0, %s173
    %s175 = sphi 0, %s173
    %s176 = sphi 0, %s175
    %s190 = sphi 0, %s176
    %s194 = sphi 0, %s194
    %s196 = sphi 0, %s194
    %s197 = sphi 0, %s196
    %s211 = sphi 0, %s197
    %s219 = sphi 0, %s221
    %s222 = sphi 0, %s219
    %s223 = sphi 0, %s222
    %s239 = sphi 0, %s223
    %s247 = sphi 0, %s249
    %s250 = sphi 0, %s247
    %s251 = sphi 0, %s250
    %s267 = sphi 0, %s251
  $region4: #{overflow_forward.9} parent=0 // loop_header_branch
    %18 = sbr.rel (%p16) target = $region8
  $region5: #{overflow_forward.9} parent=0 // loop_body
    %s20 = ssub.s32 %s15, 1
    %s21 = ssub.s32 %s15, 2
    %s28 = sadd.s32 1, %s23
    %p29 = scmp.ge.s32.totalorder %s28, 1
    %s30 = scalar_select %p29, 0, %s28
    %s31 = sadd.s32 1, %s22
    %s32 = scalar_select %p29, %s31, %s22
    %p33 = scmp.ge.s32.totalorder %s32, 2
    %s34 = scalar_select %p33, 0, %s32
    %s35 = ssub.s32 %s22, %s34
    %s36 = ssub.s32 %s23, %s30
    %s37 = sor.u32 %s35, %s36
    %p38 = scmp.eq.s32.totalorder %s37, 0
    %s40 = sadd.s32 %s39, 1
    %s41 = scalar_select %p38, %s39, %s40
    %p44 = pneg %p38
    %p45 = scmp.eq.s32.totalorder %s15, 1
    %p46 = por %p44, %p45
    %p47 = scmp.ne.s32.totalorder %s39, %s42
    %p48 = scmp.eq.s32.totalorder %s15, 0
    %p49 = por %p47, %p48
    %p50 = scmp.ne.s32.totalorder %s39, %s42
    %p51 = scmp.eq.s32.totalorder %s20, 1
    %p52 = por %p50, %p51
    %p53 = scmp.ne.s32.totalorder %s42, %s43
    %p54 = scmp.eq.s32.totalorder %s20, 0
    %p55 = por %p53, %p54
    %p56 = scmp.ne.s32.totalorder %s42, %s43
    %p57 = scmp.eq.s32.totalorder %s21, 1
    %p58 = por %p56, %p57
    %p60 = scmp.ne.s32.totalorder %s43, %s59
    %p61 = scmp.eq.s32.totalorder %s21, 0
    %p62 = por %p60, %p61
    %s63 = ssub.s32 %s23, 1
    %p64 = scmp.gt.s32.totalorder %s63, 0
    %s65 = scalar_select %p64, %s63, 0
    %s66 = ssub.s32 %s30, 1
    %p67 = scmp.gt.s32.totalorder %s66, 0
    %s68 = scalar_select %p67, %s66, 0
    %s69 = ssub.s32 %s22, %s34
    %s70 = ssub.s32 %s65, %s68
    %s71 = sor.u32 %s69, %s70
    %p72 = scmp.eq.s32.totalorder %s71, 0
    %s74 = sadd.s32 %s73, 1
    %s75 = scalar_select %p72, %s73, %s74
    %p78 = pneg %p72
    %p79 = scmp.eq.s32.totalorder %s15, 1
    %p80 = por %p78, %p79
    %p81 = scmp.ne.s32.totalorder %s73, %s76
    %p82 = scmp.eq.s32.totalorder %s15, 0
    %p83 = por %p81, %p82
    %p84 = scmp.ne.s32.totalorder %s73, %s76
    %p85 = scmp.eq.s32.totalorder %s20, 1
    %p86 = por %p84, %p85
    %p87 = scmp.ne.s32.totalorder %s76, %s77
    %p88 = scmp.eq.s32.totalorder %s20, 0
    %p89 = por %p87, %p88
    %p90 = scmp.ne.s32.totalorder %s76, %s77
    %p91 = scmp.eq.s32.totalorder %s21, 1
    %p92 = por %p90, %p91
    %p94 = scmp.ne.s32.totalorder %s77, %s93
    %p95 = scmp.eq.s32.totalorder %s21, 0
    %p96 = por %p94, %p95
    %s97 = sadd.s32 %s23, 1
    %p98 = scmp.lt.s32.totalorder %s97, 0
    %s99 = scalar_select %p98, %s97, 0
    %s100 = sadd.s32 %s30, 1
    %p101 = scmp.lt.s32.totalorder %s100, 0
    %s102 = scalar_select %p101, %s100, 0
    %s103 = ssub.s32 %s22, %s34
    %s104 = ssub.s32 %s99, %s102
    %s105 = sor.u32 %s103, %s104
    %p106 = scmp.eq.s32.totalorder %s105, 0
    %s108 = sadd.s32 %s107, 1
    %s109 = scalar_select %p106, %s107, %s108
    %p112 = pneg %p106
    %p113 = scmp.eq.s32.totalorder %s15, 1
    %p114 = por %p112, %p113
    %p115 = scmp.ne.s32.totalorder %s107, %s110
    %p116 = scmp.eq.s32.totalorder %s15, 0
    %p117 = por %p115, %p116
    %p118 = scmp.ne.s32.totalorder %s107, %s110
    %p119 = scmp.eq.s32.totalorder %s20, 1
    %p120 = por %p118, %p119
    %p121 = scmp.ne.s32.totalorder %s110, %s111
    %p122 = scmp.eq.s32.totalorder %s20, 0
    %p123 = por %p121, %p122
    %p124 = scmp.ne.s32.totalorder %s110, %s111
    %p125 = scmp.eq.s32.totalorder %s21, 1
    %p126 = por %p124, %p125
    %p128 = scmp.ne.s32.totalorder %s111, %s127
    %p129 = scmp.eq.s32.totalorder %s21, 0
    %p130 = por %p128, %p129
    %s132 = sadd.s32 %s131, 1
    %p135 = scmp.eq.s32.totalorder %s15, 1
    %p136 = scmp.ne.s32.totalorder %s131, %s133
    %p137 = scmp.eq.s32.totalorder %s15, 0
    %p138 = por %p136, %p137
    %p139 = scmp.ne.s32.totalorder %s131, %s133
    %p140 = scmp.eq.s32.totalorder %s20, 1
    %p141 = por %p139, %p140
    %p142 = scmp.ne.s32.totalorder %s133, %s134
    %p143 = scmp.eq.s32.totalorder %s20, 0
    %p144 = por %p142, %p143
    %p145 = scmp.ne.s32.totalorder %s133, %s134
    %p146 = scmp.eq.s32.totalorder %s21, 1
    %p147 = por %p145, %p146
    %p149 = scmp.ne.s32.totalorder %s134, %s148
    %p150 = scmp.eq.s32.totalorder %s21, 0
    %p151 = por %p149, %p150
    %s153 = sadd.s32 %s152, 1
    %p156 = scmp.eq.s32.totalorder %s15, 1
    %p157 = scmp.ne.s32.totalorder %s152, %s154
    %p158 = scmp.eq.s32.totalorder %s15, 0
    %p159 = por %p157, %p158
    %p160 = scmp.ne.s32.totalorder %s152, %s154
    %p161 = scmp.eq.s32.totalorder %s20, 1
    %p162 = por %p160, %p161
    %p163 = scmp.ne.s32.totalorder %s154, %s155
    %p164 = scmp.eq.s32.totalorder %s20, 0
    %p165 = por %p163, %p164
    %p166 = scmp.ne.s32.totalorder %s154, %s155
    %p167 = scmp.eq.s32.totalorder %s21, 1
    %p168 = por %p166, %p167
    %p170 = scmp.ne.s32.totalorder %s155, %s169
    %p171 = scmp.eq.s32.totalorder %s21, 0
    %p172 = por %p170, %p171
    %s174 = sadd.s32 %s173, 1
    %p177 = scmp.eq.s32.totalorder %s15, 1
    %p178 = scmp.ne.s32.totalorder %s173, %s175
    %p179 = scmp.eq.s32.totalorder %s15, 0
    %p180 = por %p178, %p179
    %p181 = scmp.ne.s32.totalorder %s173, %s175
    %p182 = scmp.eq.s32.totalorder %s20, 1
    %p183 = por %p181, %p182
    %p184 = scmp.ne.s32.totalorder %s175, %s176
    %p185 = scmp.eq.s32.totalorder %s20, 0
    %p186 = por %p184, %p185
    %p187 = scmp.ne.s32.totalorder %s175, %s176
    %p188 = scmp.eq.s32.totalorder %s21, 1
    %p189 = por %p187, %p188
    %p191 = scmp.ne.s32.totalorder %s176, %s190
    %p192 = scmp.eq.s32.totalorder %s21, 0
    %p193 = por %p191, %p192
    %s195 = sadd.s32 %s194, 1
    %p198 = scmp.eq.s32.totalorder %s15, 1
    %p199 = scmp.ne.s32.totalorder %s194, %s196
    %p200 = scmp.eq.s32.totalorder %s15, 0
    %p201 = por %p199, %p200
    %p202 = scmp.ne.s32.totalorder %s194, %s196
    %p203 = scmp.eq.s32.totalorder %s20, 1
    %p204 = por %p202, %p203
    %p205 = scmp.ne.s32.totalorder %s196, %s197
    %p206 = scmp.eq.s32.totalorder %s20, 0
    %p207 = por %p205, %p206
    %p208 = scmp.ne.s32.totalorder %s196, %s197
    %p209 = scmp.eq.s32.totalorder %s21, 1
    %p210 = por %p208, %p209
    %p212 = scmp.ne.s32.totalorder %s197, %s211
    %p213 = scmp.eq.s32.totalorder %s21, 0
    %p214 = por %p212, %p213
    %s215 = ssub.s32 %s22, %s34
    %s216 = ssub.s32 %s23, %s30
    %s217 = sor.u32 %s215, %s216
    %p218 = scmp.eq.s32.totalorder %s217, 0
    %s220 = sadd.s32 %s219, 1
    %s221 = scalar_select %p218, %s219, %s220
    %p224 = pneg %p218
    %p225 = scmp.eq.s32.totalorder %s15, 1
    %p226 = por %p224, %p225
    %p227 = scmp.ne.s32.totalorder %s219, %s222
    %p228 = scmp.eq.s32.totalorder %s15, 0
    %p229 = por %p227, %p228
    %p230 = scmp.ne.s32.totalorder %s219, %s222
    %p231 = scmp.eq.s32.totalorder %s20, 1
    %p232 = por %p230, %p231
    %p233 = scmp.ne.s32.totalorder %s222, %s223
    %p234 = scmp.eq.s32.totalorder %s20, 0
    %p235 = por %p233, %p234
    %p236 = scmp.ne.s32.totalorder %s222, %s223
    %p237 = scmp.eq.s32.totalorder %s21, 1
    %p238 = por %p236, %p237
    %p240 = scmp.ne.s32.totalorder %s223, %s239
    %p241 = scmp.eq.s32.totalorder %s21, 0
    %p242 = por %p240, %p241
    %s243 = ssub.s32 %s22, %s34
    %s244 = ssub.s32 %s23, %s30
    %s245 = sor.u32 %s243, %s244
    %p246 = scmp.eq.s32.totalorder %s245, 0
    %s248 = sadd.s32 %s247, 1
    %s249 = scalar_select %p246, %s247, %s248
    %p252 = pneg %p246
    %p253 = scmp.eq.s32.totalorder %s15, 1
    %p254 = por %p252, %p253
    %p255 = scmp.ne.s32.totalorder %s247, %s250
    %p256 = scmp.eq.s32.totalorder %s15, 0
    %p257 = por %p255, %p256
    %p258 = scmp.ne.s32.totalorder %s247, %s250
    %p259 = scmp.eq.s32.totalorder %s20, 1
    %p260 = por %p258, %p259
    %p261 = scmp.ne.s32.totalorder %s250, %s251
    %p262 = scmp.eq.s32.totalorder %s20, 0
    %p263 = por %p261, %p262
    %p264 = scmp.ne.s32.totalorder %s250, %s251
    %p265 = scmp.eq.s32.totalorder %s21, 1
    %p266 = por %p264, %p265
    %p268 = scmp.ne.s32.totalorder %s251, %s267
    %p269 = scmp.eq.s32.totalorder %s21, 0
    %p270 = por %p268, %p269
    %p271 = scmp.le.s32.totalorder 1, %s15
    %p272 = scmp.lt.s32.totalorder %s15, 3
    %p273 = pnand %p271, %p272
    %p274 = pneg %p273
    // Predicated region
    $region9: #{overflow_forward.9} parent=5 // pred_check
      _
    $region10: #{overflow_forward.9} parent=5 // pred_check_branch
      %276 = sbr.rel (%p273) target = $region12
    $region11: #{overflow_forward.9} parent=5 // pred_region
      %s277 = ssub.s32 %s15, 1
      // Predicated region
      $region13: #{overflow_forward.9} parent=11 // pred_check
        %p278 = pneg %p144
      $region14: #{overflow_forward.9} parent=11 // pred_check_branch
        %280 = sbr.rel (%p278) target = $region16
      $region15: #{overflow_forward.9} parent=11 // pred_region
        _
      $region16: #{overflow_forward.9} parent=11 // pred_fallthru
        _
      // Predicated region
      $region17: #{overflow_forward.9} parent=11 // pred_check
        %p281 = pneg %p165
      $region18: #{overflow_forward.9} parent=11 // pred_check_branch
        %283 = sbr.rel (%p281) target = $region20
      $region19: #{overflow_forward.9} parent=11 // pred_region
        _
      $region20: #{overflow_forward.9} parent=11 // pred_fallthru
        _
      // Predicated region
      $region21: #{overflow_forward.9} parent=11 // pred_check
        %p284 = pneg %p186
      $region22: #{overflow_forward.9} parent=11 // pred_check_branch
        %286 = sbr.rel (%p284) target = $region24
      $region23: #{overflow_forward.9} parent=11 // pred_region
        _
      $region24: #{overflow_forward.9} parent=11 // pred_fallthru
        _
      // Predicated region
      $region25: #{overflow_forward.9} parent=11 // pred_check
        %p287 = pneg %p207
      $region26: #{overflow_forward.9} parent=11 // pred_check_branch
        %289 = sbr.rel (%p287) target = $region28
      $region27: #{overflow_forward.9} parent=11 // pred_region
        _
      $region28: #{overflow_forward.9} parent=11 // pred_fallthru
        _
    $region12: #{overflow_forward.9} parent=5 // pred_fallthru
      _
    %p290 = scmp.lt.s32.totalorder %s15, 2
    // Predicated region
    $region29: #{overflow_forward.9} parent=5 // pred_check
      %p291 = pneg %p290
    $region30: #{overflow_forward.9} parent=5 // pred_check_branch
      %293 = sbr.rel (%p291) target = $region32
    $region31: #{overflow_forward.9} parent=5 // pred_region
      // Predicated region
      $region33: #{overflow_forward.9} parent=31 // pred_check
        %p294 = pneg %p49
      $region34: #{overflow_forward.9} parent=31 // pred_check_branch
        %296 = sbr.rel (%p294) target = $region36
      $region35: #{overflow_forward.9} parent=31 // pred_region
        %p297 = scmp.lt.s32.totalorder %s22, 1
        %s298 = scalar_select %p297, %s22, 1
        %p299 = scmp.lt.s32.totalorder %s23, 0
        %s300 = scalar_select %p299, %s23, 0
        %s301 = sadd.s32 %s300, %s298
        %s302 = smul.addr %s301, 4
        %s303 = scalar_lea.vmem %s0, %s302
      $region36: #{overflow_forward.9} parent=31 // pred_fallthru
        _
      // Predicated region
      $region37: #{overflow_forward.9} parent=31 // pred_check
        %p304 = pneg %p83
      $region38: #{overflow_forward.9} parent=31 // pred_check_branch
        %306 = sbr.rel (%p304) target = $region40
      $region39: #{overflow_forward.9} parent=31 // pred_region
        %s307 = ssub.s32 %s23, 1
        %p308 = scmp.gt.s32.totalorder %s307, 0
        %s309 = scalar_select %p308, %s307, 0
        %p310 = scmp.lt.s32.totalorder %s22, 1
        %s311 = scalar_select %p310, %s22, 1
        %p312 = scmp.lt.s32.totalorder %s309, 0
        %s313 = scalar_select %p312, %s309, 0
        %s314 = sadd.s32 %s313, %s311
        %s315 = smul.addr %s314, 4
        %s316 = scalar_lea.vmem %s1, %s315
        %s317 = ssub.s32 %s23, 1
        %p318 = scmp.gt.s32.totalorder %s317, 0
        %s319 = scalar_select %p318, %s317, 0
      $region40: #{overflow_forward.9} parent=31 // pred_fallthru
        _
      // Predicated region
      $region41: #{overflow_forward.9} parent=31 // pred_check
        %p320 = pneg %p117
      $region42: #{overflow_forward.9} parent=31 // pred_check_branch
        %322 = sbr.rel (%p320) target = $region44
      $region43: #{overflow_forward.9} parent=31 // pred_region
        %s323 = sadd.s32 %s23, 1
        %p324 = scmp.lt.s32.totalorder %s323, 0
        %s325 = scalar_select %p324, %s323, 0
        %p326 = scmp.lt.s32.totalorder %s22, 1
        %s327 = scalar_select %p326, %s22, 1
        %p328 = scmp.lt.s32.totalorder %s325, 0
        %s329 = scalar_select %p328, %s325, 0
        %s330 = sadd.s32 %s329, %s327
        %s331 = smul.addr %s330, 4
        %s332 = scalar_lea.vmem %s2, %s331
        %s333 = sadd.s32 %s23, 1
        %p334 = scmp.lt.s32.totalorder %s333, 0
        %s335 = scalar_select %p334, %s333, 0
      $region44: #{overflow_forward.9} parent=31 // pred_fallthru
        _
    $region32: #{overflow_forward.9} parent=5 // pred_fallthru
      _
    %p336 = scmp.le.s32.totalorder 1, %s15
    %p337 = scmp.lt.s32.totalorder %s15, 3
    %p338 = pnand %p336, %p337
    %p339 = pneg %p338
    // Predicated region
    $region45: #{overflow_forward.9} parent=5 // pred_check
      _
    $region46: #{overflow_forward.9} parent=5 // pred_check_branch
      %341 = sbr.rel (%p338) target = $region48
    $region47: #{overflow_forward.9} parent=5 // pred_region
      %s342 = ssub.s32 %s15, 1
      %p343 = scmp.lt.s32.totalorder %s24, 1
      %s344 = scalar_select %p343, %s24, 1
      %p345 = scmp.lt.s32.totalorder %s25, 0
      %s346 = scalar_select %p345, %s25, 0
      %s347 = sadd.s32 %s346, %s344
      %s348 = smul.addr %s347, 4
      %s349 = scalar_lea.vmem %s0, %s348
      %p350 = pneg %p55
      %p351 = pneg %p52
      %s352 = ssub.s32 %s25, 1
      %p353 = scmp.gt.s32.totalorder %s352, 0
      %s354 = scalar_select %p353, %s352, 0
      %p355 = scmp.lt.s32.totalorder %s24, 1
      %s356 = scalar_select %p355, %s24, 1
      %p357 = scmp.lt.s32.totalorder %s354, 0
      %s358 = scalar_select %p357, %s354, 0
      %s359 = sadd.s32 %s358, %s356
      %s360 = smul.addr %s359, 4
      %s361 = scalar_lea.vmem %s1, %s360
      %p362 = pneg %p89
      %p363 = pneg %p86
      %s364 = sadd.s32 %s25, 1
      %p365 = scmp.lt.s32.totalorder %s364, 0
      %s366 = scalar_select %p365, %s364, 0
      %p367 = scmp.lt.s32.totalorder %s24, 1
      %s368 = scalar_select %p367, %s24, 1
      %p369 = scmp.lt.s32.totalorder %s366, 0
      %s370 = scalar_select %p369, %s366, 0
      %s371 = sadd.s32 %s370, %s368
      %s372 = smul.addr %s371, 4
      %s373 = scalar_lea.vmem %s2, %s372
      %p374 = pneg %p123
      %p375 = pneg %p120
      %p376 = pneg %p144
      %p377 = pneg %p141
      %p378 = pneg %p165
      %p379 = pneg %p162
      %p380 = pneg %p186
      %p381 = pneg %p183
      %p382 = pneg %p207
      %p383 = pneg %p204
      %p384 = pneg %p235
      %p385 = pneg %p232
      %p386 = scmp.lt.s32.totalorder %s24, 1
      %s387 = scalar_select %p386, %s24, 1
      %p388 = scmp.lt.s32.totalorder %s25, 0
      %s389 = scalar_select %p388, %s25, 0
      %s390 = sadd.s32 %s389, %s387
      %s391 = smul.addr %s390, 4
      %s392 = scalar_lea.vmem %s7, %s391
      %p393 = pneg %p263
      %p394 = pneg %p260
      %p395 = scmp.lt.s32.totalorder %s24, 1
      %s396 = scalar_select %p395, %s24, 1
      %p397 = scmp.lt.s32.totalorder %s25, 0
      %s398 = scalar_select %p397, %s25, 0
      %s399 = sadd.s32 %s398, %s396
      %s400 = smul.addr %s399, 2
      %s401 = scalar_lea.vmem %s8, %s400
      %p402 = scmp.lt.s32.totalorder %s24, 1
      %s403 = scalar_select %p402, %s24, 1
      %p404 = scmp.lt.s32.totalorder %s25, 0
      %s405 = scalar_select %p404, %s25, 0
      %s406 = sadd.s32 %s405, %s403
      %s407 = smul.addr %s406, 4
      %s408 = scalar_lea.vmem %s0, %s407
      %s409 = ssub.s32 %s25, 1
      %p410 = scmp.gt.s32.totalorder %s409, 0
      %s411 = scalar_select %p410, %s409, 0
      %p412 = scmp.lt.s32.totalorder %s24, 1
      %s413 = scalar_select %p412, %s24, 1
      %p414 = scmp.lt.s32.totalorder %s411, 0
      %s415 = scalar_select %p414, %s411, 0
      %s416 = sadd.s32 %s415, %s413
      %s417 = smul.addr %s416, 4
      %s418 = scalar_lea.vmem %s1, %s417
      %s419 = ssub.s32 %s25, 1
      %p420 = scmp.gt.s32.totalorder %s419, 0
      %s421 = scalar_select %p420, %s419, 0
      %s422 = sadd.s32 %s25, 1
      %p423 = scmp.lt.s32.totalorder %s422, 0
      %s424 = scalar_select %p423, %s422, 0
      %p425 = scmp.lt.s32.totalorder %s24, 1
      %s426 = scalar_select %p425, %s24, 1
      %p427 = scmp.lt.s32.totalorder %s424, 0
      %s428 = scalar_select %p427, %s424, 0
      %s429 = sadd.s32 %s428, %s426
      %s430 = smul.addr %s429, 4
      %s431 = scalar_lea.vmem %s2, %s430
      %s432 = sadd.s32 %s25, 1
      %p433 = scmp.lt.s32.totalorder %s432, 0
      %s434 = scalar_select %p433, %s432, 0
      %p435 = scmp.lt.s32.totalorder %s24, 1
      %s436 = scalar_select %p435, %s24, 1
      %p437 = scmp.lt.s32.totalorder %s25, 0
      %s438 = scalar_select %p437, %s25, 0
      %s439 = sadd.s32 %s438, %s436
      %s440 = smul.addr %s439, 4
      %s441 = scalar_lea.vmem %s7, %s440
      %p442 = scmp.lt.s32.totalorder %s24, 1
      %s443 = scalar_select %p442, %s24, 1
      %p444 = scmp.lt.s32.totalorder %s25, 0
      %s445 = scalar_select %p444, %s25, 0
      %s446 = sadd.s32 %s445, %s443
      %s447 = smul.addr %s446, 2
      %s448 = scalar_lea.vmem %s8, %s447
      %s450 = smul.u32 %s25, 8
      %v451 = vld [vmem:[%s418] sm:$0xf]
      %v452 = vunpack.c.l.bf16 %v451
      %v453 = vld [vmem:[%s408] sm:$0xf]
      %v454 = vunpack.c.l.bf16 %v453
      %v455 = vld [vmem:[%s431] sm:$0xf]
      %v456 = vunpack.c.l.bf16 %v455
      %s457 = ssub.s32 %s450, 8
      %v458 = vlaneseq
      %v459 = vshrl.u32 %v458, 7
      %v460 = vadd.s32 %v459, 8
      %v461 = vadd.s32 %v459, 16
      %v462 = vstv %s457
      %v463 = vadd.s32 %v462, %v459
      %v464 = vadd.s32 %v462, %v460
      %v465 = vadd.s32 %v462, %v461
      %vm466 = vcmp.ge.s32.totalorder %v463, 0
      %vm467 = vcmp.ge.s32.totalorder %v464, 0
      %vm468 = vcmp.ge.s32.totalorder %v465, 0
      %vm469 = vcmp.lt.s32.totalorder %v463, 8
      %vm470 = vcmp.lt.s32.totalorder %v464, 8
      %vm471 = vcmp.lt.s32.totalorder %v465, 8
      %vm472 = vmand %vm466, %vm469
      %vm473 = vmand %vm467, %vm470
      %vm474 = vmand %vm468, %vm471
      %v475 = vsel %vm472, 1, 0
      %v476 = vsel %vm473, 1, 0
      %v477 = vsel %vm474, 1, 0
      %vm478 = vcmp.eq.s32.totalorder %v475, 1
      %vm479 = vcmp.eq.s32.totalorder %v476, 1
      %vm480 = vcmp.eq.s32.totalorder %v477, 1
      %v481 = vsel %vm478, %v452, 0.0
      %v482 = vsel %vm479, %v454, 0.0
      %v483 = vsel %vm480, %v456, 0.0
      %v484 = vrot.slane %v481, 6
      %v485 = vrot.slane %v482, 6
      %vm486 = vcmp.lt.s32.totalorder %v459, 2
      %v487 = vsel %vm486, %v484, %v485
      %v488 = vpack.c.bf16 %v487, %v487
      %v489 = vld [vmem:[%s3] sm:$0xf]
      %v490 = vld [vmem:[%s3 + $0x4] sm:$0xf]
      %v491 = vld [vmem:[%s3 + $0x8] sm:$0xf]
      %v492 = vld [vmem:[%s3 + $0xc] sm:$0xf]
      %v493 = vld [vmem:[%s3 + $0x10] sm:$0xf]
      %v494 = vld [vmem:[%s3 + $0x14] sm:$0xf]
      %v495 = vld [vmem:[%s3 + $0x18] sm:$0xf]
      %v496 = vld [vmem:[%s3 + $0x1c] sm:$0xf]
      %v497 = vld [vmem:[%s3 + $0x20] sm:$0xf]
      %v498 = vld [vmem:[%s3 + $0x24] sm:$0xf]
      %v499 = vld [vmem:[%s3 + $0x28] sm:$0xf]
      %v500 = vld [vmem:[%s3 + $0x2c] sm:$0xf]
      %v501 = vld [vmem:[%s3 + $0x30] sm:$0xf]
      %v502 = vld [vmem:[%s3 + $0x34] sm:$0xf]
      %v503 = vld [vmem:[%s3 + $0x38] sm:$0xf]
      %v504 = vld [vmem:[%s3 + $0x3c] sm:$0xf]
      %v505 = vrot.slane %v481, 7
      %v506 = vrot.slane %v482, 7
      %vm507 = vcmp.lt.s32.totalorder %v459, 1
      %v508 = vsel %vm507, %v505, %v506
      %v509 = vpack.c.bf16 %v508, %v508
      %s510 = scalar_lea.vmem %s3, 64
      %v511 = vld [vmem:[%s510] sm:$0xf]
      %v512 = vld [vmem:[%s510 + $0x4] sm:$0xf]
      %v513 = vld [vmem:[%s510 + $0x8] sm:$0xf]
      %v514 = vld [vmem:[%s510 + $0xc] sm:$0xf]
      %v515 = vld [vmem:[%s510 + $0x10] sm:$0xf]
      %v516 = vld [vmem:[%s510 + $0x14] sm:$0xf]
      %v517 = vld [vmem:[%s510 + $0x18] sm:$0xf]
      %v518 = vld [vmem:[%s510 + $0x1c] sm:$0xf]
      %v519 = vld [vmem:[%s510 + $0x20] sm:$0xf]
      %v520 = vld [vmem:[%s510 + $0x24] sm:$0xf]
      %v521 = vld [vmem:[%s510 + $0x28] sm:$0xf]
      %v522 = vld [vmem:[%s510 + $0x2c] sm:$0xf]
      %v523 = vld [vmem:[%s510 + $0x30] sm:$0xf]
      %v524 = vld [vmem:[%s510 + $0x34] sm:$0xf]
      %v525 = vld [vmem:[%s510 + $0x38] sm:$0xf]
      %v526 = vld [vmem:[%s510 + $0x3c] sm:$0xf]
      %v543 = vunpack.c.l.b16 %v511
      %v544 = vunpack.c.l.b16 %v512
      %v545 = vunpack.c.l.b16 %v513
      %v546 = vunpack.c.l.b16 %v514
      %v547 = vunpack.c.l.b16 %v515
      %v548 = vunpack.c.l.b16 %v516
      %v549 = vunpack.c.l.b16 %v517
      %v550 = vunpack.c.l.b16 %v518
      %v551 = vunpack.c.l.b16 %v519
      %v552 = vunpack.c.l.b16 %v520
      %v553 = vunpack.c.l.b16 %v521
      %v554 = vunpack.c.l.b16 %v522
      %v555 = vunpack.c.l.b16 %v523
      %v556 = vunpack.c.l.b16 %v524
      %v557 = vunpack.c.l.b16 %v525
      %v558 = vunpack.c.l.b16 %v526
      %v559 = vpack.c.b16 %v544, %v543
      %v560 = vpack.c.b16 %v546, %v545
      %v561 = vpack.c.b16 %v548, %v547
      %v562 = vpack.c.b16 %v550, %v549
      %v563 = vpack.c.b16 %v552, %v551
      %v564 = vpack.c.b16 %v554, %v553
      %v565 = vpack.c.b16 %v556, %v555
      %v566 = vpack.c.b16 %v558, %v557
      %575 = vmatprep.subr.bf16.mxu0 0
      %576 = vmatpush1.bf16.msra.mxu0 %v566
      %577 = vmatprep.subr.bf16.mxu0 0
      %578 = vmatpush1.bf16.msra.mxu0 %v565
      %579 = vmatprep.subr.bf16.mxu0 0
      %580 = vmatpush1.bf16.msra.mxu0 %v564
      %581 = vmatprep.subr.bf16.mxu0 0
      %582 = vmatpush1.bf16.msra.mxu0 %v563
      %583 = vmatprep.subr.bf16.mxu0 0
      %584 = vmatpush1.bf16.msra.mxu0 %v562
      %585 = vmatprep.subr.bf16.mxu0 0
      %586 = vmatpush1.bf16.msra.mxu0 %v561
      %587 = vmatprep.subr.bf16.mxu0 0
      %588 = vmatpush1.bf16.msra.mxu0 %v560
      %589 = vmatprep.subr.bf16.mxu0 0
      %590 = vmatpush1.bf16.msra.mxu0 %v559
      %591 = vmatprep.subr.bf16.mxu0 0
      %592 = vmatpush2.bf16.msra.mxu0 0
      %593 = vmatprep.subr.bf16.mxu0 0
      %594 = vmatpush2.bf16.msra.mxu0 0
      %595 = vmatprep.subr.bf16.mxu0 0
      %596 = vmatpush2.bf16.msra.mxu0 0
      %597 = vmatprep.subr.bf16.mxu0 0
      %598 = vmatpush2.bf16.msra.mxu0 0
      %599 = vmatprep.subr.bf16.mxu0 0
      %600 = vmatpush2.bf16.msra.mxu0 0
      %601 = vmatprep.subr.bf16.mxu0 0
      %602 = vmatpush2.bf16.msra.mxu0 0
      %603 = vmatprep.subr.bf16.mxu0 0
      %604 = vmatpush2.bf16.msra.mxu0 0
      %605 = vmatprep.subr.bf16.mxu0 0
      %606 = vmatpush2.bf16.msra.mxu0 0
      %607 = vmatprep.mubr.bf16.mxu0 0
      %608 = vmatmul.mubr.bf16.gmra.mxu0 %v509
      %v609 = vpop.f32.mrf.mxu0
      %v610 = vadd.f32 0.0, %v609
      %v611 = vpop.f32.mrf.mxu0
      %v612 = vpop.f32.mrf.mxu0
      %v613 = vpop.f32.mrf.mxu0
      %614 = vdwg.mxu0
      %v631 = vunpack.c.l.b16 %v489
      %v632 = vunpack.c.l.b16 %v490
      %v633 = vunpack.c.l.b16 %v491
      %v634 = vunpack.c.l.b16 %v492
      %v635 = vunpack.c.l.b16 %v493
      %v636 = vunpack.c.l.b16 %v494
      %v637 = vunpack.c.l.b16 %v495
      %v638 = vunpack.c.l.b16 %v496
      %v639 = vunpack.c.l.b16 %v497
      %v640 = vunpack.c.l.b16 %v498
      %v641 = vunpack.c.l.b16 %v499
      %v642 = vunpack.c.l.b16 %v500
      %v643 = vunpack.c.l.b16 %v501
      %v644 = vunpack.c.l.b16 %v502
      %v645 = vunpack.c.l.b16 %v503
      %v646 = vunpack.c.l.b16 %v504
      %v647 = vpack.c.b16 %v632, %v631
      %v648 = vpack.c.b16 %v634, %v633
      %v649 = vpack.c.b16 %v636, %v635
      %v650 = vpack.c.b16 %v638, %v637
      %v651 = vpack.c.b16 %v640, %v639
      %v652 = vpack.c.b16 %v642, %v641
      %v653 = vpack.c.b16 %v644, %v643
      %v654 = vpack.c.b16 %v646, %v645
      %663 = vmatprep.subr.bf16.mxu0 0
      %664 = vmatpush1.bf16.msra.mxu0 %v654
      %665 = vmatprep.subr.bf16.mxu0 0
      %666 = vmatpush1.bf16.msra.mxu0 %v653
      %667 = vmatprep.subr.bf16.mxu0 0
      %668 = vmatpush1.bf16.msra.mxu0 %v652
      %669 = vmatprep.subr.bf16.mxu0 0
      %670 = vmatpush1.bf16.msra.mxu0 %v651
      %671 = vmatprep.subr.bf16.mxu0 0
      %672 = vmatpush1.bf16.msra.mxu0 %v650
      %673 = vmatprep.subr.bf16.mxu0 0
      %674 = vmatpush1.bf16.msra.mxu0 %v649
      %675 = vmatprep.subr.bf16.mxu0 0
      %676 = vmatpush1.bf16.msra.mxu0 %v648
      %677 = vmatprep.subr.bf16.mxu0 0
      %678 = vmatpush1.bf16.msra.mxu0 %v647
      %679 = vmatprep.subr.bf16.mxu0 0
      %680 = vmatpush2.bf16.msra.mxu0 0
      %681 = vmatprep.subr.bf16.mxu0 0
      %682 = vmatpush2.bf16.msra.mxu0 0
      %683 = vmatprep.subr.bf16.mxu0 0
      %684 = vmatpush2.bf16.msra.mxu0 0
      %685 = vmatprep.subr.bf16.mxu0 0
      %686 = vmatpush2.bf16.msra.mxu0 0
      %687 = vmatprep.subr.bf16.mxu0 0
      %688 = vmatpush2.bf16.msra.mxu0 0
      %689 = vmatprep.subr.bf16.mxu0 0
      %690 = vmatpush2.bf16.msra.mxu0 0
      %691 = vmatprep.subr.bf16.mxu0 0
      %692 = vmatpush2.bf16.msra.mxu0 0
      %693 = vmatprep.subr.bf16.mxu0 0
      %694 = vmatpush2.bf16.msra.mxu0 0
      %695 = vmatprep.mubr.bf16.mxu0 0
      %696 = vmatmul.mubr.bf16.gmra.mxu0 %v488
      %v697 = vpop.f32.mrf.mxu0
      %v698 = vadd.f32 %v610, %v697
      %v699 = vpop.f32.mrf.mxu0
      %v700 = vpop.f32.mrf.mxu0
      %v701 = vpop.f32.mrf.mxu0
      %702 = vdwg.mxu0
      %v703 = vpack.c.bf16 %v482, %v482
      %s704 = scalar_lea.vmem %s3, 128
      %v705 = vld [vmem:[%s704] sm:$0xf]
      %v706 = vld [vmem:[%s704 + $0x4] sm:$0xf]
      %v707 = vld [vmem:[%s704 + $0x8] sm:$0xf]
      %v708 = vld [vmem:[%s704 + $0xc] sm:$0xf]
      %v709 = vld [vmem:[%s704 + $0x10] sm:$0xf]
      %v710 = vld [vmem:[%s704 + $0x14] sm:$0xf]
      %v711 = vld [vmem:[%s704 + $0x18] sm:$0xf]
      %v712 = vld [vmem:[%s704 + $0x1c] sm:$0xf]
      %v713 = vld [vmem:[%s704 + $0x20] sm:$0xf]
      %v714 = vld [vmem:[%s704 + $0x24] sm:$0xf]
      %v715 = vld [vmem:[%s704 + $0x28] sm:$0xf]
      %v716 = vld [vmem:[%s704 + $0x2c] sm:$0xf]
      %v717 = vld [vmem:[%s704 + $0x30] sm:$0xf]
      %v718 = vld [vmem:[%s704 + $0x34] sm:$0xf]
      %v719 = vld [vmem:[%s704 + $0x38] sm:$0xf]
      %v720 = vld [vmem:[%s704 + $0x3c] sm:$0xf]
      %v737 = vunpack.c.l.b16 %v705
      %v738 = vunpack.c.l.b16 %v706
      %v739 = vunpack.c.l.b16 %v707
      %v740 = vunpack.c.l.b16 %v708
      %v741 = vunpack.c.l.b16 %v709
      %v742 = vunpack.c.l.b16 %v710
      %v743 = vunpack.c.l.b16 %v711
      %v744 = vunpack.c.l.b16 %v712
      %v745 = vunpack.c.l.b16 %v713
      %v746 = vunpack.c.l.b16 %v714
      %v747 = vunpack.c.l.b16 %v715
      %v748 = vunpack.c.l.b16 %v716
      %v749 = vunpack.c.l.b16 %v717
      %v750 = vunpack.c.l.b16 %v718
      %v751 = vunpack.c.l.b16 %v719
      %v752 = vunpack.c.l.b16 %v720
      %v753 = vpack.c.b16 %v738, %v737
      %v754 = vpack.c.b16 %v740, %v739
      %v755 = vpack.c.b16 %v742, %v741
      %v756 = vpack.c.b16 %v744, %v743
      %v757 = vpack.c.b16 %v746, %v745
      %v758 = vpack.c.b16 %v748, %v747
      %v759 = vpack.c.b16 %v750, %v749
      %v760 = vpack.c.b16 %v752, %v751
      %769 = vmatprep.subr.bf16.mxu0 0
      %770 = vmatpush1.bf16.msra.mxu0 %v760
      %771 = vmatprep.subr.bf16.mxu0 0
      %772 = vmatpush1.bf16.msra.mxu0 %v759
      %773 = vmatprep.subr.bf16.mxu0 0
      %774 = vmatpush1.bf16.msra.mxu0 %v758
      %775 = vmatprep.subr.bf16.mxu0 0
      %776 = vmatpush1.bf16.msra.mxu0 %v757
      %777 = vmatprep.subr.bf16.mxu0 0
      %778 = vmatpush1.bf16.msra.mxu0 %v756
      %779 = vmatprep.subr.bf16.mxu0 0
      %780 = vmatpush1.bf16.msra.mxu0 %v755
      %781 = vmatprep.subr.bf16.mxu0 0
      %782 = vmatpush1.bf16.msra.mxu0 %v754
      %783 = vmatprep.subr.bf16.mxu0 0
      %784 = vmatpush1.bf16.msra.mxu0 %v753
      %785 = vmatprep.subr.bf16.mxu0 0
      %786 = vmatpush2.bf16.msra.mxu0 0
      %787 = vmatprep.subr.bf16.mxu0 0
      %788 = vmatpush2.bf16.msra.mxu0 0
      %789 = vmatprep.subr.bf16.mxu0 0
      %790 = vmatpush2.bf16.msra.mxu0 0
      %791 = vmatprep.subr.bf16.mxu0 0
      %792 = vmatpush2.bf16.msra.mxu0 0
      %793 = vmatprep.subr.bf16.mxu0 0
      %794 = vmatpush2.bf16.msra.mxu0 0
      %795 = vmatprep.subr.bf16.mxu0 0
      %796 = vmatpush2.bf16.msra.mxu0 0
      %797 = vmatprep.subr.bf16.mxu0 0
      %798 = vmatpush2.bf16.msra.mxu0 0
      %799 = vmatprep.subr.bf16.mxu0 0
      %800 = vmatpush2.bf16.msra.mxu0 0
      %801 = vmatprep.mubr.bf16.mxu0 0
      %802 = vmatmul.mubr.bf16.gmra.mxu0 %v703
      %v803 = vpop.f32.mrf.mxu0
      %v804 = vadd.f32 0.0, %v803
      %v805 = vpop.f32.mrf.mxu0
      %v806 = vpop.f32.mrf.mxu0
      %v807 = vpop.f32.mrf.mxu0
      %808 = vdwg.mxu0
      %v809 = vadd.f32 %v698, %v804
      %v810 = vrot.slane %v482, 1
      %v811 = vrot.slane %v483, 1
      %vm812 = vcmp.lt.s32.totalorder %v459, 7
      %v813 = vsel %vm812, %v810, %v811
      %v814 = vpack.c.bf16 %v813, %v813
      %s815 = scalar_lea.vmem %s3, 192
      %v816 = vld [vmem:[%s815] sm:$0xf]
      %v817 = vld [vmem:[%s815 + $0x4] sm:$0xf]
      %v818 = vld [vmem:[%s815 + $0x8] sm:$0xf]
      %v819 = vld [vmem:[%s815 + $0xc] sm:$0xf]
      %v820 = vld [vmem:[%s815 + $0x10] sm:$0xf]
      %v821 = vld [vmem:[%s815 + $0x14] sm:$0xf]
      %v822 = vld [vmem:[%s815 + $0x18] sm:$0xf]
      %v823 = vld [vmem:[%s815 + $0x1c] sm:$0xf]
      %v824 = vld [vmem:[%s815 + $0x20] sm:$0xf]
      %v825 = vld [vmem:[%s815 + $0x24] sm:$0xf]
      %v826 = vld [vmem:[%s815 + $0x28] sm:$0xf]
      %v827 = vld [vmem:[%s815 + $0x2c] sm:$0xf]
      %v828 = vld [vmem:[%s815 + $0x30] sm:$0xf]
      %v829 = vld [vmem:[%s815 + $0x34] sm:$0xf]
      %v830 = vld [vmem:[%s815 + $0x38] sm:$0xf]
      %v831 = vld [vmem:[%s815 + $0x3c] sm:$0xf]
      %v848 = vunpack.c.l.b16 %v816
      %v849 = vunpack.c.l.b16 %v817
      %v850 = vunpack.c.l.b16 %v818
      %v851 = vunpack.c.l.b16 %v819
      %v852 = vunpack.c.l.b16 %v820
      %v853 = vunpack.c.l.b16 %v821
      %v854 = vunpack.c.l.b16 %v822
      %v855 = vunpack.c.l.b16 %v823
      %v856 = vunpack.c.l.b16 %v824
      %v857 = vunpack.c.l.b16 %v825
      %v858 = vunpack.c.l.b16 %v826
      %v859 = vunpack.c.l.b16 %v827
      %v860 = vunpack.c.l.b16 %v828
      %v861 = vunpack.c.l.b16 %v829
      %v862 = vunpack.c.l.b16 %v830
      %v863 = vunpack.c.l.b16 %v831
      %v864 = vpack.c.b16 %v849, %v848
      %v865 = vpack.c.b16 %v851, %v850
      %v866 = vpack.c.b16 %v853, %v852
      %v867 = vpack.c.b16 %v855, %v854
      %v868 = vpack.c.b16 %v857, %v856
      %v869 = vpack.c.b16 %v859, %v858
      %v870 = vpack.c.b16 %v861, %v860
      %v871 = vpack.c.b16 %v863, %v862
      %880 = vmatprep.subr.bf16.mxu0 0
      %881 = vmatpush1.bf16.msra.mxu0 %v871
      %882 = vmatprep.subr.bf16.mxu0 0
      %883 = vmatpush1.bf16.msra.mxu0 %v870
      %884 = vmatprep.subr.bf16.mxu0 0
      %885 = vmatpush1.bf16.msra.mxu0 %v869
      %886 = vmatprep.subr.bf16.mxu0 0
      %887 = vmatpush1.bf16.msra.mxu0 %v868
      %888 = vmatprep.subr.bf16.mxu0 0
      %889 = vmatpush1.bf16.msra.mxu0 %v867
      %890 = vmatprep.subr.bf16.mxu0 0
      %891 = vmatpush1.bf16.msra.mxu0 %v866
      %892 = vmatprep.subr.bf16.mxu0 0
      %893 = vmatpush1.bf16.msra.mxu0 %v865
      %894 = vmatprep.subr.bf16.mxu0 0
      %895 = vmatpush1.bf16.msra.mxu0 %v864
      %896 = vmatprep.subr.bf16.mxu0 0
      %897 = vmatpush2.bf16.msra.mxu0 0
      %898 = vmatprep.subr.bf16.mxu0 0
      %899 = vmatpush2.bf16.msra.mxu0 0
      %900 = vmatprep.subr.bf16.mxu0 0
      %901 = vmatpush2.bf16.msra.mxu0 0
      %902 = vmatprep.subr.bf16.mxu0 0
      %903 = vmatpush2.bf16.msra.mxu0 0
      %904 = vmatprep.subr.bf16.mxu0 0
      %905 = vmatpush2.bf16.msra.mxu0 0
      %906 = vmatprep.subr.bf16.mxu0 0
      %907 = vmatpush2.bf16.msra.mxu0 0
      %908 = vmatprep.subr.bf16.mxu0 0
      %909 = vmatpush2.bf16.msra.mxu0 0
      %910 = vmatprep.subr.bf16.mxu0 0
      %911 = vmatpush2.bf16.msra.mxu0 0
      %912 = vmatprep.mubr.bf16.mxu0 0
      %913 = vmatmul.mubr.bf16.gmra.mxu0 %v814
      %v914 = vpop.f32.mrf.mxu0
      %v915 = vadd.f32 0.0, %v914
      %v916 = vpop.f32.mrf.mxu0
      %v917 = vpop.f32.mrf.mxu0
      %v918 = vpop.f32.mrf.mxu0
      %919 = vdwg.mxu0
      %v920 = vadd.f32 %v809, %v915
      %v921 = vrot.slane %v482, 2
      %v922 = vrot.slane %v483, 2
      %vm923 = vcmp.lt.s32.totalorder %v459, 6
      %v924 = vsel %vm923, %v921, %v922
      %v925 = vpack.c.bf16 %v924, %v924
      %s926 = scalar_lea.vmem %s3, 256
      %v927 = vld [vmem:[%s926] sm:$0xf]
      %v928 = vld [vmem:[%s926 + $0x4] sm:$0xf]
      %v929 = vld [vmem:[%s926 + $0x8] sm:$0xf]
      %v930 = vld [vmem:[%s926 + $0xc] sm:$0xf]
      %v931 = vld [vmem:[%s926 + $0x10] sm:$0xf]
      %v932 = vld [vmem:[%s926 + $0x14] sm:$0xf]
      %v933 = vld [vmem:[%s926 + $0x18] sm:$0xf]
      %v934 = vld [vmem:[%s926 + $0x1c] sm:$0xf]
      %v935 = vld [vmem:[%s926 + $0x20] sm:$0xf]
      %v936 = vld [vmem:[%s926 + $0x24] sm:$0xf]
      %v937 = vld [vmem:[%s926 + $0x28] sm:$0xf]
      %v938 = vld [vmem:[%s926 + $0x2c] sm:$0xf]
      %v939 = vld [vmem:[%s926 + $0x30] sm:$0xf]
      %v940 = vld [vmem:[%s926 + $0x34] sm:$0xf]
      %v941 = vld [vmem:[%s926 + $0x38] sm:$0xf]
      %v942 = vld [vmem:[%s926 + $0x3c] sm:$0xf]
      %v959 = vunpack.c.l.b16 %v927
      %v960 = vunpack.c.l.b16 %v928
      %v961 = vunpack.c.l.b16 %v929
      %v962 = vunpack.c.l.b16 %v930
      %v963 = vunpack.c.l.b16 %v931
      %v964 = vunpack.c.l.b16 %v932
      %v965 = vunpack.c.l.b16 %v933
      %v966 = vunpack.c.l.b16 %v934
      %v967 = vunpack.c.l.b16 %v935
      %v968 = vunpack.c.l.b16 %v936
      %v969 = vunpack.c.l.b16 %v937
      %v970 = vunpack.c.l.b16 %v938
      %v971 = vunpack.c.l.b16 %v939
      %v972 = vunpack.c.l.b16 %v940
      %v973 = vunpack.c.l.b16 %v941
      %v974 = vunpack.c.l.b16 %v942
      %v975 = vpack.c.b16 %v960, %v959
      %v976 = vpack.c.b16 %v962, %v961
      %v977 = vpack.c.b16 %v964, %v963
      %v978 = vpack.c.b16 %v966, %v965
      %v979 = vpack.c.b16 %v968, %v967
      %v980 = vpack.c.b16 %v970, %v969
      %v981 = vpack.c.b16 %v972, %v971
      %v982 = vpack.c.b16 %v974, %v973
      %991 = vmatprep.subr.bf16.mxu0 0
      %992 = vmatpush1.bf16.msra.mxu0 %v982
      %993 = vmatprep.subr.bf16.mxu0 0
      %994 = vmatpush1.bf16.msra.mxu0 %v981
      %995 = vmatprep.subr.bf16.mxu0 0
      %996 = vmatpush1.bf16.msra.mxu0 %v980
      %997 = vmatprep.subr.bf16.mxu0 0
      %998 = vmatpush1.bf16.msra.mxu0 %v979
      %999 = vmatprep.subr.bf16.mxu0 0
      %1000 = vmatpush1.bf16.msra.mxu0 %v978
      %1001 = vmatprep.subr.bf16.mxu0 0
      %1002 = vmatpush1.bf16.msra.mxu0 %v977
      %1003 = vmatprep.subr.bf16.mxu0 0
      %1004 = vmatpush1.bf16.msra.mxu0 %v976
      %1005 = vmatprep.subr.bf16.mxu0 0
      %1006 = vmatpush1.bf16.msra.mxu0 %v975
      %1007 = vmatprep.subr.bf16.mxu0 0
      %1008 = vmatpush2.bf16.msra.mxu0 0
      %1009 = vmatprep.subr.bf16.mxu0 0
      %1010 = vmatpush2.bf16.msra.mxu0 0
      %1011 = vmatprep.subr.bf16.mxu0 0
      %1012 = vmatpush2.bf16.msra.mxu0 0
      %1013 = vmatprep.subr.bf16.mxu0 0
      %1014 = vmatpush2.bf16.msra.mxu0 0
      %1015 = vmatprep.subr.bf16.mxu0 0
      %1016 = vmatpush2.bf16.msra.mxu0 0
      %1017 = vmatprep.subr.bf16.mxu0 0
      %1018 = vmatpush2.bf16.msra.mxu0 0
      %1019 = vmatprep.subr.bf16.mxu0 0
      %1020 = vmatpush2.bf16.msra.mxu0 0
      %1021 = vmatprep.subr.bf16.mxu0 0
      %1022 = vmatpush2.bf16.msra.mxu0 0
      %1023 = vmatprep.mubr.bf16.mxu0 0
      %1024 = vmatmul.mubr.bf16.gmra.mxu0 %v925
      %v1025 = vpop.f32.mrf.mxu0
      %v1026 = vadd.f32 0.0, %v1025
      %v1027 = vpop.f32.mrf.mxu0
      %v1028 = vpop.f32.mrf.mxu0
      %v1029 = vpop.f32.mrf.mxu0
      %1030 = vdwg.mxu0
      %v1031 = vadd.f32 %v920, %v1026
      %v1032 = vld [vmem:[%s4] sm:$0x1]
      %v1034 = vlaneseq
      %v1035 = vshrl.u32 %v1034, 7
      %v1036 = vsub.s32 0, %v1035
      %v1037 = vrot.slane %v1032, %v1036
      %v1039 = vadd.f32 %v1031, %v1037
      %v1040 = vpack.c.bf16 %v1039, %v1039
      %1041 = vst [vmem:[%s441] sm:$0xf] %v1040
      %v1042 = vstv %s450
      %v1043 = vadd.s32 %v1042, %v459
      %vm1044 = vcmp.lt.s32.totalorder %v1043, 8
      %v1045 = vsel %vm1044, 1, 0
      %v1046 = vcvt.s32.f32 %v1045
      %v1047 = vmul.f32 %v1039, %v1046
      %v1048 = vrot.slane %v1047, 4
      %v1049 = vadd.f32 %v1047, %v1048
      %v1050 = vrot.slane %v1049, 2
      %v1051 = vadd.f32 %v1049, %v1050
      %v1052 = vrot.slane %v1051, 1
      %v1053 = vadd.f32 %v1051, %v1052
      %v1054 = vmul.f32 %v1039, %v1039
      %v1055 = vmul.f32 %v1054, %v1046
      %v1056 = vrot.slane %v1055, 4
      %v1057 = vadd.f32 %v1055, %v1056
      %v1058 = vrot.slane %v1057, 2
      %v1059 = vadd.f32 %v1057, %v1058
      %v1060 = vrot.slane %v1059, 1
      %v1061 = vadd.f32 %v1059, %v1060
      %1062 = vst [vmem:[%s448] sm:$0x1] %v1053
      %1063 = vst [vmem:[%s448 + $0x1] sm:$0x1] %v1061
      %p1064 = scmp.lt.s32.totalorder %s24, 1
      %s1065 = scalar_select %p1064, %s24, 1
      %p1066 = scmp.lt.s32.totalorder %s25, 0
      %s1067 = scalar_select %p1066, %s25, 0
      %s1068 = sadd.s32 %s1067, %s1065
      %s1069 = smul.addr %s1068, 4
      %s1070 = scalar_lea.vmem %s7, %s1069
      %p1071 = scmp.lt.s32.totalorder %s24, 1
      %s1072 = scalar_select %p1071, %s24, 1
      %p1073 = scmp.lt.s32.totalorder %s25, 0
      %s1074 = scalar_select %p1073, %s25, 0
      %s1075 = sadd.s32 %s1074, %s1072
      %s1076 = smul.addr %s1075, 2
      %s1077 = scalar_lea.vmem %s8, %s1076
      // Predicated region
      $region49: #{overflow_forward.9} parent=47 // pred_check
        %p1078 = pneg %p232
      $region50: #{overflow_forward.9} parent=47 // pred_check_branch
        %1080 = sbr.rel (%p1078) target = $region52
      $region51: #{overflow_forward.9} parent=47 // pred_region
        _
      $region52: #{overflow_forward.9} parent=47 // pred_fallthru
        _
      // Predicated region
      $region53: #{overflow_forward.9} parent=47 // pred_check
        %p1081 = pneg %p260
      $region54: #{overflow_forward.9} parent=47 // pred_check_branch
        %1083 = sbr.rel (%p1081) target = $region56
      $region55: #{overflow_forward.9} parent=47 // pred_region
        _
      $region56: #{overflow_forward.9} parent=47 // pred_fallthru
        _
    $region48: #{overflow_forward.9} parent=5 // pred_fallthru
      _
    %p1084 = scmp.le.s32.totalorder 2, %s15
    // Predicated region
    $region57: #{overflow_forward.9} parent=5 // pred_check
      %p1085 = pneg %p1084
    $region58: #{overflow_forward.9} parent=5 // pred_check_branch
      %1087 = sbr.rel (%p1085) target = $region60
    $region59: #{overflow_forward.9} parent=5 // pred_region
      %s1088 = ssub.s32 %s15, 2
      // Predicated region
      $region61: #{overflow_forward.9} parent=59 // pred_check
        %p1089 = pneg %p238
      $region62: #{overflow_forward.9} parent=59 // pred_check_branch
        %1091 = sbr.rel (%p1089) target = $region64
      $region63: #{overflow_forward.9} parent=59 // pred_region
        %p1092 = scmp.lt.s32.totalorder %s26, 1
        %s1093 = scalar_select %p1092, %s26, 1
        %p1094 = scmp.lt.s32.totalorder %s27, 0
        %s1095 = scalar_select %p1094, %s27, 0
        %s1096 = sadd.s32 %s1095, %s1093
        %s1097 = smul.addr %s1096, 4
        %s1098 = scalar_lea.vmem %s7, %s1097
      $region64: #{overflow_forward.9} parent=59 // pred_fallthru
        _
      // Predicated region
      $region65: #{overflow_forward.9} parent=59 // pred_check
        %p1099 = pneg %p266
      $region66: #{overflow_forward.9} parent=59 // pred_check_branch
        %1101 = sbr.rel (%p1099) target = $region68
      $region67: #{overflow_forward.9} parent=59 // pred_region
        %p1102 = scmp.lt.s32.totalorder %s26, 1
        %s1103 = scalar_select %p1102, %s26, 1
        %p1104 = scmp.lt.s32.totalorder %s27, 0
        %s1105 = scalar_select %p1104, %s27, 0
        %s1106 = sadd.s32 %s1105, %s1103
        %s1107 = smul.addr %s1106, 2
        %s1108 = scalar_lea.vmem %s8, %s1107
      $region68: #{overflow_forward.9} parent=59 // pred_fallthru
        _
    $region60: #{overflow_forward.9} parent=5 // pred_fallthru
      _
  $region6: #{overflow_forward.9} parent=0 // loop_footer
    %s19 = sadd.s32 1, %s15
  $region7: #{overflow_forward.9} parent=0 // loop_footer_branch
    %14 = sbr.rel target = $region3
  $region8: #{overflow_forward.9} parent=0 // loop_exit
    _

// kernel: overflow_forward.10
$region0: #{overflow_forward.10}
  #allocation0 [shape = 'u32[]', space=smem, size = 0x4, offset = 0x4, fixed_abs, tag = 'smem constant byte address 0x4 - core index']
  #allocation1 [shape = 'u32[144,128]{1,0:T(1,128)}', space=vmem, size = 0x12000, scoped, tag = 'internal scratch']
  %s0 = inlined_call_operand.vmem [shape: bf16[2,8,128], index: 0, kind: input, shape index: {}, may-alias: {0,1,2}]
  %s1 = inlined_call_operand.vmem [shape: bf16[2,8,128], index: 1, kind: input, shape index: {}, may-alias: {0,1,2}]
  %s2 = inlined_call_operand.vmem [shape: bf16[2,8,128], index: 2, kind: input, shape index: {}, may-alias: {0,1,2}]
  %s3 = inlined_call_operand.vmem [shape: bf16[5,128,128], index: 3, kind: input, shape index: {}]
  %s4 = inlined_call_operand.vmem [shape: f32[1,128], index: 4, kind: input, shape index: {}]
  %s5 = inlined_call_operand.vmem [shape: f32[1,128], index: 5, kind: input, shape index: {}]
  %s6 = inlined_call_operand.vmem [shape: f32[1,128], index: 6, kind: input, shape index: {}]
  %s7 = inlined_call_operand.vmem [shape: bf16[2,8,128], index: 7, kind: output, shape index: {0}]
  %s8 = inlined_call_operand.vmem [shape: f32[2,1,2,128], index: 8, kind: output, shape index: {1}]
  %9 = xla_tuple %s7, %s8
  %s10 = sld [smem:[#allocation0]]
  $region69: #{overflow_forward.10} parent=0
    _
  %s12 = ssub.s32 1, %s10
  %s13 = scalar_select 0, %s12, %s10
  loop: start=0, step=1, limit=4
  $region2: #{overflow_forward.10} parent=0 // loop_pre_header
    _
  $region3: #{overflow_forward.10} parent=0 // loop_header
    %s15 = sphi 0, %s19
    %p16 = scmp.ge.s32.totalorder %s15, 4
    %s22 = sphi 0, %s34
    %s23 = sphi 0, %s30
    %s24 = sphi 0, %s22
    %s25 = sphi 0, %s23
    %s26 = sphi 0, %s24
    %s27 = sphi 0, %s25
    %s39 = sphi 0, %s41
    %s42 = sphi 0, %s39
    %s43 = sphi 0, %s42
    %s59 = sphi 0, %s43
    %s73 = sphi 0, %s75
    %s76 = sphi 0, %s73
    %s77 = sphi 0, %s76
    %s93 = sphi 0, %s77
    %s107 = sphi 0, %s109
    %s110 = sphi 0, %s107
    %s111 = sphi 0, %s110
    %s127 = sphi 0, %s111
    %s131 = sphi 0, %s131
    %s133 = sphi 0, %s131
    %s134 = sphi 0, %s133
    %s148 = sphi 0, %s134
    %s152 = sphi 0, %s152
    %s154 = sphi 0, %s152
    %s155 = sphi 0, %s154
    %s169 = sphi 0, %s155
    %s173 = sphi 0, %s173
    %s175 = sphi 0, %s173
    %s176 = sphi 0, %s175
    %s190 = sphi 0, %s176
    %s194 = sphi 0, %s194
    %s196 = sphi 0, %s194
    %s197 = sphi 0, %s196
    %s211 = sphi 0, %s197
    %s219 = sphi 0, %s221
    %s222 = sphi 0, %s219
    %s223 = sphi 0, %s222
    %s239 = sphi 0, %s223
    %s247 = sphi 0, %s249
    %s250 = sphi 0, %s247
    %s251 = sphi 0, %s250
    %s267 = sphi 0, %s251
  $region4: #{overflow_forward.10} parent=0 // loop_header_branch
    %18 = sbr.rel (%p16) target = $region8
  $region5: #{overflow_forward.10} parent=0 // loop_body
    %s20 = ssub.s32 %s15, 1
    %s21 = ssub.s32 %s15, 2
    %s28 = sadd.s32 1, %s23
    %p29 = scmp.ge.s32.totalorder %s28, 1
    %s30 = scalar_select %p29, 0, %s28
    %s31 = sadd.s32 1, %s22
    %s32 = scalar_select %p29, %s31, %s22
    %p33 = scmp.ge.s32.totalorder %s32, 2
    %s34 = scalar_select %p33, 0, %s32
    %s35 = ssub.s32 %s22, %s34
    %s36 = ssub.s32 %s23, %s30
    %s37 = sor.u32 %s35, %s36
    %p38 = scmp.eq.s32.totalorder %s37, 0
    %s40 = sadd.s32 %s39, 1
    %s41 = scalar_select %p38, %s39, %s40
    %p44 = pneg %p38
    %p45 = scmp.eq.s32.totalorder %s15, 1
    %p46 = por %p44, %p45
    %p47 = scmp.ne.s32.totalorder %s39, %s42
    %p48 = scmp.eq.s32.totalorder %s15, 0
    %p49 = por %p47, %p48
    %p50 = scmp.ne.s32.totalorder %s39, %s42
    %p51 = scmp.eq.s32.totalorder %s20, 1
    %p52 = por %p50, %p51
    %p53 = scmp.ne.s32.totalorder %s42, %s43
    %p54 = scmp.eq.s32.totalorder %s20, 0
    %p55 = por %p53, %p54
    %p56 = scmp.ne.s32.totalorder %s42, %s43
    %p57 = scmp.eq.s32.totalorder %s21, 1
    %p58 = por %p56, %p57
    %p60 = scmp.ne.s32.totalorder %s43, %s59
    %p61 = scmp.eq.s32.totalorder %s21, 0
    %p62 = por %p60, %p61
    %s63 = ssub.s32 %s23, 1
    %p64 = scmp.gt.s32.totalorder %s63, 0
    %s65 = scalar_select %p64, %s63, 0
    %s66 = ssub.s32 %s30, 1
    %p67 = scmp.gt.s32.totalorder %s66, 0
    %s68 = scalar_select %p67, %s66, 0
    %s69 = ssub.s32 %s22, %s34
    %s70 = ssub.s32 %s65, %s68
    %s71 = sor.u32 %s69, %s70
    %p72 = scmp.eq.s32.totalorder %s71, 0
    %s74 = sadd.s32 %s73, 1
    %s75 = scalar_select %p72, %s73, %s74
    %p78 = pneg %p72
    %p79 = scmp.eq.s32.totalorder %s15, 1
    %p80 = por %p78, %p79
    %p81 = scmp.ne.s32.totalorder %s73, %s76
    %p82 = scmp.eq.s32.totalorder %s15, 0
    %p83 = por %p81, %p82
    %p84 = scmp.ne.s32.totalorder %s73, %s76
    %p85 = scmp.eq.s32.totalorder %s20, 1
    %p86 = por %p84, %p85
    %p87 = scmp.ne.s32.totalorder %s76, %s77
    %p88 = scmp.eq.s32.totalorder %s20, 0
    %p89 = por %p87, %p88
    %p90 = scmp.ne.s32.totalorder %s76, %s77
    %p91 = scmp.eq.s32.totalorder %s21, 1
    %p92 = por %p90, %p91
    %p94 = scmp.ne.s32.totalorder %s77, %s93
    %p95 = scmp.eq.s32.totalorder %s21, 0
    %p96 = por %p94, %p95
    %s97 = sadd.s32 %s23, 1
    %p98 = scmp.lt.s32.totalorder %s97, 0
    %s99 = scalar_select %p98, %s97, 0
    %s100 = sadd.s32 %s30, 1
    %p101 = scmp.lt.s32.totalorder %s100, 0
    %s102 = scalar_select %p101, %s100, 0
    %s103 = ssub.s32 %s22, %s34
    %s104 = ssub.s32 %s99, %s102
    %s105 = sor.u32 %s103, %s104
    %p106 = scmp.eq.s32.totalorder %s105, 0
    %s108 = sadd.s32 %s107, 1
    %s109 = scalar_select %p106, %s107, %s108
    %p112 = pneg %p106
    %p113 = scmp.eq.s32.totalorder %s15, 1
    %p114 = por %p112, %p113
    %p115 = scmp.ne.s32.totalorder %s107, %s110
    %p116 = scmp.eq.s32.totalorder %s15, 0
    %p117 = por %p115, %p116
    %p118 = scmp.ne.s32.totalorder %s107, %s110
    %p119 = scmp.eq.s32.totalorder %s20, 1
    %p120 = por %p118, %p119
    %p121 = scmp.ne.s32.totalorder %s110, %s111
    %p122 = scmp.eq.s32.totalorder %s20, 0
    %p123 = por %p121, %p122
    %p124 = scmp.ne.s32.totalorder %s110, %s111
    %p125 = scmp.eq.s32.totalorder %s21, 1
    %p126 = por %p124, %p125
    %p128 = scmp.ne.s32.totalorder %s111, %s127
    %p129 = scmp.eq.s32.totalorder %s21, 0
    %p130 = por %p128, %p129
    %s132 = sadd.s32 %s131, 1
    %p135 = scmp.eq.s32.totalorder %s15, 1
    %p136 = scmp.ne.s32.totalorder %s131, %s133
    %p137 = scmp.eq.s32.totalorder %s15, 0
    %p138 = por %p136, %p137
    %p139 = scmp.ne.s32.totalorder %s131, %s133
    %p140 = scmp.eq.s32.totalorder %s20, 1
    %p141 = por %p139, %p140
    %p142 = scmp.ne.s32.totalorder %s133, %s134
    %p143 = scmp.eq.s32.totalorder %s20, 0
    %p144 = por %p142, %p143
    %p145 = scmp.ne.s32.totalorder %s133, %s134
    %p146 = scmp.eq.s32.totalorder %s21, 1
    %p147 = por %p145, %p146
    %p149 = scmp.ne.s32.totalorder %s134, %s148
    %p150 = scmp.eq.s32.totalorder %s21, 0
    %p151 = por %p149, %p150
    %s153 = sadd.s32 %s152, 1
    %p156 = scmp.eq.s32.totalorder %s15, 1
    %p157 = scmp.ne.s32.totalorder %s152, %s154
    %p158 = scmp.eq.s32.totalorder %s15, 0
    %p159 = por %p157, %p158
    %p160 = scmp.ne.s32.totalorder %s152, %s154
    %p161 = scmp.eq.s32.totalorder %s20, 1
    %p162 = por %p160, %p161
    %p163 = scmp.ne.s32.totalorder %s154, %s155
    %p164 = scmp.eq.s32.totalorder %s20, 0
    %p165 = por %p163, %p164
    %p166 = scmp.ne.s32.totalorder %s154, %s155
    %p167 = scmp.eq.s32.totalorder %s21, 1
    %p168 = por %p166, %p167
    %p170 = scmp.ne.s32.totalorder %s155, %s169
    %p171 = scmp.eq.s32.totalorder %s21, 0
    %p172 = por %p170, %p171
    %s174 = sadd.s32 %s173, 1
    %p177 = scmp.eq.s32.totalorder %s15, 1
    %p178 = scmp.ne.s32.totalorder %s173, %s175
    %p179 = scmp.eq.s32.totalorder %s15, 0
    %p180 = por %p178, %p179
    %p181 = scmp.ne.s32.totalorder %s173, %s175
    %p182 = scmp.eq.s32.totalorder %s20, 1
    %p183 = por %p181, %p182
    %p184 = scmp.ne.s32.totalorder %s175, %s176
    %p185 = scmp.eq.s32.totalorder %s20, 0
    %p186 = por %p184, %p185
    %p187 = scmp.ne.s32.totalorder %s175, %s176
    %p188 = scmp.eq.s32.totalorder %s21, 1
    %p189 = por %p187, %p188
    %p191 = scmp.ne.s32.totalorder %s176, %s190
    %p192 = scmp.eq.s32.totalorder %s21, 0
    %p193 = por %p191, %p192
    %s195 = sadd.s32 %s194, 1
    %p198 = scmp.eq.s32.totalorder %s15, 1
    %p199 = scmp.ne.s32.totalorder %s194, %s196
    %p200 = scmp.eq.s32.totalorder %s15, 0
    %p201 = por %p199, %p200
    %p202 = scmp.ne.s32.totalorder %s194, %s196
    %p203 = scmp.eq.s32.totalorder %s20, 1
    %p204 = por %p202, %p203
    %p205 = scmp.ne.s32.totalorder %s196, %s197
    %p206 = scmp.eq.s32.totalorder %s20, 0
    %p207 = por %p205, %p206
    %p208 = scmp.ne.s32.totalorder %s196, %s197
    %p209 = scmp.eq.s32.totalorder %s21, 1
    %p210 = por %p208, %p209
    %p212 = scmp.ne.s32.totalorder %s197, %s211
    %p213 = scmp.eq.s32.totalorder %s21, 0
    %p214 = por %p212, %p213
    %s215 = ssub.s32 %s22, %s34
    %s216 = ssub.s32 %s23, %s30
    %s217 = sor.u32 %s215, %s216
    %p218 = scmp.eq.s32.totalorder %s217, 0
    %s220 = sadd.s32 %s219, 1
    %s221 = scalar_select %p218, %s219, %s220
    %p224 = pneg %p218
    %p225 = scmp.eq.s32.totalorder %s15, 1
    %p226 = por %p224, %p225
    %p227 = scmp.ne.s32.totalorder %s219, %s222
    %p228 = scmp.eq.s32.totalorder %s15, 0
    %p229 = por %p227, %p228
    %p230 = scmp.ne.s32.totalorder %s219, %s222
    %p231 = scmp.eq.s32.totalorder %s20, 1
    %p232 = por %p230, %p231
    %p233 = scmp.ne.s32.totalorder %s222, %s223
    %p234 = scmp.eq.s32.totalorder %s20, 0
    %p235 = por %p233, %p234
    %p236 = scmp.ne.s32.totalorder %s222, %s223
    %p237 = scmp.eq.s32.totalorder %s21, 1
    %p238 = por %p236, %p237
    %p240 = scmp.ne.s32.totalorder %s223, %s239
    %p241 = scmp.eq.s32.totalorder %s21, 0
    %p242 = por %p240, %p241
    %s243 = ssub.s32 %s22, %s34
    %s244 = ssub.s32 %s23, %s30
    %s245 = sor.u32 %s243, %s244
    %p246 = scmp.eq.s32.totalorder %s245, 0
    %s248 = sadd.s32 %s247, 1
    %s249 = scalar_select %p246, %s247, %s248
    %p252 = pneg %p246
    %p253 = scmp.eq.s32.totalorder %s15, 1
    %p254 = por %p252, %p253
    %p255 = scmp.ne.s32.totalorder %s247, %s250
    %p256 = scmp.eq.s32.totalorder %s15, 0
    %p257 = por %p255, %p256
    %p258 = scmp.ne.s32.totalorder %s247, %s250
    %p259 = scmp.eq.s32.totalorder %s20, 1
    %p260 = por %p258, %p259
    %p261 = scmp.ne.s32.totalorder %s250, %s251
    %p262 = scmp.eq.s32.totalorder %s20, 0
    %p263 = por %p261, %p262
    %p264 = scmp.ne.s32.totalorder %s250, %s251
    %p265 = scmp.eq.s32.totalorder %s21, 1
    %p266 = por %p264, %p265
    %p268 = scmp.ne.s32.totalorder %s251, %s267
    %p269 = scmp.eq.s32.totalorder %s21, 0
    %p270 = por %p268, %p269
    %p271 = scmp.le.s32.totalorder 1, %s15
    %p272 = scmp.lt.s32.totalorder %s15, 3
    %p273 = pnand %p271, %p272
    %p274 = pneg %p273
    // Predicated region
    $region9: #{overflow_forward.10} parent=5 // pred_check
      _
    $region10: #{overflow_forward.10} parent=5 // pred_check_branch
      %276 = sbr.rel (%p273) target = $region12
    $region11: #{overflow_forward.10} parent=5 // pred_region
      %s277 = ssub.s32 %s15, 1
      // Predicated region
      $region13: #{overflow_forward.10} parent=11 // pred_check
        %p278 = pneg %p144
      $region14: #{overflow_forward.10} parent=11 // pred_check_branch
        %280 = sbr.rel (%p278) target = $region16
      $region15: #{overflow_forward.10} parent=11 // pred_region
        _
      $region16: #{overflow_forward.10} parent=11 // pred_fallthru
        _
      // Predicated region
      $region17: #{overflow_forward.10} parent=11 // pred_check
        %p281 = pneg %p165
      $region18: #{overflow_forward.10} parent=11 // pred_check_branch
        %283 = sbr.rel (%p281) target = $region20
      $region19: #{overflow_forward.10} parent=11 // pred_region
        _
      $region20: #{overflow_forward.10} parent=11 // pred_fallthru
        _
      // Predicated region
      $region21: #{overflow_forward.10} parent=11 // pred_check
        %p284 = pneg %p186
      $region22: #{overflow_forward.10} parent=11 // pred_check_branch
        %286 = sbr.rel (%p284) target = $region24
      $region23: #{overflow_forward.10} parent=11 // pred_region
        _
      $region24: #{overflow_forward.10} parent=11 // pred_fallthru
        _
      // Predicated region
      $region25: #{overflow_forward.10} parent=11 // pred_check
        %p287 = pneg %p207
      $region26: #{overflow_forward.10} parent=11 // pred_check_branch
        %289 = sbr.rel (%p287) target = $region28
      $region27: #{overflow_forward.10} parent=11 // pred_region
        _
      $region28: #{overflow_forward.10} parent=11 // pred_fallthru
        _
    $region12: #{overflow_forward.10} parent=5 // pred_fallthru
      _
    %p290 = scmp.lt.s32.totalorder %s15, 2
    // Predicated region
    $region29: #{overflow_forward.10} parent=5 // pred_check
      %p291 = pneg %p290
    $region30: #{overflow_forward.10} parent=5 // pred_check_branch
      %293 = sbr.rel (%p291) target = $region32
    $region31: #{overflow_forward.10} parent=5 // pred_region
      // Predicated region
      $region33: #{overflow_forward.10} parent=31 // pred_check
        %p294 = pneg %p49
      $region34: #{overflow_forward.10} parent=31 // pred_check_branch
        %296 = sbr.rel (%p294) target = $region36
      $region35: #{overflow_forward.10} parent=31 // pred_region
        %p297 = scmp.lt.s32.totalorder %s22, 1
        %s298 = scalar_select %p297, %s22, 1
        %p299 = scmp.lt.s32.totalorder %s23, 0
        %s300 = scalar_select %p299, %s23, 0
        %s301 = sadd.s32 %s300, %s298
        %s302 = smul.addr %s301, 4
        %s303 = scalar_lea.vmem %s0, %s302
      $region36: #{overflow_forward.10} parent=31 // pred_fallthru
        _
      // Predicated region
      $region37: #{overflow_forward.10} parent=31 // pred_check
        %p304 = pneg %p83
      $region38: #{overflow_forward.10} parent=31 // pred_check_branch
        %306 = sbr.rel (%p304) target = $region40
      $region39: #{overflow_forward.10} parent=31 // pred_region
        %s307 = ssub.s32 %s23, 1
        %p308 = scmp.gt.s32.totalorder %s307, 0
        %s309 = scalar_select %p308, %s307, 0
        %p310 = scmp.lt.s32.totalorder %s22, 1
        %s311 = scalar_select %p310, %s22, 1
        %p312 = scmp.lt.s32.totalorder %s309, 0
        %s313 = scalar_select %p312, %s309, 0
        %s314 = sadd.s32 %s313, %s311
        %s315 = smul.addr %s314, 4
        %s316 = scalar_lea.vmem %s1, %s315
        %s317 = ssub.s32 %s23, 1
        %p318 = scmp.gt.s32.totalorder %s317, 0
        %s319 = scalar_select %p318, %s317, 0
      $region40: #{overflow_forward.10} parent=31 // pred_fallthru
        _
      // Predicated region
      $region41: #{overflow_forward.10} parent=31 // pred_check
        %p320 = pneg %p117
      $region42: #{overflow_forward.10} parent=31 // pred_check_branch
        %322 = sbr.rel (%p320) target = $region44
      $region43: #{overflow_forward.10} parent=31 // pred_region
        %s323 = sadd.s32 %s23, 1
        %p324 = scmp.lt.s32.totalorder %s323, 0
        %s325 = scalar_select %p324, %s323, 0
        %p326 = scmp.lt.s32.totalorder %s22, 1
        %s327 = scalar_select %p326, %s22, 1
        %p328 = scmp.lt.s32.totalorder %s325, 0
        %s329 = scalar_select %p328, %s325, 0
        %s330 = sadd.s32 %s329, %s327
        %s331 = smul.addr %s330, 4
        %s332 = scalar_lea.vmem %s2, %s331
        %s333 = sadd.s32 %s23, 1
        %p334 = scmp.lt.s32.totalorder %s333, 0
        %s335 = scalar_select %p334, %s333, 0
      $region44: #{overflow_forward.10} parent=31 // pred_fallthru
        _
    $region32: #{overflow_forward.10} parent=5 // pred_fallthru
      _
    %p336 = scmp.le.s32.totalorder 1, %s15
    %p337 = scmp.lt.s32.totalorder %s15, 3
    %p338 = pnand %p336, %p337
    %p339 = pneg %p338
    // Predicated region
    $region45: #{overflow_forward.10} parent=5 // pred_check
      _
    $region46: #{overflow_forward.10} parent=5 // pred_check_branch
      %341 = sbr.rel (%p338) target = $region48
    $region47: #{overflow_forward.10} parent=5 // pred_region
      %s342 = ssub.s32 %s15, 1
      %p343 = scmp.lt.s32.totalorder %s24, 1
      %s344 = scalar_select %p343, %s24, 1
      %p345 = scmp.lt.s32.totalorder %s25, 0
      %s346 = scalar_select %p345, %s25, 0
      %s347 = sadd.s32 %s346, %s344
      %s348 = smul.addr %s347, 4
      %s349 = scalar_lea.vmem %s0, %s348
      %p350 = pneg %p55
      %p351 = pneg %p52
      %s352 = ssub.s32 %s25, 1
      %p353 = scmp.gt.s32.totalorder %s352, 0
      %s354 = scalar_select %p353, %s352, 0
      %p355 = scmp.lt.s32.totalorder %s24, 1
      %s356 = scalar_select %p355, %s24, 1
      %p357 = scmp.lt.s32.totalorder %s354, 0
      %s358 = scalar_select %p357, %s354, 0
      %s359 = sadd.s32 %s358, %s356
      %s360 = smul.addr %s359, 4
      %s361 = scalar_lea.vmem %s1, %s360
      %p362 = pneg %p89
      %p363 = pneg %p86
      %s364 = sadd.s32 %s25, 1
      %p365 = scmp.lt.s32.totalorder %s364, 0
      %s366 = scalar_select %p365, %s364, 0
      %p367 = scmp.lt.s32.totalorder %s24, 1
      %s368 = scalar_select %p367, %s24, 1
      %p369 = scmp.lt.s32.totalorder %s366, 0
      %s370 = scalar_select %p369, %s366, 0
      %s371 = sadd.s32 %s370, %s368
      %s372 = smul.addr %s371, 4
      %s373 = scalar_lea.vmem %s2, %s372
      %p374 = pneg %p123
      %p375 = pneg %p120
      %p376 = pneg %p144
      %p377 = pneg %p141
      %p378 = pneg %p165
      %p379 = pneg %p162
      %p380 = pneg %p186
      %p381 = pneg %p183
      %p382 = pneg %p207
      %p383 = pneg %p204
      %p384 = pneg %p235
      %p385 = pneg %p232
      %p386 = scmp.lt.s32.totalorder %s24, 1
      %s387 = scalar_select %p386, %s24, 1
      %p388 = scmp.lt.s32.totalorder %s25, 0
      %s389 = scalar_select %p388, %s25, 0
      %s390 = sadd.s32 %s389, %s387
      %s391 = smul.addr %s390, 4
      %s392 = scalar_lea.vmem %s7, %s391
      %p393 = pneg %p263
      %p394 = pneg %p260
      %p395 = scmp.lt.s32.totalorder %s24, 1
      %s396 = scalar_select %p395, %s24, 1
      %p397 = scmp.lt.s32.totalorder %s25, 0
      %s398 = scalar_select %p397, %s25, 0
      %s399 = sadd.s32 %s398, %s396
      %s400 = smul.addr %s399, 2
      %s401 = scalar_lea.vmem %s8, %s400
      %p402 = scmp.lt.s32.totalorder %s24, 1
      %s403 = scalar_select %p402, %s24, 1
      %p404 = scmp.lt.s32.totalorder %s25, 0
      %s405 = scalar_select %p404, %s25, 0
      %s406 = sadd.s32 %s405, %s403
      %s407 = smul.addr %s406, 4
      %s408 = scalar_lea.vmem %s0, %s407
      %s409 = ssub.s32 %s25, 1
      %p410 = scmp.gt.s32.totalorder %s409, 0
      %s411 = scalar_select %p410, %s409, 0
      %p412 = scmp.lt.s32.totalorder %s24, 1
      %s413 = scalar_select %p412, %s24, 1
      %p414 = scmp.lt.s32.totalorder %s411, 0
      %s415 = scalar_select %p414, %s411, 0
      %s416 = sadd.s32 %s415, %s413
      %s417 = smul.addr %s416, 4
      %s418 = scalar_lea.vmem %s1, %s417
      %s419 = ssub.s32 %s25, 1
      %p420 = scmp.gt.s32.totalorder %s419, 0
      %s421 = scalar_select %p420, %s419, 0
      %s422 = sadd.s32 %s25, 1
      %p423 = scmp.lt.s32.totalorder %s422, 0
      %s424 = scalar_select %p423, %s422, 0
      %p425 = scmp.lt.s32.totalorder %s24, 1
      %s426 = scalar_select %p425, %s24, 1
      %p427 = scmp.lt.s32.totalorder %s424, 0
      %s428 = scalar_select %p427, %s424, 0
      %s429 = sadd.s32 %s428, %s426
      %s430 = smul.addr %s429, 4
      %s431 = scalar_lea.vmem %s2, %s430
      %s432 = sadd.s32 %s25, 1
      %p433 = scmp.lt.s32.totalorder %s432, 0
      %s434 = scalar_select %p433, %s432, 0
      %p435 = scmp.lt.s32.totalorder %s24, 1
      %s436 = scalar_select %p435, %s24, 1
      %p437 = scmp.lt.s32.totalorder %s25, 0
      %s438 = scalar_select %p437, %s25, 0
      %s439 = sadd.s32 %s438, %s436
      %s440 = smul.addr %s439, 4
      %s441 = scalar_lea.vmem %s7, %s440
      %p442 = scmp.lt.s32.totalorder %s24, 1
      %s443 = scalar_select %p442, %s24, 1
      %p444 = scmp.lt.s32.totalorder %s25, 0
      %s445 = scalar_select %p444, %s25, 0
      %s446 = sadd.s32 %s445, %s443
      %s447 = smul.addr %s446, 2
      %s448 = scalar_lea.vmem %s8, %s447
      %s450 = smul.u32 %s25, 8
      %v451 = vld [vmem:[%s418] sm:$0xf]
      %v452 = vunpack.c.l.bf16 %v451
      %v453 = vld [vmem:[%s408] sm:$0xf]
      %v454 = vunpack.c.l.bf16 %v453
      %v455 = vld [vmem:[%s431] sm:$0xf]
      %v456 = vunpack.c.l.bf16 %v455
      %v457 = vld [vmem:[%s5] sm:$0x1]
      %v459 = vlaneseq
      %v460 = vshrl.u32 %v459, 7
      %v461 = vsub.s32 0, %v460
      %v462 = vrot.slane %v457, %v461
      %v464 = vmul.f32 %v452, %v462
      %v465 = vmul.f32 %v454, %v462
      %v466 = vmul.f32 %v456, %v462
      %v467 = vld [vmem:[%s6] sm:$0x1]
      %v469 = vlaneseq
      %v470 = vshrl.u32 %v469, 7
      %v471 = vsub.s32 0, %v470
      %v472 = vrot.slane %v467, %v471
      %v474 = vadd.f32 %v464, %v472
      %v475 = vadd.f32 %v465, %v472
      %v476 = vadd.f32 %v466, %v472
      %v477 = vmax.f32 %v474, 0.0
      %v478 = vmax.f32 %v475, 0.0
      %v479 = vmax.f32 %v476, 0.0
      %s480 = ssub.s32 %s450, 8
      %v481 = vlaneseq
      %v482 = vshrl.u32 %v481, 7
      %v483 = vadd.s32 %v482, 8
      %v484 = vadd.s32 %v482, 16
      %v485 = vstv %s480
      %v486 = vadd.s32 %v485, %v482
      %v487 = vadd.s32 %v485, %v483
      %v488 = vadd.s32 %v485, %v484
      %vm489 = vcmp.ge.s32.totalorder %v486, 0
      %vm490 = vcmp.ge.s32.totalorder %v487, 0
      %vm491 = vcmp.ge.s32.totalorder %v488, 0
      %vm492 = vcmp.lt.s32.totalorder %v486, 8
      %vm493 = vcmp.lt.s32.totalorder %v487, 8
      %vm494 = vcmp.lt.s32.totalorder %v488, 8
      %vm495 = vmand %vm489, %vm492
      %vm496 = vmand %vm490, %vm493
      %vm497 = vmand %vm491, %vm494
      %v498 = vsel %vm495, 1, 0
      %v499 = vsel %vm496, 1, 0
      %v500 = vsel %vm497, 1, 0
      %vm501 = vcmp.eq.s32.totalorder %v498, 1
      %vm502 = vcmp.eq.s32.totalorder %v499, 1
      %vm503 = vcmp.eq.s32.totalorder %v500, 1
      %v504 = vsel %vm501, %v477, 0.0
      %v505 = vsel %vm502, %v478, 0.0
      %v506 = vsel %vm503, %v479, 0.0
      %v507 = vrot.slane %v504, 6
      %v508 = vrot.slane %v505, 6
      %vm509 = vcmp.lt.s32.totalorder %v482, 2
      %v510 = vsel %vm509, %v507, %v508
      %v511 = vpack.c.bf16 %v510, %v510
      %v512 = vld [vmem:[%s3] sm:$0xf]
      %v513 = vld [vmem:[%s3 + $0x4] sm:$0xf]
      %v514 = vld [vmem:[%s3 + $0x8] sm:$0xf]
      %v515 = vld [vmem:[%s3 + $0xc] sm:$0xf]
      %v516 = vld [vmem:[%s3 + $0x10] sm:$0xf]
      %v517 = vld [vmem:[%s3 + $0x14] sm:$0xf]
      %v518 = vld [vmem:[%s3 + $0x18] sm:$0xf]
      %v519 = vld [vmem:[%s3 + $0x1c] sm:$0xf]
      %v520 = vld [vmem:[%s3 + $0x20] sm:$0xf]
      %v521 = vld [vmem:[%s3 + $0x24] sm:$0xf]
      %v522 = vld [vmem:[%s3 + $0x28] sm:$0xf]
      %v523 = vld [vmem:[%s3 + $0x2c] sm:$0xf]
      %v524 = vld [vmem:[%s3 + $0x30] sm:$0xf]
      %v525 = vld [vmem:[%s3 + $0x34] sm:$0xf]
      %v526 = vld [vmem:[%s3 + $0x38] sm:$0xf]
      %v527 = vld [vmem:[%s3 + $0x3c] sm:$0xf]
      %v528 = vrot.slane %v504, 7
      %v529 = vrot.slane %v505, 7
      %vm530 = vcmp.lt.s32.totalorder %v482, 1
      %v531 = vsel %vm530, %v528, %v529
      %v532 = vpack.c.bf16 %v531, %v531
      %s533 = scalar_lea.vmem %s3, 64
      %v534 = vld [vmem:[%s533] sm:$0xf]
      %v535 = vld [vmem:[%s533 + $0x4] sm:$0xf]
      %v536 = vld [vmem:[%s533 + $0x8] sm:$0xf]
      %v537 = vld [vmem:[%s533 + $0xc] sm:$0xf]
      %v538 = vld [vmem:[%s533 + $0x10] sm:$0xf]
      %v539 = vld [vmem:[%s533 + $0x14] sm:$0xf]
      %v540 = vld [vmem:[%s533 + $0x18] sm:$0xf]
      %v541 = vld [vmem:[%s533 + $0x1c] sm:$0xf]
      %v542 = vld [vmem:[%s533 + $0x20] sm:$0xf]
      %v543 = vld [vmem:[%s533 + $0x24] sm:$0xf]
      %v544 = vld [vmem:[%s533 + $0x28] sm:$0xf]
      %v545 = vld [vmem:[%s533 + $0x2c] sm:$0xf]
      %v546 = vld [vmem:[%s533 + $0x30] sm:$0xf]
      %v547 = vld [vmem:[%s533 + $0x34] sm:$0xf]
      %v548 = vld [vmem:[%s533 + $0x38] sm:$0xf]
      %v549 = vld [vmem:[%s533 + $0x3c] sm:$0xf]
      %v566 = vunpack.c.l.b16 %v534
      %v567 = vunpack.c.l.b16 %v535
      %v568 = vunpack.c.l.b16 %v536
      %v569 = vunpack.c.l.b16 %v537
      %v570 = vunpack.c.l.b16 %v538
      %v571 = vunpack.c.l.b16 %v539
      %v572 = vunpack.c.l.b16 %v540
      %v573 = vunpack.c.l.b16 %v541
      %v574 = vunpack.c.l.b16 %v542
      %v575 = vunpack.c.l.b16 %v543
      %v576 = vunpack.c.l.b16 %v544
      %v577 = vunpack.c.l.b16 %v545
      %v578 = vunpack.c.l.b16 %v546
      %v579 = vunpack.c.l.b16 %v547
      %v580 = vunpack.c.l.b16 %v548
      %v581 = vunpack.c.l.b16 %v549
      %v582 = vpack.c.b16 %v567, %v566
      %v583 = vpack.c.b16 %v569, %v568
      %v584 = vpack.c.b16 %v571, %v570
      %v585 = vpack.c.b16 %v573, %v572
      %v586 = vpack.c.b16 %v575, %v574
      %v587 = vpack.c.b16 %v577, %v576
      %v588 = vpack.c.b16 %v579, %v578
      %v589 = vpack.c.b16 %v581, %v580
      %598 = vmatprep.subr.bf16.mxu0 0
      %599 = vmatpush1.bf16.msra.mxu0 %v589
      %600 = vmatprep.subr.bf16.mxu0 0
      %601 = vmatpush1.bf16.msra.mxu0 %v588
      %602 = vmatprep.subr.bf16.mxu0 0
      %603 = vmatpush1.bf16.msra.mxu0 %v587
      %604 = vmatprep.subr.bf16.mxu0 0
      %605 = vmatpush1.bf16.msra.mxu0 %v586
      %606 = vmatprep.subr.bf16.mxu0 0
      %607 = vmatpush1.bf16.msra.mxu0 %v585
      %608 = vmatprep.subr.bf16.mxu0 0
      %609 = vmatpush1.bf16.msra.mxu0 %v584
      %610 = vmatprep.subr.bf16.mxu0 0
      %611 = vmatpush1.bf16.msra.mxu0 %v583
      %612 = vmatprep.subr.bf16.mxu0 0
      %613 = vmatpush1.bf16.msra.mxu0 %v582
      %614 = vmatprep.subr.bf16.mxu0 0
      %615 = vmatpush2.bf16.msra.mxu0 0
      %616 = vmatprep.subr.bf16.mxu0 0
      %617 = vmatpush2.bf16.msra.mxu0 0
      %618 = vmatprep.subr.bf16.mxu0 0
      %619 = vmatpush2.bf16.msra.mxu0 0
      %620 = vmatprep.subr.bf16.mxu0 0
      %621 = vmatpush2.bf16.msra.mxu0 0
      %622 = vmatprep.subr.bf16.mxu0 0
      %623 = vmatpush2.bf16.msra.mxu0 0
      %624 = vmatprep.subr.bf16.mxu0 0
      %625 = vmatpush2.bf16.msra.mxu0 0
      %626 = vmatprep.subr.bf16.mxu0 0
      %627 = vmatpush2.bf16.msra.mxu0 0
      %628 = vmatprep.subr.bf16.mxu0 0
      %629 = vmatpush2.bf16.msra.mxu0 0
      %630 = vmatprep.mubr.bf16.mxu0 0
      %631 = vmatmul.mubr.bf16.gmra.mxu0 %v532
      %v632 = vpop.f32.mrf.mxu0
      %v633 = vadd.f32 0.0, %v632
      %v634 = vpop.f32.mrf.mxu0
      %v635 = vpop.f32.mrf.mxu0
      %v636 = vpop.f32.mrf.mxu0
      %637 = vdwg.mxu0
      %v654 = vunpack.c.l.b16 %v512
      %v655 = vunpack.c.l.b16 %v513
      %v656 = vunpack.c.l.b16 %v514
      %v657 = vunpack.c.l.b16 %v515
      %v658 = vunpack.c.l.b16 %v516
      %v659 = vunpack.c.l.b16 %v517
      %v660 = vunpack.c.l.b16 %v518
      %v661 = vunpack.c.l.b16 %v519
      %v662 = vunpack.c.l.b16 %v520
      %v663 = vunpack.c.l.b16 %v521
      %v664 = vunpack.c.l.b16 %v522
      %v665 = vunpack.c.l.b16 %v523
      %v666 = vunpack.c.l.b16 %v524
      %v667 = vunpack.c.l.b16 %v525
      %v668 = vunpack.c.l.b16 %v526
      %v669 = vunpack.c.l.b16 %v527
      %v670 = vpack.c.b16 %v655, %v654
      %v671 = vpack.c.b16 %v657, %v656
      %v672 = vpack.c.b16 %v659, %v658
      %v673 = vpack.c.b16 %v661, %v660
      %v674 = vpack.c.b16 %v663, %v662
      %v675 = vpack.c.b16 %v665, %v664
      %v676 = vpack.c.b16 %v667, %v666
      %v677 = vpack.c.b16 %v669, %v668
      %686 = vmatprep.subr.bf16.mxu0 0
      %687 = vmatpush1.bf16.msra.mxu0 %v677
      %688 = vmatprep.subr.bf16.mxu0 0
      %689 = vmatpush1.bf16.msra.mxu0 %v676
      %690 = vmatprep.subr.bf16.mxu0 0
      %691 = vmatpush1.bf16.msra.mxu0 %v675
      %692 = vmatprep.subr.bf16.mxu0 0
      %693 = vmatpush1.bf16.msra.mxu0 %v674
      %694 = vmatprep.subr.bf16.mxu0 0
      %695 = vmatpush1.bf16.msra.mxu0 %v673
      %696 = vmatprep.subr.bf16.mxu0 0
      %697 = vmatpush1.bf16.msra.mxu0 %v672
      %698 = vmatprep.subr.bf16.mxu0 0
      %699 = vmatpush1.bf16.msra.mxu0 %v671
      %700 = vmatprep.subr.bf16.mxu0 0
      %701 = vmatpush1.bf16.msra.mxu0 %v670
      %702 = vmatprep.subr.bf16.mxu0 0
      %703 = vmatpush2.bf16.msra.mxu0 0
      %704 = vmatprep.subr.bf16.mxu0 0
      %705 = vmatpush2.bf16.msra.mxu0 0
      %706 = vmatprep.subr.bf16.mxu0 0
      %707 = vmatpush2.bf16.msra.mxu0 0
      %708 = vmatprep.subr.bf16.mxu0 0
      %709 = vmatpush2.bf16.msra.mxu0 0
      %710 = vmatprep.subr.bf16.mxu0 0
      %711 = vmatpush2.bf16.msra.mxu0 0
      %712 = vmatprep.subr.bf16.mxu0 0
      %713 = vmatpush2.bf16.msra.mxu0 0
      %714 = vmatprep.subr.bf16.mxu0 0
      %715 = vmatpush2.bf16.msra.mxu0 0
      %716 = vmatprep.subr.bf16.mxu0 0
      %717 = vmatpush2.bf16.msra.mxu0 0
      %718 = vmatprep.mubr.bf16.mxu0 0
      %719 = vmatmul.mubr.bf16.gmra.mxu0 %v511
      %v720 = vpop.f32.mrf.mxu0
      %v721 = vadd.f32 %v633, %v720
      %v722 = vpop.f32.mrf.mxu0
      %v723 = vpop.f32.mrf.mxu0
      %v724 = vpop.f32.mrf.mxu0
      %725 = vdwg.mxu0
      %v726 = vpack.c.bf16 %v505, %v505
      %s727 = scalar_lea.vmem %s3, 128
      %v728 = vld [vmem:[%s727] sm:$0xf]
      %v729 = vld [vmem:[%s727 + $0x4] sm:$0xf]
      %v730 = vld [vmem:[%s727 + $0x8] sm:$0xf]
      %v731 = vld [vmem:[%s727 + $0xc] sm:$0xf]
      %v732 = vld [vmem:[%s727 + $0x10] sm:$0xf]
      %v733 = vld [vmem:[%s727 + $0x14] sm:$0xf]
      %v734 = vld [vmem:[%s727 + $0x18] sm:$0xf]
      %v735 = vld [vmem:[%s727 + $0x1c] sm:$0xf]
      %v736 = vld [vmem:[%s727 + $0x20] sm:$0xf]
      %v737 = vld [vmem:[%s727 + $0x24] sm:$0xf]
      %v738 = vld [vmem:[%s727 + $0x28] sm:$0xf]
      %v739 = vld [vmem:[%s727 + $0x2c] sm:$0xf]
      %v740 = vld [vmem:[%s727 + $0x30] sm:$0xf]
      %v741 = vld [vmem:[%s727 + $0x34] sm:$0xf]
      %v742 = vld [vmem:[%s727 + $0x38] sm:$0xf]
      %v743 = vld [vmem:[%s727 + $0x3c] sm:$0xf]
      %v760 = vunpack.c.l.b16 %v728
      %v761 = vunpack.c.l.b16 %v729
      %v762 = vunpack.c.l.b16 %v730
      %v763 = vunpack.c.l.b16 %v731
      %v764 = vunpack.c.l.b16 %v732
      %v765 = vunpack.c.l.b16 %v733
      %v766 = vunpack.c.l.b16 %v734
      %v767 = vunpack.c.l.b16 %v735
      %v768 = vunpack.c.l.b16 %v736
      %v769 = vunpack.c.l.b16 %v737
      %v770 = vunpack.c.l.b16 %v738
      %v771 = vunpack.c.l.b16 %v739
      %v772 = vunpack.c.l.b16 %v740
      %v773 = vunpack.c.l.b16 %v741
      %v774 = vunpack.c.l.b16 %v742
      %v775 = vunpack.c.l.b16 %v743
      %v776 = vpack.c.b16 %v761, %v760
      %v777 = vpack.c.b16 %v763, %v762
      %v778 = vpack.c.b16 %v765, %v764
      %v779 = vpack.c.b16 %v767, %v766
      %v780 = vpack.c.b16 %v769, %v768
      %v781 = vpack.c.b16 %v771, %v770
      %v782 = vpack.c.b16 %v773, %v772
      %v783 = vpack.c.b16 %v775, %v774
      %792 = vmatprep.subr.bf16.mxu0 0
      %793 = vmatpush1.bf16.msra.mxu0 %v783
      %794 = vmatprep.subr.bf16.mxu0 0
      %795 = vmatpush1.bf16.msra.mxu0 %v782
      %796 = vmatprep.subr.bf16.mxu0 0
      %797 = vmatpush1.bf16.msra.mxu0 %v781
      %798 = vmatprep.subr.bf16.mxu0 0
      %799 = vmatpush1.bf16.msra.mxu0 %v780
      %800 = vmatprep.subr.bf16.mxu0 0
      %801 = vmatpush1.bf16.msra.mxu0 %v779
      %802 = vmatprep.subr.bf16.mxu0 0
      %803 = vmatpush1.bf16.msra.mxu0 %v778
      %804 = vmatprep.subr.bf16.mxu0 0
      %805 = vmatpush1.bf16.msra.mxu0 %v777
      %806 = vmatprep.subr.bf16.mxu0 0
      %807 = vmatpush1.bf16.msra.mxu0 %v776
      %808 = vmatprep.subr.bf16.mxu0 0
      %809 = vmatpush2.bf16.msra.mxu0 0
      %810 = vmatprep.subr.bf16.mxu0 0
      %811 = vmatpush2.bf16.msra.mxu0 0
      %812 = vmatprep.subr.bf16.mxu0 0
      %813 = vmatpush2.bf16.msra.mxu0 0
      %814 = vmatprep.subr.bf16.mxu0 0
      %815 = vmatpush2.bf16.msra.mxu0 0
      %816 = vmatprep.subr.bf16.mxu0 0
      %817 = vmatpush2.bf16.msra.mxu0 0
      %818 = vmatprep.subr.bf16.mxu0 0
      %819 = vmatpush2.bf16.msra.mxu0 0
      %820 = vmatprep.subr.bf16.mxu0 0
      %821 = vmatpush2.bf16.msra.mxu0 0
      %822 = vmatprep.subr.bf16.mxu0 0
      %823 = vmatpush2.bf16.msra.mxu0 0
      %824 = vmatprep.mubr.bf16.mxu0 0
      %825 = vmatmul.mubr.bf16.gmra.mxu0 %v726
      %v826 = vpop.f32.mrf.mxu0
      %v827 = vadd.f32 0.0, %v826
      %v828 = vpop.f32.mrf.mxu0
      %v829 = vpop.f32.mrf.mxu0
      %v830 = vpop.f32.mrf.mxu0
      %831 = vdwg.mxu0
      %v832 = vadd.f32 %v721, %v827
      %v833 = vrot.slane %v505, 1
      %v834 = vrot.slane %v506, 1
      %vm835 = vcmp.lt.s32.totalorder %v482, 7
      %v836 = vsel %vm835, %v833, %v834
      %v837 = vpack.c.bf16 %v836, %v836
      %s838 = scalar_lea.vmem %s3, 192
      %v839 = vld [vmem:[%s838] sm:$0xf]
      %v840 = vld [vmem:[%s838 + $0x4] sm:$0xf]
      %v841 = vld [vmem:[%s838 + $0x8] sm:$0xf]
      %v842 = vld [vmem:[%s838 + $0xc] sm:$0xf]
      %v843 = vld [vmem:[%s838 + $0x10] sm:$0xf]
      %v844 = vld [vmem:[%s838 + $0x14] sm:$0xf]
      %v845 = vld [vmem:[%s838 + $0x18] sm:$0xf]
      %v846 = vld [vmem:[%s838 + $0x1c] sm:$0xf]
      %v847 = vld [vmem:[%s838 + $0x20] sm:$0xf]
      %v848 = vld [vmem:[%s838 + $0x24] sm:$0xf]
      %v849 = vld [vmem:[%s838 + $0x28] sm:$0xf]
      %v850 = vld [vmem:[%s838 + $0x2c] sm:$0xf]
      %v851 = vld [vmem:[%s838 + $0x30] sm:$0xf]
      %v852 = vld [vmem:[%s838 + $0x34] sm:$0xf]
      %v853 = vld [vmem:[%s838 + $0x38] sm:$0xf]
      %v854 = vld [vmem:[%s838 + $0x3c] sm:$0xf]
      %v871 = vunpack.c.l.b16 %v839
      %v872 = vunpack.c.l.b16 %v840
      %v873 = vunpack.c.l.b16 %v841
      %v874 = vunpack.c.l.b16 %v842
      %v875 = vunpack.c.l.b16 %v843
      %v876 = vunpack.c.l.b16 %v844
      %v877 = vunpack.c.l.b16 %v845
      %v878 = vunpack.c.l.b16 %v846
      %v879 = vunpack.c.l.b16 %v847
      %v880 = vunpack.c.l.b16 %v848
      %v881 = vunpack.c.l.b16 %v849
      %v882 = vunpack.c.l.b16 %v850
      %v883 = vunpack.c.l.b16 %v851
      %v884 = vunpack.c.l.b16 %v852
      %v885 = vunpack.c.l.b16 %v853
      %v886 = vunpack.c.l.b16 %v854
      %v887 = vpack.c.b16 %v872, %v871
      %v888 = vpack.c.b16 %v874, %v873
      %v889 = vpack.c.b16 %v876, %v875
      %v890 = vpack.c.b16 %v878, %v877
      %v891 = vpack.c.b16 %v880, %v879
      %v892 = vpack.c.b16 %v882, %v881
      %v893 = vpack.c.b16 %v884, %v883
      %v894 = vpack.c.b16 %v886, %v885
      %903 = vmatprep.subr.bf16.mxu0 0
      %904 = vmatpush1.bf16.msra.mxu0 %v894
      %905 = vmatprep.subr.bf16.mxu0 0
      %906 = vmatpush1.bf16.msra.mxu0 %v893
      %907 = vmatprep.subr.bf16.mxu0 0
      %908 = vmatpush1.bf16.msra.mxu0 %v892
      %909 = vmatprep.subr.bf16.mxu0 0
      %910 = vmatpush1.bf16.msra.mxu0 %v891
      %911 = vmatprep.subr.bf16.mxu0 0
      %912 = vmatpush1.bf16.msra.mxu0 %v890
      %913 = vmatprep.subr.bf16.mxu0 0
      %914 = vmatpush1.bf16.msra.mxu0 %v889
      %915 = vmatprep.subr.bf16.mxu0 0
      %916 = vmatpush1.bf16.msra.mxu0 %v888
      %917 = vmatprep.subr.bf16.mxu0 0
      %918 = vmatpush1.bf16.msra.mxu0 %v887
      %919 = vmatprep.subr.bf16.mxu0 0
      %920 = vmatpush2.bf16.msra.mxu0 0
      %921 = vmatprep.subr.bf16.mxu0 0
      %922 = vmatpush2.bf16.msra.mxu0 0
      %923 = vmatprep.subr.bf16.mxu0 0
      %924 = vmatpush2.bf16.msra.mxu0 0
      %925 = vmatprep.subr.bf16.mxu0 0
      %926 = vmatpush2.bf16.msra.mxu0 0
      %927 = vmatprep.subr.bf16.mxu0 0
      %928 = vmatpush2.bf16.msra.mxu0 0
      %929 = vmatprep.subr.bf16.mxu0 0
      %930 = vmatpush2.bf16.msra.mxu0 0
      %931 = vmatprep.subr.bf16.mxu0 0
      %932 = vmatpush2.bf16.msra.mxu0 0
      %933 = vmatprep.subr.bf16.mxu0 0
      %934 = vmatpush2.bf16.msra.mxu0 0
      %935 = vmatprep.mubr.bf16.mxu0 0
      %936 = vmatmul.mubr.bf16.gmra.mxu0 %v837
      %v937 = vpop.f32.mrf.mxu0
      %v938 = vadd.f32 0.0, %v937
      %v939 = vpop.f32.mrf.mxu0
      %v940 = vpop.f32.mrf.mxu0
      %v941 = vpop.f32.mrf.mxu0
      %942 = vdwg.mxu0
      %v943 = vadd.f32 %v832, %v938
      %v944 = vrot.slane %v505, 2
      %v945 = vrot.slane %v506, 2
      %vm946 = vcmp.lt.s32.totalorder %v482, 6
      %v947 = vsel %vm946, %v944, %v945
      %v948 = vpack.c.bf16 %v947, %v947
      %s949 = scalar_lea.vmem %s3, 256
      %v950 = vld [vmem:[%s949] sm:$0xf]
      %v951 = vld [vmem:[%s949 + $0x4] sm:$0xf]
      %v952 = vld [vmem:[%s949 + $0x8] sm:$0xf]
      %v953 = vld [vmem:[%s949 + $0xc] sm:$0xf]
      %v954 = vld [vmem:[%s949 + $0x10] sm:$0xf]
      %v955 = vld [vmem:[%s949 + $0x14] sm:$0xf]
      %v956 = vld [vmem:[%s949 + $0x18] sm:$0xf]
      %v957 = vld [vmem:[%s949 + $0x1c] sm:$0xf]
      %v958 = vld [vmem:[%s949 + $0x20] sm:$0xf]
      %v959 = vld [vmem:[%s949 + $0x24] sm:$0xf]
      %v960 = vld [vmem:[%s949 + $0x28] sm:$0xf]
      %v961 = vld [vmem:[%s949 + $0x2c] sm:$0xf]
      %v962 = vld [vmem:[%s949 + $0x30] sm:$0xf]
      %v963 = vld [vmem:[%s949 + $0x34] sm:$0xf]
      %v964 = vld [vmem:[%s949 + $0x38] sm:$0xf]
      %v965 = vld [vmem:[%s949 + $0x3c] sm:$0xf]
      %v982 = vunpack.c.l.b16 %v950
      %v983 = vunpack.c.l.b16 %v951
      %v984 = vunpack.c.l.b16 %v952
      %v985 = vunpack.c.l.b16 %v953
      %v986 = vunpack.c.l.b16 %v954
      %v987 = vunpack.c.l.b16 %v955
      %v988 = vunpack.c.l.b16 %v956
      %v989 = vunpack.c.l.b16 %v957
      %v990 = vunpack.c.l.b16 %v958
      %v991 = vunpack.c.l.b16 %v959
      %v992 = vunpack.c.l.b16 %v960
      %v993 = vunpack.c.l.b16 %v961
      %v994 = vunpack.c.l.b16 %v962
      %v995 = vunpack.c.l.b16 %v963
      %v996 = vunpack.c.l.b16 %v964
      %v997 = vunpack.c.l.b16 %v965
      %v998 = vpack.c.b16 %v983, %v982
      %v999 = vpack.c.b16 %v985, %v984
      %v1000 = vpack.c.b16 %v987, %v986
      %v1001 = vpack.c.b16 %v989, %v988
      %v1002 = vpack.c.b16 %v991, %v990
      %v1003 = vpack.c.b16 %v993, %v992
      %v1004 = vpack.c.b16 %v995, %v994
      %v1005 = vpack.c.b16 %v997, %v996
      %1014 = vmatprep.subr.bf16.mxu0 0
      %1015 = vmatpush1.bf16.msra.mxu0 %v1005
      %1016 = vmatprep.subr.bf16.mxu0 0
      %1017 = vmatpush1.bf16.msra.mxu0 %v1004
      %1018 = vmatprep.subr.bf16.mxu0 0
      %1019 = vmatpush1.bf16.msra.mxu0 %v1003
      %1020 = vmatprep.subr.bf16.mxu0 0
      %1021 = vmatpush1.bf16.msra.mxu0 %v1002
      %1022 = vmatprep.subr.bf16.mxu0 0
      %1023 = vmatpush1.bf16.msra.mxu0 %v1001
      %1024 = vmatprep.subr.bf16.mxu0 0
      %1025 = vmatpush1.bf16.msra.mxu0 %v1000
      %1026 = vmatprep.subr.bf16.mxu0 0
      %1027 = vmatpush1.bf16.msra.mxu0 %v999
      %1028 = vmatprep.subr.bf16.mxu0 0
      %1029 = vmatpush1.bf16.msra.mxu0 %v998
      %1030 = vmatprep.subr.bf16.mxu0 0
      %1031 = vmatpush2.bf16.msra.mxu0 0
      %1032 = vmatprep.subr.bf16.mxu0 0
      %1033 = vmatpush2.bf16.msra.mxu0 0
      %1034 = vmatprep.subr.bf16.mxu0 0
      %1035 = vmatpush2.bf16.msra.mxu0 0
      %1036 = vmatprep.subr.bf16.mxu0 0
      %1037 = vmatpush2.bf16.msra.mxu0 0
      %1038 = vmatprep.subr.bf16.mxu0 0
      %1039 = vmatpush2.bf16.msra.mxu0 0
      %1040 = vmatprep.subr.bf16.mxu0 0
      %1041 = vmatpush2.bf16.msra.mxu0 0
      %1042 = vmatprep.subr.bf16.mxu0 0
      %1043 = vmatpush2.bf16.msra.mxu0 0
      %1044 = vmatprep.subr.bf16.mxu0 0
      %1045 = vmatpush2.bf16.msra.mxu0 0
      %1046 = vmatprep.mubr.bf16.mxu0 0
      %1047 = vmatmul.mubr.bf16.gmra.mxu0 %v948
      %v1048 = vpop.f32.mrf.mxu0
      %v1049 = vadd.f32 0.0, %v1048
      %v1050 = vpop.f32.mrf.mxu0
      %v1051 = vpop.f32.mrf.mxu0
      %v1052 = vpop.f32.mrf.mxu0
      %1053 = vdwg.mxu0
      %v1054 = vadd.f32 %v943, %v1049
      %v1055 = vld [vmem:[%s4] sm:$0x1]
      %v1057 = vlaneseq
      %v1058 = vshrl.u32 %v1057, 7
      %v1059 = vsub.s32 0, %v1058
      %v1060 = vrot.slane %v1055, %v1059
      %v1062 = vadd.f32 %v1054, %v1060
      %v1063 = vpack.c.bf16 %v1062, %v1062
      %1064 = vst [vmem:[%s441] sm:$0xf] %v1063
      %v1065 = vstv %s450
      %v1066 = vadd.s32 %v1065, %v482
      %vm1067 = vcmp.lt.s32.totalorder %v1066, 8
      %v1068 = vsel %vm1067, 1, 0
      %v1069 = vcvt.s32.f32 %v1068
      %v1070 = vmul.f32 %v1062, %v1069
      %v1071 = vrot.slane %v1070, 4
      %v1072 = vadd.f32 %v1070, %v1071
      %v1073 = vrot.slane %v1072, 2
      %v1074 = vadd.f32 %v1072, %v1073
      %v1075 = vrot.slane %v1074, 1
      %v1076 = vadd.f32 %v1074, %v1075
      %v1077 = vmul.f32 %v1062, %v1062
      %v1078 = vmul.f32 %v1077, %v1069
      %v1079 = vrot.slane %v1078, 4
      %v1080 = vadd.f32 %v1078, %v1079
      %v1081 = vrot.slane %v1080, 2
      %v1082 = vadd.f32 %v1080, %v1081
      %v1083 = vrot.slane %v1082, 1
      %v1084 = vadd.f32 %v1082, %v1083
      %1085 = vst [vmem:[%s448] sm:$0x1] %v1076
      %1086 = vst [vmem:[%s448 + $0x1] sm:$0x1] %v1084
      %p1087 = scmp.lt.s32.totalorder %s24, 1
      %s1088 = scalar_select %p1087, %s24, 1
      %p1089 = scmp.lt.s32.totalorder %s25, 0
      %s1090 = scalar_select %p1089, %s25, 0
      %s1091 = sadd.s32 %s1090, %s1088
      %s1092 = smul.addr %s1091, 4
      %s1093 = scalar_lea.vmem %s7, %s1092
      %p1094 = scmp.lt.s32.totalorder %s24, 1
      %s1095 = scalar_select %p1094, %s24, 1
      %p1096 = scmp.lt.s32.totalorder %s25, 0
      %s1097 = scalar_select %p1096, %s25, 0
      %s1098 = sadd.s32 %s1097, %s1095
      %s1099 = smul.addr %s1098, 2
      %s1100 = scalar_lea.vmem %s8, %s1099
      // Predicated region
      $region49: #{overflow_forward.10} parent=47 // pred_check
        %p1101 = pneg %p232
      $region50: #{overflow_forward.10} parent=47 // pred_check_branch
        %1103 = sbr.rel (%p1101) target = $region52
      $region51: #{overflow_forward.10} parent=47 // pred_region
        _
      $region52: #{overflow_forward.10} parent=47 // pred_fallthru
        _
      // Predicated region
      $region53: #{overflow_forward.10} parent=47 // pred_check
        %p1104 = pneg %p260
      $region54: #{overflow_forward.10} parent=47 // pred_check_branch
        %1106 = sbr.rel (%p1104) target = $region56
      $region55: #{overflow_forward.10} parent=47 // pred_region
        _
      $region56: #{overflow_forward.10} parent=47 // pred_fallthru
        _
    $region48: #{overflow_forward.10} parent=5 // pred_fallthru
      _
    %p1107 = scmp.le.s32.totalorder 2, %s15
    // Predicated region
    $region57: #{overflow_forward.10} parent=5 // pred_check
      %p1108 = pneg %p1107
    $region58: #{overflow_forward.10} parent=5 // pred_check_branch
      %1110 = sbr.rel (%p1108) target = $region60
    $region59: #{overflow_forward.10} parent=5 // pred_region
      %s1111 = ssub.s32 %s15, 2
      // Predicated region
      $region61: #{overflow_forward.10} parent=59 // pred_check
        %p1112 = pneg %p238
      $region62: #{overflow_forward.10} parent=59 // pred_check_branch
        %1114 = sbr.rel (%p1112) target = $region64
      $region63: #{overflow_forward.10} parent=59 // pred_region
        %p1115 = scmp.lt.s32.totalorder %s26, 1
        %s1116 = scalar_select %p1115, %s26, 1
        %p1117 = scmp.lt.s32.totalorder %s27, 0
        %s1118 = scalar_select %p1117, %s27, 0
        %s1119 = sadd.s32 %s1118, %s1116
        %s1120 = smul.addr %s1119, 4
        %s1121 = scalar_lea.vmem %s7, %s1120
      $region64: #{overflow_forward.10} parent=59 // pred_fallthru
        _
      // Predicated region
      $region65: #{overflow_forward.10} parent=59 // pred_check
        %p1122 = pneg %p266
      $region66: #{overflow_forward.10} parent=59 // pred_check_branch
        %1124 = sbr.rel (%p1122) target = $region68
      $region67: #{overflow_forward.10} parent=59 // pred_region
        %p1125 = scmp.lt.s32.totalorder %s26, 1
        %s1126 = scalar_select %p1125, %s26, 1
        %p1127 = scmp.lt.s32.totalorder %s27, 0
        %s1128 = scalar_select %p1127, %s27, 0
        %s1129 = sadd.s32 %s1128, %s1126
        %s1130 = smul.addr %s1129, 2
        %s1131 = scalar_lea.vmem %s8, %s1130
      $region68: #{overflow_forward.10} parent=59 // pred_fallthru
        _
    $region60: #{overflow_forward.10} parent=5 // pred_fallthru
      _
  $region6: #{overflow_forward.10} parent=0 // loop_footer
    %s19 = sadd.s32 1, %s15
  $region7: #{overflow_forward.10} parent=0 // loop_footer_branch
    %14 = sbr.rel target = $region3
  $region8: #{overflow_forward.10} parent=0 // loop_exit
    _

// kernel: reverse
$region0: #{reverse}
  %s0 = inlined_call_operand.vmem [shape: f32[8,2], index: 0, kind: input, shape index: {}]
  %s1 = inlined_call_operand.vmem [shape: f32[8,2], index: 1, kind: output, shape index: {}]
  %v2 = vlaneseq
  %v3 = vsub.s32 7, %v2
  %4 = vset.pattern.permute.xlu0 %v3
  $region1: #{reverse} parent=0
    #allocation0 [shape = 'u8[4096]{0}', space=vmem, size = 0x1000, scoped, tag = 'operand span for operand 0']
    #allocation1 [shape = 'u8[1024]{0}', space=vmem, size = 0x400, scoped, tag = 'packed  for operand 0']
    #allocation2 [shape = 'u8[4096]{0}', space=vmem, size = 0x1000, scoped, tag = 'operand span for operand 1']
    #allocation3 [shape = 'u8[1024]{0}', space=vmem, size = 0x400, scoped, tag = 'packed  for operand 1']
    // Predicated region
    $region2: #{reverse} parent=1 // pred_check
      _
    $region3: #{reverse} parent=1 // pred_check_branch
      %6 = sbr.rel (0) target = $region5
    $region4: #{reverse} parent=1 // pred_region
      // Predicated region
      $region6: #{reverse} parent=4 // pred_check
        _
      $region7: #{reverse} parent=4 // pred_check_branch
        %8 = sbr.rel target = $region9
      $region8: #{reverse} parent=4 // pred_region
        // Predicated region
        $region21: #{reverse} parent=8 // pred_check
          _
        $region22: #{reverse} parent=8 // pred_check_branch
          %24 = sbr.rel (0) target = $region24
        $region23: #{reverse} parent=8 // pred_region
          %s26 = ssub.s32 4, 1
          loop: start=0, step=1, limit=1
          $region25: #{reverse} parent=23 // loop_pre_header
            _
          $region26: #{reverse} parent=23 // loop_header
            %s28 = sphi 0, %s32
            %p29 = scmp.ge.s32.totalorder %s28, 1
            %s33 = sphi %s0, %s0
            %s34 = sphi [#allocation1], [#allocation1]
          $region27: #{reverse} parent=23 // loop_header_branch
            %31 = sbr.rel (%p29) target = $region31
          $region28: #{reverse} parent=23 // loop_body
            %v35 = vld [vmem:[%s33] sm:%s26]
            %36 = vst [vmem:[%s34] sm:%s26] %v35
          $region29: #{reverse} parent=23 // loop_footer
            %s32 = sadd.s32 1, %s28
          $region30: #{reverse} parent=23 // loop_footer_branch
            %27 = sbr.rel target = $region26
          $region31: #{reverse} parent=23 // loop_exit
            _
        $region24: #{reverse} parent=8 // pred_fallthru
          _
      $region9: #{reverse} parent=4 // pred_fallthru
        _
      // Predicated region
      $region10: #{reverse} parent=4 // pred_check
        _
      $region11: #{reverse} parent=4 // pred_check_branch
        %10 = sbr.rel (0) target = $region13
      $region12: #{reverse} parent=4 // pred_region
        %s12 = ssub.s32 4, 1
        loop: start=0, step=1, limit=1
        $region14: #{reverse} parent=12 // loop_pre_header
          _
        $region15: #{reverse} parent=12 // loop_header
          %s14 = sphi 0, %s18
          %p15 = scmp.ge.s32.totalorder %s14, 1
          %s19 = sphi %s0, %s0
          %s20 = sphi [#allocation1], [#allocation1]
        $region16: #{reverse} parent=12 // loop_header_branch
          %17 = sbr.rel (%p15) target = $region20
        $region17: #{reverse} parent=12 // loop_body
          %v21 = vld [vmem:[%s19] sm:%s12]
          %22 = vst [vmem:[%s20] sm:%s12] %v21
        $region18: #{reverse} parent=12 // loop_footer
          %s18 = sadd.s32 1, %s14
        $region19: #{reverse} parent=12 // loop_footer_branch
          %13 = sbr.rel target = $region15
        $region20: #{reverse} parent=12 // loop_exit
          _
      $region13: #{reverse} parent=4 // pred_fallthru
        _
    $region5: #{reverse} parent=1 // pred_fallthru
      _
    %37 = vnop
    %s39 = sshll.u32 1, 2
    %s40 = ssub.s32 %s39, 1
    %v41 = vld [vmem:[#allocation1] sm:%s40]
    %42 = vst [vmem:[#allocation0] sm:%s40] %v41
    %v43 = vld [vmem:[#allocation0] sm:$0xff]
    %44 = vperm.xlu0 %4, %v43
    %v45 = vpop.permute.xlu0 %44
    %46 = vst [vmem:[#allocation2] sm:$0xff] %v45
    %s48 = sshll.u32 1, 2
    %s49 = ssub.s32 %s48, 1
    %v51 = vld [vmem:[#allocation2] sm:%s49]
    %s52 = sshll.u32 1, 2
    %s53 = ssub.s32 %s52, 1
    %54 = vst [vmem:[#allocation3] sm:%s53] %v51
    // Predicated region
    $region32: #{reverse} parent=1 // pred_check
      _
    $region33: #{reverse} parent=1 // pred_check_branch
      %56 = sbr.rel (0) target = $region35
    $region34: #{reverse} parent=1 // pred_region
      // Predicated region
      $region36: #{reverse} parent=34 // pred_check
        _
      $region37: #{reverse} parent=34 // pred_check_branch
        %58 = sbr.rel target = $region39
      $region38: #{reverse} parent=34 // pred_region
        // Predicated region
        $region51: #{reverse} parent=38 // pred_check
          _
        $region52: #{reverse} parent=38 // pred_check_branch
          %74 = sbr.rel (0) target = $region54
        $region53: #{reverse} parent=38 // pred_region
          %s76 = ssub.s32 4, 1
          loop: start=0, step=1, limit=1
          $region55: #{reverse} parent=53 // loop_pre_header
            _
          $region56: #{reverse} parent=53 // loop_header
            %s78 = sphi 0, %s82
            %p79 = scmp.ge.s32.totalorder %s78, 1
            %s83 = sphi [#allocation3], [#allocation3]
            %s84 = sphi %s1, %s1
          $region57: #{reverse} parent=53 // loop_header_branch
            %81 = sbr.rel (%p79) target = $region61
          $region58: #{reverse} parent=53 // loop_body
            %v85 = vld [vmem:[%s83] sm:%s76]
            %86 = vst [vmem:[%s84] sm:%s76] %v85
          $region59: #{reverse} parent=53 // loop_footer
            %s82 = sadd.s32 1, %s78
          $region60: #{reverse} parent=53 // loop_footer_branch
            %77 = sbr.rel target = $region56
          $region61: #{reverse} parent=53 // loop_exit
            _
        $region54: #{reverse} parent=38 // pred_fallthru
          _
      $region39: #{reverse} parent=34 // pred_fallthru
        _
      // Predicated region
      $region40: #{reverse} parent=34 // pred_check
        _
      $region41: #{reverse} parent=34 // pred_check_branch
        %60 = sbr.rel (0) target = $region43
      $region42: #{reverse} parent=34 // pred_region
        %s62 = ssub.s32 4, 1
        loop: start=0, step=1, limit=1
        $region44: #{reverse} parent=42 // loop_pre_header
          _
        $region45: #{reverse} parent=42 // loop_header
          %s64 = sphi 0, %s68
          %p65 = scmp.ge.s32.totalorder %s64, 1
          %s69 = sphi [#allocation3], [#allocation3]
          %s70 = sphi %s1, %s1
        $region46: #{reverse} parent=42 // loop_header_branch
          %67 = sbr.rel (%p65) target = $region50
        $region47: #{reverse} parent=42 // loop_body
          %v71 = vld [vmem:[%s69] sm:%s62]
          %72 = vst [vmem:[%s70] sm:%s62] %v71
        $region48: #{reverse} parent=42 // loop_footer
          %s68 = sadd.s32 1, %s64
        $region49: #{reverse} parent=42 // loop_footer_branch
          %63 = sbr.rel target = $region45
        $region50: #{reverse} parent=42 // loop_exit
          _
      $region43: #{reverse} parent=34 // pred_fallthru
        _
    $region35: #{reverse} parent=1 // pred_fallthru
      _
    %87 = vnop

// kernel: custom-call.4
$region0: #{custom-call.4}
  %s0 = inlined_call_operand.vmem [shape: bf16[8,2,16], index: 0, kind: output, shape index: {}]

// kernel: custom-call
$region0: #{custom-call}
  %s0 = inlined_call_operand.vmem [shape: f32[2,16], index: 0, kind: output, shape index: {}]

// kernel: overflow_forward.13
$region0: #{overflow_forward.13}
  #allocation0 [shape = 'u32[]', space=smem, size = 0x4, offset = 0x4, fixed_abs, tag = 'smem constant byte address 0x4 - core index']
  #allocation1 [shape = 'u32[144,128]{1,0:T(1,128)}', space=vmem, size = 0x12000, scoped, tag = 'internal scratch']
  #allocation2 [shape = 'f32[16,128]{1,0:T(8,128)}', space=vmem, size = 0x2000, scoped, tag = 'scratch operand']
  %s0 = inlined_call_operand.vmem [shape: bf16[16,128], index: 0, kind: input, shape index: {}]
  %s1 = inlined_call_operand.vmem [shape: bf16[128,128], index: 1, kind: input, shape index: {}]
  %s2 = inlined_call_operand.vmem [shape: f32[1,128], index: 2, kind: input, shape index: {}]
  %s3 = inlined_call_operand.vmem [shape: f32[16,128], index: 3, kind: output, shape index: {}]
  %s4 = sld [smem:[#allocation0]]
  $region30: #{overflow_forward.13} parent=0
    _
  %s6 = ssub.s32 1, %s4
  %s7 = scalar_select 0, %s6, %s4
  // Predicated region
  $region2: #{overflow_forward.13} parent=0 // pred_check
    _
  $region3: #{overflow_forward.13} parent=0 // pred_check_branch
    %9 = sbr.rel (0) target = $region5
  $region4: #{overflow_forward.13} parent=0 // pred_region
    _
  $region5: #{overflow_forward.13} parent=0 // pred_fallthru
    _
  // Predicated region
  $region6: #{overflow_forward.13} parent=0 // pred_check
    _
  $region7: #{overflow_forward.13} parent=0 // pred_check_branch
    %11 = sbr.rel (0) target = $region9
  $region8: #{overflow_forward.13} parent=0 // pred_region
    _
  $region9: #{overflow_forward.13} parent=0 // pred_fallthru
    _
  // Predicated region
  $region10: #{overflow_forward.13} parent=0 // pred_check
    _
  $region11: #{overflow_forward.13} parent=0 // pred_check_branch
    %13 = sbr.rel (0) target = $region13
  $region12: #{overflow_forward.13} parent=0 // pred_region
    _
  $region13: #{overflow_forward.13} parent=0 // pred_fallthru
    _
  %p15 = scmp.eq.s32.totalorder 0, 0
  // Predicated region
  $region14: #{overflow_forward.13} parent=0 // pred_check
    %p16 = pneg %p15
  $region15: #{overflow_forward.13} parent=0 // pred_check_branch
    %18 = sbr.rel (%p16) target = $region17
  $region16: #{overflow_forward.13} parent=0 // pred_region
    %19 = vst [vmem:[#allocation2] sm:$0xff] 0.0
    %20 = vst [vmem:[#allocation2 + $0x8] sm:$0xff] 0.0
  $region17: #{overflow_forward.13} parent=0 // pred_fallthru
    _
  %v21 = vld [vmem:[#allocation2] sm:$0xff]
  %v22 = vld [vmem:[#allocation2 + $0x8] sm:$0xff]
  %v23 = vld [vmem:[%s0] sm:$0xf]
  %v24 = vld [vmem:[%s0 + $0x4] sm:$0xf]
  %v25 = vld [vmem:[%s1] sm:$0xf]
  %v26 = vld [vmem:[%s1 + $0x4] sm:$0xf]
  %v27 = vld [vmem:[%s1 + $0x8] sm:$0xf]
  %v28 = vld [vmem:[%s1 + $0xc] sm:$0xf]
  %v29 = vld [vmem:[%s1 + $0x10] sm:$0xf]
  %v30 = vld [vmem:[%s1 + $0x14] sm:$0xf]
  %v31 = vld [vmem:[%s1 + $0x18] sm:$0xf]
  %v32 = vld [vmem:[%s1 + $0x1c] sm:$0xf]
  %v33 = vld [vmem:[%s1 + $0x20] sm:$0xf]
  %v34 = vld [vmem:[%s1 + $0x24] sm:$0xf]
  %v35 = vld [vmem:[%s1 + $0x28] sm:$0xf]
  %v36 = vld [vmem:[%s1 + $0x2c] sm:$0xf]
  %v37 = vld [vmem:[%s1 + $0x30] sm:$0xf]
  %v38 = vld [vmem:[%s1 + $0x34] sm:$0xf]
  %v39 = vld [vmem:[%s1 + $0x38] sm:$0xf]
  %v40 = vld [vmem:[%s1 + $0x3c] sm:$0xf]
  %v43 = vunpack.c.l.b16 %v23
  %v44 = vunpack.c.l.b16 %v24
  %v45 = vpack.c.b16 %v44, %v43
  %v63 = vunpack.c.l.b16 %v25
  %v64 = vunpack.c.l.b16 %v26
  %v65 = vunpack.c.l.b16 %v27
  %v66 = vunpack.c.l.b16 %v28
  %v67 = vunpack.c.l.b16 %v29
  %v68 = vunpack.c.l.b16 %v30
  %v69 = vunpack.c.l.b16 %v31
  %v70 = vunpack.c.l.b16 %v32
  %v71 = vunpack.c.l.b16 %v33
  %v72 = vunpack.c.l.b16 %v34
  %v73 = vunpack.c.l.b16 %v35
  %v74 = vunpack.c.l.b16 %v36
  %v75 = vunpack.c.l.b16 %v37
  %v76 = vunpack.c.l.b16 %v38
  %v77 = vunpack.c.l.b16 %v39
  %v78 = vunpack.c.l.b16 %v40
  %v79 = vpack.c.b16 %v64, %v63
  %v80 = vpack.c.b16 %v66, %v65
  %v81 = vpack.c.b16 %v68, %v67
  %v82 = vpack.c.b16 %v70, %v69
  %v83 = vpack.c.b16 %v72, %v71
  %v84 = vpack.c.b16 %v74, %v73
  %v85 = vpack.c.b16 %v76, %v75
  %v86 = vpack.c.b16 %v78, %v77
  %95 = vmatprep.subr.bf16.mxu0 0
  %96 = vmatpush1.bf16.msra.mxu0 %v86
  %97 = vmatprep.subr.bf16.mxu0 0
  %98 = vmatpush1.bf16.msra.mxu0 %v85
  %99 = vmatprep.subr.bf16.mxu0 0
  %100 = vmatpush1.bf16.msra.mxu0 %v84
  %101 = vmatprep.subr.bf16.mxu0 0
  %102 = vmatpush1.bf16.msra.mxu0 %v83
  %103 = vmatprep.subr.bf16.mxu0 0
  %104 = vmatpush1.bf16.msra.mxu0 %v82
  %105 = vmatprep.subr.bf16.mxu0 0
  %106 = vmatpush1.bf16.msra.mxu0 %v81
  %107 = vmatprep.subr.bf16.mxu0 0
  %108 = vmatpush1.bf16.msra.mxu0 %v80
  %109 = vmatprep.subr.bf16.mxu0 0
  %110 = vmatpush1.bf16.msra.mxu0 %v79
  %111 = vmatprep.subr.bf16.mxu0 0
  %112 = vmatpush2.bf16.msra.mxu0 0
  %113 = vmatprep.subr.bf16.mxu0 0
  %114 = vmatpush2.bf16.msra.mxu0 0
  %115 = vmatprep.subr.bf16.mxu0 0
  %116 = vmatpush2.bf16.msra.mxu0 0
  %117 = vmatprep.subr.bf16.mxu0 0
  %118 = vmatpush2.bf16.msra.mxu0 0
  %119 = vmatprep.subr.bf16.mxu0 0
  %120 = vmatpush2.bf16.msra.mxu0 0
  %121 = vmatprep.subr.bf16.mxu0 0
  %122 = vmatpush2.bf16.msra.mxu0 0
  %123 = vmatprep.subr.bf16.mxu0 0
  %124 = vmatpush2.bf16.msra.mxu0 0
  %125 = vmatprep.subr.bf16.mxu0 0
  %126 = vmatpush2.bf16.msra.mxu0 0
  %127 = vmatprep.mubr.bf16.mxu0 0
  %128 = vmatmul.mubr.bf16.gmra.mxu0 %v45
  %v129 = vpop.f32.mrf.mxu0
  %v130 = vadd.f32 0.0, %v129
  %v131 = vpop.f32.mrf.mxu0
  %v132 = vpop.f32.mrf.mxu0
  %v133 = vadd.f32 0.0, %v132
  %v134 = vpop.f32.mrf.mxu0
  %135 = vdwg.mxu0
  %v136 = vadd.f32 %v21, %v130
  %v137 = vadd.f32 %v22, %v133
  %138 = vst [vmem:[#allocation2] sm:$0xff] %v136
  %139 = vst [vmem:[#allocation2 + $0x8] sm:$0xff] %v137
  // Predicated region
  $region18: #{overflow_forward.13} parent=0 // pred_check
    %p140 = pneg %p15
  $region19: #{overflow_forward.13} parent=0 // pred_check_branch
    %142 = sbr.rel (%p140) target = $region21
  $region20: #{overflow_forward.13} parent=0 // pred_region
    %v143 = vld [vmem:[#allocation2] sm:$0xff]
    %v144 = vld [vmem:[#allocation2 + $0x8] sm:$0xff]
    %v145 = vld [vmem:[%s2] sm:$0x1]
    %v147 = vlaneseq
    %v148 = vshrl.u32 %v147, 7
    %v149 = vsub.s32 0, %v148
    %v150 = vrot.slane %v145, %v149
    %v152 = vadd.f32 %v143, %v150
    %v153 = vadd.f32 %v144, %v150
    %154 = vst [vmem:[%s3] sm:$0xff] %v152
    %155 = vst [vmem:[%s3 + $0x8] sm:$0xff] %v153
  $region21: #{overflow_forward.13} parent=0 // pred_fallthru
    _
  // Predicated region
  $region22: #{overflow_forward.13} parent=0 // pred_check
    _
  $region23: #{overflow_forward.13} parent=0 // pred_check_branch
    %157 = sbr.rel (0) target = $region25
  $region24: #{overflow_forward.13} parent=0 // pred_region
    _
  $region25: #{overflow_forward.13} parent=0 // pred_fallthru
    _
  // Predicated region
  $region26: #{overflow_forward.13} parent=0 // pred_check
    _
  $region27: #{overflow_forward.13} parent=0 // pred_check_branch
    %159 = sbr.rel (0) target = $region29
  $region28: #{overflow_forward.13} parent=0 // pred_region
    _
  $region29: #{overflow_forward.13} parent=0 // pred_fallthru
    _

// kernel: overflow_forward.15
$region0: #{overflow_forward.15}
  #allocation0 [shape = 'u32[]', space=smem, size = 0x4, offset = 0x4, fixed_abs, tag = 'smem constant byte address 0x4 - core index']
  #allocation1 [shape = 'u32[144,128]{1,0:T(1,128)}', space=vmem, size = 0x12000, scoped, tag = 'internal scratch']
  #allocation2 [shape = 'bf16[128,16]{1,0:T(8,128)(2,1)}', space=vmem, size = 0x8000, scoped, tag = 'scratch operand']
  #allocation3 [shape = 'f32[1,16]{1,0:T(1,128)}', space=vmem, size = 0x200, scoped, tag = 'scratch operand']
  #allocation4 [shape = 'f32[1,16]{1,0:T(1,128)}', space=vmem, size = 0x200, scoped, tag = 'scratch operand']
  #allocation5 [shape = 'f32[1,16]{1,0:T(1,128)}', space=vmem, size = 0x200, scoped, tag = 'scratch operand']
  #allocation6 [shape = 's32[1]{0}', space=sflag, size = 0x4, scoped, tag = 'scoped memory for overflow_forward.15']
  #allocation7 [shape = 'u8[512]{0}', space=smem, size = 0x200, scoped, tag = 'prefetched SMEM operand 0']
  %s0 = inlined_call_operand.vmem [shape: s32[2], index: 0, kind: input, shape index: {}]
  %s1 = inlined_call_operand.vmem [shape: f32[2,128,16], index: 1, kind: input, shape index: {}]
  %s2 = inlined_call_operand.vmem [shape: bf16[2,8,128], index: 2, kind: input, shape index: {}]
  %s3 = inlined_call_operand.vmem [shape: f32[2,8,1], index: 3, kind: input, shape index: {}]
  %s4 = inlined_call_operand.vmem [shape: f32[128,1], index: 4, kind: input, shape index: {}]
  %s5 = inlined_call_operand.vmem [shape: f32[128,1], index: 5, kind: input, shape index: {}]
  %s6 = inlined_call_operand.vmem [shape: f32[2,1,1,16], index: 6, kind: output, shape index: {}]
  %s7 = sld [smem:[#allocation0]]
  $region61: #{overflow_forward.15} parent=0
    _
  %s9 = ssub.s32 1, %s7
  %s10 = scalar_select 0, %s9, %s7
  %s11 = sshll.u32 %s0, 4
  %s12 = int_to_ptr.vmem [resolvable:$true] %s11
  %14 = dma.vmem_to_smem %s12, 16, [#allocation7], [#allocation6]
  %15 = dma.done [#allocation6], 16
  %16 = sfence
  loop: start=0, step=1, limit=4
  $region2: #{overflow_forward.15} parent=0 // loop_pre_header
    _
  $region3: #{overflow_forward.15} parent=0 // loop_header
    %s18 = sphi 0, %s22
    %p19 = scmp.ge.s32.totalorder %s18, 4
    %s25 = sphi 0, %s44
    %s26 = sphi 0, %s40
    %s27 = sphi 0, %s36
    %s28 = sphi 0, %s25
    %s29 = sphi 0, %s26
    %s30 = sphi 0, %s27
    %s31 = sphi 0, %s28
    %s32 = sphi 0, %s29
    %s33 = sphi 0, %s30
    %s49 = sphi 0, %s51
    %s52 = sphi 0, %s49
    %s53 = sphi 0, %s52
    %s69 = sphi 0, %s53
    %s77 = sphi 0, %s79
    %s80 = sphi 0, %s77
    %s81 = sphi 0, %s80
    %s97 = sphi 0, %s81
    %s105 = sphi 0, %s107
    %s108 = sphi 0, %s105
    %s109 = sphi 0, %s108
    %s125 = sphi 0, %s109
    %s129 = sphi 0, %s129
    %s131 = sphi 0, %s129
    %s132 = sphi 0, %s131
    %s146 = sphi 0, %s132
    %s150 = sphi 0, %s150
    %s152 = sphi 0, %s150
    %s153 = sphi 0, %s152
    %s167 = sphi 0, %s153
    %s175 = sphi 0, %s177
    %s178 = sphi 0, %s175
    %s179 = sphi 0, %s178
    %s195 = sphi 0, %s179
  $region4: #{overflow_forward.15} parent=0 // loop_header_branch
    %21 = sbr.rel (%p19) target = $region8
  $region5: #{overflow_forward.15} parent=0 // loop_body
    %s23 = ssub.s32 %s18, 1
    %s24 = ssub.s32 %s18, 2
    %s34 = sadd.s32 1, %s27
    %p35 = scmp.ge.s32.totalorder %s34, 1
    %s36 = scalar_select %p35, 0, %s34
    %s37 = sadd.s32 1, %s26
    %s38 = scalar_select %p35, %s37, %s26
    %p39 = scmp.ge.s32.totalorder %s38, 1
    %s40 = scalar_select %p39, 0, %s38
    %s41 = sadd.s32 1, %s25
    %s42 = scalar_select %p39, %s41, %s25
    %p43 = scmp.ge.s32.totalorder %s42, 2
    %s44 = scalar_select %p43, 0, %s42
    %s45 = ssub.s32 %s25, %s44
    %s46 = ssub.s32 %s26, %s40
    %s47 = sor.u32 %s45, %s46
    %p48 = scmp.eq.s32.totalorder %s47, 0
    %s50 = sadd.s32 %s49, 1
    %s51 = scalar_select %p48, %s49, %s50
    %p54 = pneg %p48
    %p55 = scmp.eq.s32.totalorder %s18, 1
    %p56 = por %p54, %p55
    %p57 = scmp.ne.s32.totalorder %s49, %s52
    %p58 = scmp.eq.s32.totalorder %s18, 0
    %p59 = por %p57, %p58
    %p60 = scmp.ne.s32.totalorder %s49, %s52
    %p61 = scmp.eq.s32.totalorder %s23, 1
    %p62 = por %p60, %p61
    %p63 = scmp.ne.s32.totalorder %s52, %s53
    %p64 = scmp.eq.s32.totalorder %s23, 0
    %p65 = por %p63, %p64
    %p66 = scmp.ne.s32.totalorder %s52, %s53
    %p67 = scmp.eq.s32.totalorder %s24, 1
    %p68 = por %p66, %p67
    %p70 = scmp.ne.s32.totalorder %s53, %s69
    %p71 = scmp.eq.s32.totalorder %s24, 0
    %p72 = por %p70, %p71
    %s73 = ssub.s32 %s25, %s44
    %s74 = ssub.s32 %s27, %s36
    %s75 = sor.u32 %s73, %s74
    %p76 = scmp.eq.s32.totalorder %s75, 0
    %s78 = sadd.s32 %s77, 1
    %s79 = scalar_select %p76, %s77, %s78
    %p82 = pneg %p76
    %p83 = scmp.eq.s32.totalorder %s18, 1
    %p84 = por %p82, %p83
    %p85 = scmp.ne.s32.totalorder %s77, %s80
    %p86 = scmp.eq.s32.totalorder %s18, 0
    %p87 = por %p85, %p86
    %p88 = scmp.ne.s32.totalorder %s77, %s80
    %p89 = scmp.eq.s32.totalorder %s23, 1
    %p90 = por %p88, %p89
    %p91 = scmp.ne.s32.totalorder %s80, %s81
    %p92 = scmp.eq.s32.totalorder %s23, 0
    %p93 = por %p91, %p92
    %p94 = scmp.ne.s32.totalorder %s80, %s81
    %p95 = scmp.eq.s32.totalorder %s24, 1
    %p96 = por %p94, %p95
    %p98 = scmp.ne.s32.totalorder %s81, %s97
    %p99 = scmp.eq.s32.totalorder %s24, 0
    %p100 = por %p98, %p99
    %s101 = ssub.s32 %s25, %s44
    %s102 = ssub.s32 %s27, %s36
    %s103 = sor.u32 %s101, %s102
    %p104 = scmp.eq.s32.totalorder %s103, 0
    %s106 = sadd.s32 %s105, 1
    %s107 = scalar_select %p104, %s105, %s106
    %p110 = pneg %p104
    %p111 = scmp.eq.s32.totalorder %s18, 1
    %p112 = por %p110, %p111
    %p113 = scmp.ne.s32.totalorder %s105, %s108
    %p114 = scmp.eq.s32.totalorder %s18, 0
    %p115 = por %p113, %p114
    %p116 = scmp.ne.s32.totalorder %s105, %s108
    %p117 = scmp.eq.s32.totalorder %s23, 1
    %p118 = por %p116, %p117
    %p119 = scmp.ne.s32.totalorder %s108, %s109
    %p120 = scmp.eq.s32.totalorder %s23, 0
    %p121 = por %p119, %p120
    %p122 = scmp.ne.s32.totalorder %s108, %s109
    %p123 = scmp.eq.s32.totalorder %s24, 1
    %p124 = por %p122, %p123
    %p126 = scmp.ne.s32.totalorder %s109, %s125
    %p127 = scmp.eq.s32.totalorder %s24, 0
    %p128 = por %p126, %p127
    %s130 = sadd.s32 %s129, 1
    %p133 = scmp.eq.s32.totalorder %s18, 1
    %p134 = scmp.ne.s32.totalorder %s129, %s131
    %p135 = scmp.eq.s32.totalorder %s18, 0
    %p136 = por %p134, %p135
    %p137 = scmp.ne.s32.totalorder %s129, %s131
    %p138 = scmp.eq.s32.totalorder %s23, 1
    %p139 = por %p137, %p138
    %p140 = scmp.ne.s32.totalorder %s131, %s132
    %p141 = scmp.eq.s32.totalorder %s23, 0
    %p142 = por %p140, %p141
    %p143 = scmp.ne.s32.totalorder %s131, %s132
    %p144 = scmp.eq.s32.totalorder %s24, 1
    %p145 = por %p143, %p144
    %p147 = scmp.ne.s32.totalorder %s132, %s146
    %p148 = scmp.eq.s32.totalorder %s24, 0
    %p149 = por %p147, %p148
    %s151 = sadd.s32 %s150, 1
    %p154 = scmp.eq.s32.totalorder %s18, 1
    %p155 = scmp.ne.s32.totalorder %s150, %s152
    %p156 = scmp.eq.s32.totalorder %s18, 0
    %p157 = por %p155, %p156
    %p158 = scmp.ne.s32.totalorder %s150, %s152
    %p159 = scmp.eq.s32.totalorder %s23, 1
    %p160 = por %p158, %p159
    %p161 = scmp.ne.s32.totalorder %s152, %s153
    %p162 = scmp.eq.s32.totalorder %s23, 0
    %p163 = por %p161, %p162
    %p164 = scmp.ne.s32.totalorder %s152, %s153
    %p165 = scmp.eq.s32.totalorder %s24, 1
    %p166 = por %p164, %p165
    %p168 = scmp.ne.s32.totalorder %s153, %s167
    %p169 = scmp.eq.s32.totalorder %s24, 0
    %p170 = por %p168, %p169
    %s171 = ssub.s32 %s25, %s44
    %s172 = ssub.s32 %s26, %s40
    %s173 = sor.u32 %s171, %s172
    %p174 = scmp.eq.s32.totalorder %s173, 0
    %s176 = sadd.s32 %s175, 1
    %s177 = scalar_select %p174, %s175, %s176
    %p180 = pneg %p174
    %p181 = scmp.eq.s32.totalorder %s18, 1
    %p182 = por %p180, %p181
    %p183 = scmp.ne.s32.totalorder %s175, %s178
    %p184 = scmp.eq.s32.totalorder %s18, 0
    %p185 = por %p183, %p184
    %p186 = scmp.ne.s32.totalorder %s175, %s178
    %p187 = scmp.eq.s32.totalorder %s23, 1
    %p188 = por %p186, %p187
    %p189 = scmp.ne.s32.totalorder %s178, %s179
    %p190 = scmp.eq.s32.totalorder %s23, 0
    %p191 = por %p189, %p190
    %p192 = scmp.ne.s32.totalorder %s178, %s179
    %p193 = scmp.eq.s32.totalorder %s24, 1
    %p194 = por %p192, %p193
    %p196 = scmp.ne.s32.totalorder %s179, %s195
    %p197 = scmp.eq.s32.totalorder %s24, 0
    %p198 = por %p196, %p197
    %p199 = scmp.le.s32.totalorder 1, %s18
    %p200 = scmp.lt.s32.totalorder %s18, 3
    %p201 = pnand %p199, %p200
    %p202 = pneg %p201
    // Predicated region
    $region9: #{overflow_forward.15} parent=5 // pred_check
      _
    $region10: #{overflow_forward.15} parent=5 // pred_check_branch
      %204 = sbr.rel (%p201) target = $region12
    $region11: #{overflow_forward.15} parent=5 // pred_region
      %s205 = ssub.s32 %s18, 1
      // Predicated region
      $region13: #{overflow_forward.15} parent=11 // pred_check
        %p206 = pneg %p142
      $region14: #{overflow_forward.15} parent=11 // pred_check_branch
        %208 = sbr.rel (%p206) target = $region16
      $region15: #{overflow_forward.15} parent=11 // pred_region
        _
      $region16: #{overflow_forward.15} parent=11 // pred_fallthru
        _
      // Predicated region
      $region17: #{overflow_forward.15} parent=11 // pred_check
        %p209 = pneg %p163
      $region18: #{overflow_forward.15} parent=11 // pred_check_branch
        %211 = sbr.rel (%p209) target = $region20
      $region19: #{overflow_forward.15} parent=11 // pred_region
        _
      $region20: #{overflow_forward.15} parent=11 // pred_fallthru
        _
    $region12: #{overflow_forward.15} parent=5 // pred_fallthru
      _
    %p212 = scmp.lt.s32.totalorder %s18, 2
    // Predicated region
    $region21: #{overflow_forward.15} parent=5 // pred_check
      %p213 = pneg %p212
    $region22: #{overflow_forward.15} parent=5 // pred_check_branch
      %215 = sbr.rel (%p213) target = $region24
    $region23: #{overflow_forward.15} parent=5 // pred_region
      // Predicated region
      $region25: #{overflow_forward.15} parent=23 // pred_check
        %p216 = pneg %p59
      $region26: #{overflow_forward.15} parent=23 // pred_check_branch
        %218 = sbr.rel (%p216) target = $region28
      $region27: #{overflow_forward.15} parent=23 // pred_region
        %p219 = scmp.lt.s32.totalorder %s25, 1
        %s220 = scalar_select %p219, %s25, 1
        %p221 = scmp.lt.s32.totalorder %s26, 0
        %s222 = scalar_select %p221, %s26, 0
        %s223 = smul.addr %s220, 16
        %s224 = sadd.s32 %s222, %s223
        %s225 = smul.addr %s224, 8
        %s226 = scalar_lea.vmem %s1, %s225
      $region28: #{overflow_forward.15} parent=23 // pred_fallthru
        _
      // Predicated region
      $region29: #{overflow_forward.15} parent=23 // pred_check
        %p227 = pneg %p87
      $region30: #{overflow_forward.15} parent=23 // pred_check_branch
        %229 = sbr.rel (%p227) target = $region32
      $region31: #{overflow_forward.15} parent=23 // pred_region
        %p230 = scmp.lt.s32.totalorder %s25, 1
        %s231 = scalar_select %p230, %s25, 1
        %p232 = scmp.lt.s32.totalorder %s27, 0
        %s233 = scalar_select %p232, %s27, 0
        %s234 = sadd.s32 %s233, %s231
        %s235 = smul.addr %s234, 4
        %s236 = scalar_lea.vmem %s2, %s235
      $region32: #{overflow_forward.15} parent=23 // pred_fallthru
        _
      // Predicated region
      $region33: #{overflow_forward.15} parent=23 // pred_check
        %p237 = pneg %p115
      $region34: #{overflow_forward.15} parent=23 // pred_check_branch
        %239 = sbr.rel (%p237) target = $region36
      $region35: #{overflow_forward.15} parent=23 // pred_region
        %p240 = scmp.lt.s32.totalorder %s25, 1
        %s241 = scalar_select %p240, %s25, 1
        %p242 = scmp.lt.s32.totalorder %s27, 0
        %s243 = scalar_select %p242, %s27, 0
        %s244 = sadd.s32 %s243, %s241
        %s245 = smul.addr %s244, 8
        %s246 = scalar_lea.vmem %s3, %s245
      $region36: #{overflow_forward.15} parent=23 // pred_fallthru
        _
    $region24: #{overflow_forward.15} parent=5 // pred_fallthru
      _
    %p247 = scmp.le.s32.totalorder 1, %s18
    %p248 = scmp.lt.s32.totalorder %s18, 3
    %p249 = pnand %p247, %p248
    %p250 = pneg %p249
    // Predicated region
    $region37: #{overflow_forward.15} parent=5 // pred_check
      _
    $region38: #{overflow_forward.15} parent=5 // pred_check_branch
      %252 = sbr.rel (%p249) target = $region40
    $region39: #{overflow_forward.15} parent=5 // pred_region
      %s253 = ssub.s32 %s18, 1
      %p254 = scmp.lt.s32.totalorder %s28, 1
      %s255 = scalar_select %p254, %s28, 1
      %p256 = scmp.lt.s32.totalorder %s29, 0
      %s257 = scalar_select %p256, %s29, 0
      %s258 = smul.addr %s255, 16
      %s259 = sadd.s32 %s257, %s258
      %s260 = smul.addr %s259, 8
      %s261 = scalar_lea.vmem %s1, %s260
      %p262 = pneg %p65
      %p263 = pneg %p62
      %p264 = scmp.lt.s32.totalorder %s28, 1
      %s265 = scalar_select %p264, %s28, 1
      %p266 = scmp.lt.s32.totalorder %s30, 0
      %s267 = scalar_select %p266, %s30, 0
      %s268 = sadd.s32 %s267, %s265
      %s269 = smul.addr %s268, 4
      %s270 = scalar_lea.vmem %s2, %s269
      %p271 = pneg %p93
      %p272 = pneg %p90
      %p273 = scmp.lt.s32.totalorder %s28, 1
      %s274 = scalar_select %p273, %s28, 1
      %p275 = scmp.lt.s32.totalorder %s30, 0
      %s276 = scalar_select %p275, %s30, 0
      %s277 = sadd.s32 %s276, %s274
      %s278 = smul.addr %s277, 8
      %s279 = scalar_lea.vmem %s3, %s278
      %p280 = pneg %p121
      %p281 = pneg %p118
      %p282 = pneg %p142
      %p283 = pneg %p139
      %p284 = pneg %p163
      %p285 = pneg %p160
      %p286 = pneg %p191
      %p287 = pneg %p188
      %p288 = scmp.lt.s32.totalorder %s28, 1
      %s289 = scalar_select %p288, %s28, 1
      %p290 = scmp.lt.s32.totalorder %s29, 0
      %s291 = scalar_select %p290, %s29, 0
      %s292 = sadd.s32 %s291, %s289
      %s293 = scalar_lea.vmem %s6, %s292
      %p294 = scmp.lt.s32.totalorder %s28, 1
      %s295 = scalar_select %p294, %s28, 1
      %p296 = scmp.lt.s32.totalorder %s29, 0
      %s297 = scalar_select %p296, %s29, 0
      %s298 = smul.addr %s295, 16
      %s299 = sadd.s32 %s297, %s298
      %s300 = smul.addr %s299, 8
      %s301 = scalar_lea.vmem %s1, %s300
      %p302 = scmp.lt.s32.totalorder %s28, 1
      %s303 = scalar_select %p302, %s28, 1
      %p304 = scmp.lt.s32.totalorder %s30, 0
      %s305 = scalar_select %p304, %s30, 0
      %s306 = sadd.s32 %s305, %s303
      %s307 = smul.addr %s306, 4
      %s308 = scalar_lea.vmem %s2, %s307
      %p309 = scmp.lt.s32.totalorder %s28, 1
      %s310 = scalar_select %p309, %s28, 1
      %p311 = scmp.lt.s32.totalorder %s30, 0
      %s312 = scalar_select %p311, %s30, 0
      %s313 = sadd.s32 %s312, %s310
      %s314 = smul.addr %s313, 8
      %s315 = scalar_lea.vmem %s3, %s314
      %p316 = scmp.lt.s32.totalorder %s28, 1
      %s317 = scalar_select %p316, %s28, 1
      %p318 = scmp.lt.s32.totalorder %s29, 0
      %s319 = scalar_select %p318, %s29, 0
      %s320 = sadd.s32 %s319, %s317
      %s321 = scalar_lea.vmem %s6, %s320
      %p323 = scmp.eq.s32.totalorder %s30, 0
      // Predicated region
      $region41: #{overflow_forward.15} parent=39 // pred_check
        %p324 = pneg %p323
      $region42: #{overflow_forward.15} parent=39 // pred_check_branch
        %326 = sbr.rel (%p324) target = $region44
      $region43: #{overflow_forward.15} parent=39 // pred_region
        %v327 = vld [vmem:[%s301] sm:$0xff]
        %v328 = vld [vmem:[%s301 + $0x8] sm:$0xff]
        %v329 = vld [vmem:[%s301 + $0x10] sm:$0xff]
        %v330 = vld [vmem:[%s301 + $0x18] sm:$0xff]
        %v331 = vld [vmem:[%s301 + $0x20] sm:$0xff]
        %v332 = vld [vmem:[%s301 + $0x28] sm:$0xff]
        %v333 = vld [vmem:[%s301 + $0x30] sm:$0xff]
        %v334 = vld [vmem:[%s301 + $0x38] sm:$0xff]
        %v335 = vld [vmem:[%s301 + $0x40] sm:$0xff]
        %v336 = vld [vmem:[%s301 + $0x48] sm:$0xff]
        %v337 = vld [vmem:[%s301 + $0x50] sm:$0xff]
        %v338 = vld [vmem:[%s301 + $0x58] sm:$0xff]
        %v339 = vld [vmem:[%s301 + $0x60] sm:$0xff]
        %v340 = vld [vmem:[%s301 + $0x68] sm:$0xff]
        %v341 = vld [vmem:[%s301 + $0x70] sm:$0xff]
        %v342 = vld [vmem:[%s301 + $0x78] sm:$0xff]
        %v343 = vld [vmem:[%s5] sm:$0xff]
        %v344 = vld [vmem:[%s5 + $0x8] sm:$0xff]
        %v345 = vld [vmem:[%s5 + $0x10] sm:$0xff]
        %v346 = vld [vmem:[%s5 + $0x18] sm:$0xff]
        %v347 = vld [vmem:[%s5 + $0x20] sm:$0xff]
        %v348 = vld [vmem:[%s5 + $0x28] sm:$0xff]
        %v349 = vld [vmem:[%s5 + $0x30] sm:$0xff]
        %v350 = vld [vmem:[%s5 + $0x38] sm:$0xff]
        %v351 = vld [vmem:[%s5 + $0x40] sm:$0xff]
        %v352 = vld [vmem:[%s5 + $0x48] sm:$0xff]
        %v353 = vld [vmem:[%s5 + $0x50] sm:$0xff]
        %v354 = vld [vmem:[%s5 + $0x58] sm:$0xff]
        %v355 = vld [vmem:[%s5 + $0x60] sm:$0xff]
        %v356 = vld [vmem:[%s5 + $0x68] sm:$0xff]
        %v357 = vld [vmem:[%s5 + $0x70] sm:$0xff]
        %v358 = vld [vmem:[%s5 + $0x78] sm:$0xff]
        %360 = vset.pattern.permute.xlu0 0
        %361 = vperm.xlu0 %360, %v343
        %v362 = vpop.permute.xlu0 %361
        %365 = vset.pattern.permute.xlu0 0
        %366 = vperm.xlu0 %365, %v344
        %v367 = vpop.permute.xlu0 %366
        %370 = vset.pattern.permute.xlu0 0
        %371 = vperm.xlu0 %370, %v345
        %v372 = vpop.permute.xlu0 %371
        %375 = vset.pattern.permute.xlu0 0
        %376 = vperm.xlu0 %375, %v346
        %v377 = vpop.permute.xlu0 %376
        %380 = vset.pattern.permute.xlu0 0
        %381 = vperm.xlu0 %380, %v347
        %v382 = vpop.permute.xlu0 %381
        %385 = vset.pattern.permute.xlu0 0
        %386 = vperm.xlu0 %385, %v348
        %v387 = vpop.permute.xlu0 %386
        %390 = vset.pattern.permute.xlu0 0
        %391 = vperm.xlu0 %390, %v349
        %v392 = vpop.permute.xlu0 %391
        %395 = vset.pattern.permute.xlu0 0
        %396 = vperm.xlu0 %395, %v350
        %v397 = vpop.permute.xlu0 %396
        %400 = vset.pattern.permute.xlu0 0
        %401 = vperm.xlu0 %400, %v351
        %v402 = vpop.permute.xlu0 %401
        %405 = vset.pattern.permute.xlu0 0
        %406 = vperm.xlu0 %405, %v352
        %v407 = vpop.permute.xlu0 %406
        %410 = vset.pattern.permute.xlu0 0
        %411 = vperm.xlu0 %410, %v353
        %v412 = vpop.permute.xlu0 %411
        %415 = vset.pattern.permute.xlu0 0
        %416 = vperm.xlu0 %415, %v354
        %v417 = vpop.permute.xlu0 %416
        %420 = vset.pattern.permute.xlu0 0
        %421 = vperm.xlu0 %420, %v355
        %v422 = vpop.permute.xlu0 %421
        %425 = vset.pattern.permute.xlu0 0
        %426 = vperm.xlu0 %425, %v356
        %v427 = vpop.permute.xlu0 %426
        %430 = vset.pattern.permute.xlu0 0
        %431 = vperm.xlu0 %430, %v357
        %v432 = vpop.permute.xlu0 %431
        %435 = vset.pattern.permute.xlu0 0
        %436 = vperm.xlu0 %435, %v358
        %v437 = vpop.permute.xlu0 %436
        %v439 = vadd.f32 %v327, %v362
        %v440 = vadd.f32 %v328, %v367
        %v441 = vadd.f32 %v329, %v372
        %v442 = vadd.f32 %v330, %v377
        %v443 = vadd.f32 %v331, %v382
        %v444 = vadd.f32 %v332, %v387
        %v445 = vadd.f32 %v333, %v392
        %v446 = vadd.f32 %v334, %v397
        %v447 = vadd.f32 %v335, %v402
        %v448 = vadd.f32 %v336, %v407
        %v449 = vadd.f32 %v337, %v412
        %v450 = vadd.f32 %v338, %v417
        %v451 = vadd.f32 %v339, %v422
        %v452 = vadd.f32 %v340, %v427
        %v453 = vadd.f32 %v341, %v432
        %v454 = vadd.f32 %v342, %v437
        %v455 = vld [vmem:[%s4] sm:$0xff]
        %v456 = vld [vmem:[%s4 + $0x8] sm:$0xff]
        %v457 = vld [vmem:[%s4 + $0x10] sm:$0xff]
        %v458 = vld [vmem:[%s4 + $0x18] sm:$0xff]
        %v459 = vld [vmem:[%s4 + $0x20] sm:$0xff]
        %v460 = vld [vmem:[%s4 + $0x28] sm:$0xff]
        %v461 = vld [vmem:[%s4 + $0x30] sm:$0xff]
        %v462 = vld [vmem:[%s4 + $0x38] sm:$0xff]
        %v463 = vld [vmem:[%s4 + $0x40] sm:$0xff]
        %v464 = vld [vmem:[%s4 + $0x48] sm:$0xff]
        %v465 = vld [vmem:[%s4 + $0x50] sm:$0xff]
        %v466 = vld [vmem:[%s4 + $0x58] sm:$0xff]
        %v467 = vld [vmem:[%s4 + $0x60] sm:$0xff]
        %v468 = vld [vmem:[%s4 + $0x68] sm:$0xff]
        %v469 = vld [vmem:[%s4 + $0x70] sm:$0xff]
        %v470 = vld [vmem:[%s4 + $0x78] sm:$0xff]
        %472 = vset.pattern.permute.xlu0 0
        %473 = vperm.xlu0 %472, %v455
        %v474 = vpop.permute.xlu0 %473
        %477 = vset.pattern.permute.xlu0 0
        %478 = vperm.xlu0 %477, %v456
        %v479 = vpop.permute.xlu0 %478
        %482 = vset.pattern.permute.xlu0 0
        %483 = vperm.xlu0 %482, %v457
        %v484 = vpop.permute.xlu0 %483
        %487 = vset.pattern.permute.xlu0 0
        %488 = vperm.xlu0 %487, %v458
        %v489 = vpop.permute.xlu0 %488
        %492 = vset.pattern.permute.xlu0 0
        %493 = vperm.xlu0 %492, %v459
        %v494 = vpop.permute.xlu0 %493
        %497 = vset.pattern.permute.xlu0 0
        %498 = vperm.xlu0 %497, %v460
        %v499 = vpop.permute.xlu0 %498
        %502 = vset.pattern.permute.xlu0 0
        %503 = vperm.xlu0 %502, %v461
        %v504 = vpop.permute.xlu0 %503
        %507 = vset.pattern.permute.xlu0 0
        %508 = vperm.xlu0 %507, %v462
        %v509 = vpop.permute.xlu0 %508
        %512 = vset.pattern.permute.xlu0 0
        %513 = vperm.xlu0 %512, %v463
        %v514 = vpop.permute.xlu0 %513
        %517 = vset.pattern.permute.xlu0 0
        %518 = vperm.xlu0 %517, %v464
        %v519 = vpop.permute.xlu0 %518
        %522 = vset.pattern.permute.xlu0 0
        %523 = vperm.xlu0 %522, %v465
        %v524 = vpop.permute.xlu0 %523
        %527 = vset.pattern.permute.xlu0 0
        %528 = vperm.xlu0 %527, %v466
        %v529 = vpop.permute.xlu0 %528
        %532 = vset.pattern.permute.xlu0 0
        %533 = vperm.xlu0 %532, %v467
        %v534 = vpop.permute.xlu0 %533
        %537 = vset.pattern.permute.xlu0 0
        %538 = vperm.xlu0 %537, %v468
        %v539 = vpop.permute.xlu0 %538
        %542 = vset.pattern.permute.xlu0 0
        %543 = vperm.xlu0 %542, %v469
        %v544 = vpop.permute.xlu0 %543
        %547 = vset.pattern.permute.xlu0 0
        %548 = vperm.xlu0 %547, %v470
        %v549 = vpop.permute.xlu0 %548
        %v551 = vmul.f32 %v439, %v474
        %v552 = vmul.f32 %v440, %v479
        %v553 = vmul.f32 %v441, %v484
        %v554 = vmul.f32 %v442, %v489
        %v555 = vmul.f32 %v443, %v494
        %v556 = vmul.f32 %v444, %v499
        %v557 = vmul.f32 %v445, %v504
        %v558 = vmul.f32 %v446, %v509
        %v559 = vmul.f32 %v447, %v514
        %v560 = vmul.f32 %v448, %v519
        %v561 = vmul.f32 %v449, %v524
        %v562 = vmul.f32 %v450, %v529
        %v563 = vmul.f32 %v451, %v534
        %v564 = vmul.f32 %v452, %v539
        %v565 = vmul.f32 %v453, %v544
        %v566 = vmul.f32 %v454, %v549
        %v567 = vmul.f32 %v551, %v551
        %v568 = vmul.f32 %v552, %v552
        %v569 = vmul.f32 %v553, %v553
        %v570 = vmul.f32 %v554, %v554
        %v571 = vmul.f32 %v555, %v555
        %v572 = vmul.f32 %v556, %v556
        %v573 = vmul.f32 %v557, %v557
        %v574 = vmul.f32 %v558, %v558
        %v575 = vmul.f32 %v559, %v559
        %v576 = vmul.f32 %v560, %v560
        %v577 = vmul.f32 %v561, %v561
        %v578 = vmul.f32 %v562, %v562
        %v579 = vmul.f32 %v563, %v563
        %v580 = vmul.f32 %v564, %v564
        %v581 = vmul.f32 %v565, %v565
        %v582 = vmul.f32 %v566, %v566
        %vm583 = vcmask 130048
        %v584 = vsel %vm583, %v567, 0.0
        %v585 = vsel %vm583, %v568, 0.0
        %v586 = vadd.f32 %v584, %v585
        %v587 = vsel %vm583, %v569, 0.0
        %v588 = vadd.f32 %v586, %v587
        %v589 = vsel %vm583, %v570, 0.0
        %v590 = vadd.f32 %v588, %v589
        %v591 = vsel %vm583, %v571, 0.0
        %v592 = vadd.f32 %v590, %v591
        %v593 = vsel %vm583, %v572, 0.0
        %v594 = vadd.f32 %v592, %v593
        %v595 = vsel %vm583, %v573, 0.0
        %v596 = vadd.f32 %v594, %v595
        %v597 = vsel %vm583, %v574, 0.0
        %v598 = vadd.f32 %v596, %v597
        %v599 = vsel %vm583, %v575, 0.0
        %v600 = vadd.f32 %v598, %v599
        %v601 = vsel %vm583, %v576, 0.0
        %v602 = vadd.f32 %v600, %v601
        %v603 = vsel %vm583, %v577, 0.0
        %v604 = vadd.f32 %v602, %v603
        %v605 = vsel %vm583, %v578, 0.0
        %v606 = vadd.f32 %v604, %v605
        %v607 = vsel %vm583, %v579, 0.0
        %v608 = vadd.f32 %v606, %v607
        %v609 = vsel %vm583, %v580, 0.0
        %v610 = vadd.f32 %v608, %v609
        %v611 = vsel %vm583, %v581, 0.0
        %v612 = vadd.f32 %v610, %v611
        %v613 = vsel %vm583, %v582, 0.0
        %v614 = vadd.f32 %v612, %v613
        %v615 = vrot.slane %v614, 4
        %v616 = vadd.f32 %v614, %v615
        %v617 = vrot.slane %v616, 2
        %v618 = vadd.f32 %v616, %v617
        %v619 = vrot.slane %v618, 1
        %v620 = vadd.f32 %v618, %v619
        %vm621 = vcmask 122880
        %622 = vst.msk [vmem:[#allocation3] sm:$0x1] %vm621, %v620
        %v623 = vpack.c.bf16 %v552, %v551
        %v624 = vpack.c.bf16 %v554, %v553
        %v625 = vpack.c.bf16 %v556, %v555
        %v626 = vpack.c.bf16 %v558, %v557
        %v627 = vpack.c.bf16 %v560, %v559
        %v628 = vpack.c.bf16 %v562, %v561
        %v629 = vpack.c.bf16 %v564, %v563
        %v630 = vpack.c.bf16 %v566, %v565
        %v639 = vunpack.c.l.b16 %v623
        %v640 = vunpack.c.h.b16 %v623
        %v641 = vunpack.c.l.b16 %v624
        %v642 = vunpack.c.h.b16 %v624
        %v643 = vunpack.c.l.b16 %v625
        %v644 = vunpack.c.h.b16 %v625
        %v645 = vunpack.c.l.b16 %v626
        %v646 = vunpack.c.h.b16 %v626
        %v647 = vunpack.c.l.b16 %v627
        %v648 = vunpack.c.h.b16 %v627
        %v649 = vunpack.c.l.b16 %v628
        %v650 = vunpack.c.h.b16 %v628
        %v651 = vunpack.c.l.b16 %v629
        %v652 = vunpack.c.h.b16 %v629
        %v653 = vunpack.c.l.b16 %v630
        %v654 = vunpack.c.h.b16 %v630
        %v655 = vpack.c.b16 %v639, %v639
        %v656 = vpack.c.b16 %v640, %v640
        %v657 = vpack.c.b16 %v641, %v641
        %v658 = vpack.c.b16 %v642, %v642
        %v659 = vpack.c.b16 %v643, %v643
        %v660 = vpack.c.b16 %v644, %v644
        %v661 = vpack.c.b16 %v645, %v645
        %v662 = vpack.c.b16 %v646, %v646
        %v663 = vpack.c.b16 %v647, %v647
        %v664 = vpack.c.b16 %v648, %v648
        %v665 = vpack.c.b16 %v649, %v649
        %v666 = vpack.c.b16 %v650, %v650
        %v667 = vpack.c.b16 %v651, %v651
        %v668 = vpack.c.b16 %v652, %v652
        %v669 = vpack.c.b16 %v653, %v653
        %v670 = vpack.c.b16 %v654, %v654
        %vm687 = vcmask 125952
        %688 = vst.msk [vmem:[#allocation2] sm:$0xf] %vm687, %v655
        %689 = vst.msk [vmem:[#allocation2 + $0x4] sm:$0xf] %vm687, %v656
        %690 = vst.msk [vmem:[#allocation2 + $0x8] sm:$0xf] %vm687, %v657
        %691 = vst.msk [vmem:[#allocation2 + $0xc] sm:$0xf] %vm687, %v658
        %692 = vst.msk [vmem:[#allocation2 + $0x10] sm:$0xf] %vm687, %v659
        %693 = vst.msk [vmem:[#allocation2 + $0x14] sm:$0xf] %vm687, %v660
        %694 = vst.msk [vmem:[#allocation2 + $0x18] sm:$0xf] %vm687, %v661
        %695 = vst.msk [vmem:[#allocation2 + $0x1c] sm:$0xf] %vm687, %v662
        %696 = vst.msk [vmem:[#allocation2 + $0x20] sm:$0xf] %vm687, %v663
        %697 = vst.msk [vmem:[#allocation2 + $0x24] sm:$0xf] %vm687, %v664
        %698 = vst.msk [vmem:[#allocation2 + $0x28] sm:$0xf] %vm687, %v665
        %699 = vst.msk [vmem:[#allocation2 + $0x2c] sm:$0xf] %vm687, %v666
        %700 = vst.msk [vmem:[#allocation2 + $0x30] sm:$0xf] %vm687, %v667
        %701 = vst.msk [vmem:[#allocation2 + $0x34] sm:$0xf] %vm687, %v668
        %702 = vst.msk [vmem:[#allocation2 + $0x38] sm:$0xf] %vm687, %v669
        %703 = vst.msk [vmem:[#allocation2 + $0x3c] sm:$0xf] %vm687, %v670
        %704 = vst.msk [vmem:[#allocation4] sm:$0x1] %vm621, -1e+30
        %705 = vst.msk [vmem:[#allocation5] sm:$0x1] %vm621, 0.0
      $region44: #{overflow_forward.15} parent=39 // pred_fallthru
        _
      %v706 = vld [vmem:[%s308] sm:$0xf]
      %v707 = vld [vmem:[#allocation2] sm:$0xf]
      %v708 = vld [vmem:[#allocation2 + $0x4] sm:$0xf]
      %v709 = vld [vmem:[#allocation2 + $0x8] sm:$0xf]
      %v710 = vld [vmem:[#allocation2 + $0xc] sm:$0xf]
      %v711 = vld [vmem:[#allocation2 + $0x10] sm:$0xf]
      %v712 = vld [vmem:[#allocation2 + $0x14] sm:$0xf]
      %v713 = vld [vmem:[#allocation2 + $0x18] sm:$0xf]
      %v714 = vld [vmem:[#allocation2 + $0x1c] sm:$0xf]
      %v715 = vld [vmem:[#allocation2 + $0x20] sm:$0xf]
      %v716 = vld [vmem:[#allocation2 + $0x24] sm:$0xf]
      %v717 = vld [vmem:[#allocation2 + $0x28] sm:$0xf]
      %v718 = vld [vmem:[#allocation2 + $0x2c] sm:$0xf]
      %v719 = vld [vmem:[#allocation2 + $0x30] sm:$0xf]
      %v720 = vld [vmem:[#allocation2 + $0x34] sm:$0xf]
      %v721 = vld [vmem:[#allocation2 + $0x38] sm:$0xf]
      %v722 = vld [vmem:[#allocation2 + $0x3c] sm:$0xf]
      %v739 = vunpack.c.l.b16 %v707
      %v740 = vunpack.c.l.b16 %v708
      %v741 = vunpack.c.l.b16 %v709
      %v742 = vunpack.c.l.b16 %v710
      %v743 = vunpack.c.l.b16 %v711
      %v744 = vunpack.c.l.b16 %v712
      %v745 = vunpack.c.l.b16 %v713
      %v746 = vunpack.c.l.b16 %v714
      %v747 = vunpack.c.l.b16 %v715
      %v748 = vunpack.c.l.b16 %v716
      %v749 = vunpack.c.l.b16 %v717
      %v750 = vunpack.c.l.b16 %v718
      %v751 = vunpack.c.l.b16 %v719
      %v752 = vunpack.c.l.b16 %v720
      %v753 = vunpack.c.l.b16 %v721
      %v754 = vunpack.c.l.b16 %v722
      %v755 = vpack.c.b16 %v740, %v739
      %v756 = vpack.c.b16 %v742, %v741
      %v757 = vpack.c.b16 %v744, %v743
      %v758 = vpack.c.b16 %v746, %v745
      %v759 = vpack.c.b16 %v748, %v747
      %v760 = vpack.c.b16 %v750, %v749
      %v761 = vpack.c.b16 %v752, %v751
      %v762 = vpack.c.b16 %v754, %v753
      %771 = vmatprep.subr.bf16.mxu0 0
      %772 = vmatpush1.bf16.msra.mxu0 %v762
      %773 = vmatprep.subr.bf16.mxu0 0
      %774 = vmatpush1.bf16.msra.mxu0 %v761
      %775 = vmatprep.subr.bf16.mxu0 0
      %776 = vmatpush1.bf16.msra.mxu0 %v760
      %777 = vmatprep.subr.bf16.mxu0 0
      %778 = vmatpush1.bf16.msra.mxu0 %v759
      %779 = vmatprep.subr.bf16.mxu0 0
      %780 = vmatpush1.bf16.msra.mxu0 %v758
      %781 = vmatprep.subr.bf16.mxu0 0
      %782 = vmatpush1.bf16.msra.mxu0 %v757
      %783 = vmatprep.subr.bf16.mxu0 0
      %784 = vmatpush1.bf16.msra.mxu0 %v756
      %785 = vmatprep.subr.bf16.mxu0 0
      %786 = vmatpush1.bf16.msra.mxu0 %v755
      %787 = vmatprep.subr.bf16.mxu0 0
      %788 = vmatpush2.bf16.msra.mxu0 0
      %789 = vmatprep.subr.bf16.mxu0 0
      %790 = vmatpush2.bf16.msra.mxu0 0
      %791 = vmatprep.subr.bf16.mxu0 0
      %792 = vmatpush2.bf16.msra.mxu0 0
      %793 = vmatprep.subr.bf16.mxu0 0
      %794 = vmatpush2.bf16.msra.mxu0 0
      %795 = vmatprep.subr.bf16.mxu0 0
      %796 = vmatpush2.bf16.msra.mxu0 0
      %797 = vmatprep.subr.bf16.mxu0 0
      %798 = vmatpush2.bf16.msra.mxu0 0
      %799 = vmatprep.subr.bf16.mxu0 0
      %800 = vmatpush2.bf16.msra.mxu0 0
      %801 = vmatprep.subr.bf16.mxu0 0
      %802 = vmatpush2.bf16.msra.mxu0 0
      %803 = vmatprep.mubr.bf16.mxu0 0
      %804 = vmatmul.mubr.bf16.gmra.mxu0 %v706
      %v805 = vpop.f32.mrf.mxu0
      %v806 = vadd.f32 0.0, %v805
      %v807 = vpop.f32.mrf.mxu0
      %v808 = vpop.f32.mrf.mxu0
      %v809 = vpop.f32.mrf.mxu0
      %810 = vdwg.mxu0
      %v811 = vld [vmem:[#allocation3] sm:$0x1]
      %v812 = vld [vmem:[%s315] sm:$0xff]
      %v814 = vlaneseq
      %v815 = vshrl.u32 %v814, 7
      %v816 = vsub.s32 0, %v815
      %v817 = vrot.slane %v811, %v816
      %820 = vset.pattern.permute.xlu0 0
      %821 = vperm.xlu0 %820, %v812
      %v822 = vpop.permute.xlu0 %821
      %v824 = vadd.f32 %v817, %v822
      %v825 = vmul.f32 %v806, 2.0
      %v826 = vsub.f32 %v824, %v825
      %v827 = vmul.f32 %v826, -0.5
      %v828 = vsub.f32 %v827, 14.703016
      %s829 = smul.u32 %s30, 8
      %v830 = vlaneseq
      %v831 = vshrl.u32 %v830, 7
      %v832 = vstv %s829
      %v833 = vadd.s32 %v832, %v831
      %s834 = sld [smem:[#allocation7 + %s28]]
      %v835 = vstv %s834
      %vm836 = vcmp.lt.s32.totalorder %v833, %v835
      %v837 = vsel %vm836, %v828, -1e+30
      %v838 = vld [vmem:[#allocation4] sm:$0x1]
      %vm839 = vcmask 130048
      %v840 = vsel %vm839, %v837, -inf
      %v841 = vrot.slane %v840, 4
      %v842 = vmax.f32 %v840, %v841
      %v843 = vrot.slane %v842, 2
      %v844 = vmax.f32 %v842, %v843
      %v845 = vrot.slane %v844, 1
      %v846 = vmax.f32 %v844, %v845
      %v847 = vmax.f32 %v838, %v846
      %v848 = vld [vmem:[#allocation5] sm:$0x1]
      %v849 = vsub.f32 %v838, %v847
      %v850 = vmul.f32 %v849, 1.442695
      %v851 = vpow.pop %v850
      %v852 = vmul.f32 %v848, %v851
      %v854 = vlaneseq
      %v855 = vshrl.u32 %v854, 7
      %v856 = vsub.s32 0, %v855
      %v857 = vrot.slane %v847, %v856
      %v859 = vsub.f32 %v837, %v857
      %v860 = vmul.f32 %v859, 1.442695
      %v861 = vpow.pop %v860
      %v862 = vsel %vm839, %v861, 0.0
      %v863 = vrot.slane %v862, 4
      %v864 = vadd.f32 %v862, %v863
      %v865 = vrot.slane %v864, 2
      %v866 = vadd.f32 %v864, %v865
      %v867 = vrot.slane %v866, 1
      %v868 = vadd.f32 %v866, %v867
      %v869 = vadd.f32 %v852, %v868
      %vm870 = vcmask 122880
      %871 = vst.msk [vmem:[#allocation5] sm:$0x1] %vm870, %v869
      %872 = vst.msk [vmem:[#allocation4] sm:$0x1] %vm870, %v847
      // Predicated region
      $region45: #{overflow_forward.15} parent=39 // pred_check
        %p873 = pneg %p323
      $region46: #{overflow_forward.15} parent=39 // pred_check_branch
        %875 = sbr.rel (%p873) target = $region48
      $region47: #{overflow_forward.15} parent=39 // pred_region
        %v876 = vld [vmem:[#allocation4] sm:$0x1]
        %v877 = vld [vmem:[#allocation5] sm:$0x1]
        %v878 = vlog2.pop %v877
        %v879 = vmul.f32 %v878, 0.6931472
        %v880 = vadd.f32 %v876, %v879
        %881 = vst.msk [vmem:[%s321] sm:$0x1] %vm870, %v880
      $region48: #{overflow_forward.15} parent=39 // pred_fallthru
        _
      %p882 = scmp.lt.s32.totalorder %s28, 1
      %s883 = scalar_select %p882, %s28, 1
      %p884 = scmp.lt.s32.totalorder %s29, 0
      %s885 = scalar_select %p884, %s29, 0
      %s886 = sadd.s32 %s885, %s883
      %s887 = scalar_lea.vmem %s6, %s886
      // Predicated region
      $region49: #{overflow_forward.15} parent=39 // pred_check
        %p888 = pneg %p188
      $region50: #{overflow_forward.15} parent=39 // pred_check_branch
        %890 = sbr.rel (%p888) target = $region52
      $region51: #{overflow_forward.15} parent=39 // pred_region
        _
      $region52: #{overflow_forward.15} parent=39 // pred_fallthru
        _
    $region40: #{overflow_forward.15} parent=5 // pred_fallthru
      _
    %p891 = scmp.le.s32.totalorder 2, %s18
    // Predicated region
    $region53: #{overflow_forward.15} parent=5 // pred_check
      %p892 = pneg %p891
    $region54: #{overflow_forward.15} parent=5 // pred_check_branch
      %894 = sbr.rel (%p892) target = $region56
    $region55: #{overflow_forward.15} parent=5 // pred_region
      %s895 = ssub.s32 %s18, 2
      // Predicated region
      $region57: #{overflow_forward.15} parent=55 // pred_check
        %p896 = pneg %p194
      $region58: #{overflow_forward.15} parent=55 // pred_check_branch
        %898 = sbr.rel (%p896) target = $region60
      $region59: #{overflow_forward.15} parent=55 // pred_region
        %p899 = scmp.lt.s32.totalorder %s31, 1
        %s900 = scalar_select %p899, %s31, 1
        %p901 = scmp.lt.s32.totalorder %s32, 0
        %s902 = scalar_select %p901, %s32, 0
        %s903 = sadd.s32 %s902, %s900
        %s904 = scalar_lea.vmem %s6, %s903
      $region60: #{overflow_forward.15} parent=55 // pred_fallthru
        _
    $region56: #{overflow_forward.15} parent=5 // pred_fallthru
      _
  $region6: #{overflow_forward.15} parent=0 // loop_footer
    %s22 = sadd.s32 1, %s18
  $region7: #{overflow_forward.15} parent=0 // loop_footer_branch
    %17 = sbr.rel target = $region3
  $region8: #{overflow_forward.15} parent=0 // loop_exit
    _

</llo_original>
